<compile_context>
chip_gen: v7x
topology: tpu7x:2x2x1
jax: 0.10.0
libtpu: 0.0.40
codegen_flags: <defaults>
</compile_context>

<pallas_src>
import functools

import jax
import jax.numpy as jnp
from jax import lax
from jax.experimental import pallas as pl
from jax.experimental.pallas import tpu as pltpu


_LANE = 128
_BN_EPS = 1e-5


def _round_up(x, m):
    return (x + m - 1) // m * m


def _vmem_limit_bytes():
    """~100 MiB on 128 MiB parts (v5e/v6e), ~51 MiB on v7x's 64 MiB."""
    cap = 128 * 1024 * 1024
    try:
        info = pltpu.get_tpu_info()
        cap = int(getattr(info, "vmem_capacity_bytes", cap))
    except Exception:
        pass
    return max(32 * 1024 * 1024, min(int(cap * 0.8), 100 * 1024 * 1024))


def _pick_row_tile(n, h, w, cin, cpad, vmem_budget, max_rows):
    """Largest even divisor of h whose per-step footprint fits the VMEM budget."""
    def footprint(t):
        in_b = 2 * (t * w * cin * 2 + 2 * (2 * w * cin * 2))   # dbl-buffered main + halos (bf16)
        out_b = 2 * (t * w * cpad * 2 + 2 * cpad * 4)          # dbl-buffered out + stats
        wgt_b = 2 * (9 * cin * cpad * 2)                       # weight (conservatively x2)
        scr_b = ((t + 2) * (w + 2) * cin * 4                   # activated slab (f32 worst case)
                 + (t + 2) * w * 3 * cin * 2                   # K=3*Cin operand (bf16)
                 + t * w * cpad * 4)                           # f32 accumulator
        return in_b + out_b + wgt_b + scr_b

    cands = [t for t in range(2, h + 1, 2)
             if h % t == 0 and t * w <= max_rows and footprint(t) <= vmem_budget]
    if not cands:
        return 2
    multi = [t for t in cands if n * (h // t) >= 2]    # keep >=2 grid steps (v7x has 2 TCs)
    return max(multi) if multi else max(cands)


# ----------------------------------------------------------------------------
# Kernel 1: [optional fused BN+ReLU6 on the input] + 3x3 conv (bf16 MXU)
#           + per-tile Chan-style BN partial statistics
# ----------------------------------------------------------------------------
def _conv3x3_bn_stats_kernel(x_main_ref, x_top_ref, x_bot_ref, scale_ref,
                             shift_ref, w_ref, out_ref, stats_ref,
                             *, apply_input_act, inv_rows):
    j = pl.program_id(1)
    nh = pl.num_programs(1)

    main = x_main_ref[0]                     # (TH, W, Cin)  bf16
    top = x_top_ref[0][1:2]                  # (1,  W, Cin)  row j*TH-1 (stale at j==0)
    bot = x_bot_ref[0][0:1]                  # (1,  W, Cin)  row (j+1)*TH (stale at j==nh-1)

    th, w_out, cin = main.shape
    cpad = w_ref.shape[-1]

    if apply_input_act:
        # Fused BatchNorm(scale/shift) + ReLU6 of the *previous* CBR, applied to
        # the freshly loaded tile (f32 math, bf16 matmul operand).
        s = scale_ref[...].reshape(1, 1, cin)
        b = shift_ref[...].reshape(1, 1, cin)

        def act(v):
            return jnp.clip(v.astype(jnp.float32) * s + b, 0.0, 6.0).astype(jnp.bfloat16)

        main, top, bot = act(main), act(top), act(bot)

    # Conv 'same' padding along H: rows outside the image are zero.  This must
    # happen AFTER the fused activation (pad rows are zero, not act(0)).
    top = top * (j > 0).astype(top.dtype)
    bot = bot * (j < nh - 1).astype(bot.dtype)

    slab = jnp.concatenate([top, main, bot], axis=0)            # (TH+2, W, Cin)

    # Conv 'same' padding along W, done in VMEM (no XLA pad pass in HBM).
    zcol = jnp.zeros((th + 2, 1, cin), slab.dtype)
    slab = jnp.concatenate([zcol, slab, zcol], axis=1)          # (TH+2, W+2, Cin)

    acc = jnp.zeros((th * w_out, cpad), jnp.float32)
    if cin % _LANE == 0:
        # Collapsed path: 3 matmuls with K = 3*Cin (lane-aligned channel concat).
        win = jnp.concatenate([slab[:, 0:w_out, :],
                               slab[:, 1:w_out + 1, :],
                               slab[:, 2:w_out + 2, :]], axis=-1)   # (TH+2, W, 3*Cin)
        for dy in range(3):
            lhs = win[dy:dy + th].reshape(th * w_out, 3 * cin)
            acc = acc + jnp.dot(lhs, w_ref[dy],
                                preferred_element_type=jnp.float32)
    else:
        # Fallback for small, non-lane-aligned Cin: 9 shifted matmuls.
        for dy in range(3):
            rows = slab[dy:dy + th]
            wdy = w_ref[dy]                                      # (3*Cin, Cpad)
            for dx in range(3):
                lhs = rows[:, dx:dx + w_out, :].reshape(th * w_out, cin)
                acc = acc + jnp.dot(lhs, wdy[dx * cin:(dx + 1) * cin],
                                    preferred_element_type=jnp.float32)

    out_ref[0] = acc.reshape(th, w_out, cpad).astype(out_ref.dtype)

    # Per-tile BatchNorm partials from the f32 accumulator:
    # row 0 = sum, row 1 = within-tile centered M2 (merged Chan-style outside).
    s1 = jnp.sum(acc, axis=0, keepdims=True)                     # (1, Cpad)
    mu = s1 * inv_rows
    d = acc - mu
    m2 = jnp.sum(d * d, axis=0, keepdims=True)                   # (1, Cpad)
    stats_ref[0, 0] = jnp.concatenate([s1, m2], axis=0)          # (2, Cpad)


def conv3x3_bn_stats(x, scale, shift, w_flat, *, th, cpad, apply_input_act,
                     out_dtype, vmem_limit):
    """x: (N, H, W, Cin) bf16 (unpadded), w_flat: (3, 3*Cin, Cpad) bf16."""
    n, h, w_sp, cin = x.shape
    nh = h // th
    hb = h // 2                                  # number of 2-row halo blocks along H
    inv_rows = 1.0 / float(th * w_sp)

    kern = functools.partial(_conv3x3_bn_stats_kernel,
                             apply_input_act=apply_input_act, inv_rows=inv_rows)

    flops = 2 * n * h * w_sp * 9 * cin * cpad
    bytes_accessed = int(x.size * x.dtype.itemsize * (1.0 + 4.0 / th)
                         + w_flat.size * w_flat.dtype.itemsize
                         + n * h * w_sp * cpad * jnp.dtype(out_dtype).itemsize
                         + n * nh * 2 * cpad * 4)

    return pl.pallas_call(
        kern,
        out_shape=(jax.ShapeDtypeStruct((n, h, w_sp, cpad), out_dtype),
                   jax.ShapeDtypeStruct((n, nh, 2, cpad), jnp.float32)),
        grid_spec=pltpu.PrefetchScalarGridSpec(
            num_scalar_prefetch=0,
            grid=(n, nh),
            in_specs=[
                # TH-row main block
                pl.BlockSpec((1, th, w_sp, cin), lambda i, j: (i, j, 0, 0)),
                # 2-row block containing row j*TH-1 (clamped; zeroed at j==0)
                pl.BlockSpec((1, 2, w_sp, cin),
                             lambda i, j: (i, jnp.maximum(j * (th // 2) - 1, 0), 0, 0)),
                # 2-row block containing row (j+1)*TH (clamped; zeroed at j==nh-1)
                pl.BlockSpec((1, 2, w_sp, cin),
                             lambda i, j: (i, jnp.minimum((j + 1) * (th // 2), hb - 1), 0, 0)),
                pl.BlockSpec((1, cin), lambda i, j: (0, 0)),     # fused-BN scale
                pl.BlockSpec((1, cin), lambda i, j: (0, 0)),     # fused-BN shift
                pl.BlockSpec((3, 3 * cin, cpad), lambda i, j: (0, 0, 0)),
            ],
            out_specs=[
                pl.BlockSpec((1, th, w_sp, cpad), lambda i, j: (i, j, 0, 0)),
                pl.BlockSpec((1, 1, 2, cpad), lambda i, j: (i, j, 0, 0)),
            ],
        ),
        compiler_params=pltpu.CompilerParams(
            dimension_semantics=("parallel", "parallel"),
            vmem_limit_bytes=vmem_limit,
        ),
        cost_estimate=pl.CostEstimate(flops=int(flops), transcendentals=0,
                                      bytes_accessed=bytes_accessed),
    )(x, x, x, scale, shift, w_flat)


# ----------------------------------------------------------------------------
# Kernel 2: final BatchNorm apply (pre-folded scale/shift) + ReLU6, lane-dense
# ----------------------------------------------------------------------------
def _bn_relu6_kernel(y_ref, scale_ref, shift_ref, o_ref):
    y = y_ref[...].astype(jnp.float32)                           # (1, TH, W, Cpad)
    s = scale_ref[...].reshape(1, 1, 1, -1)
    b = shift_ref[...].reshape(1, 1, 1, -1)
    o_ref[...] = jnp.clip(y * s + b, 0.0, 6.0).astype(o_ref.dtype)


def bn_relu6_apply(y, scale, shift, th, vmem_limit, out_dtype=jnp.float32):
    n, h, w_sp, cpad = y.shape
    nh = h // th
    bytes_accessed = int(y.size * y.dtype.itemsize
                         + n * h * w_sp * cpad * jnp.dtype(out_dtype).itemsize
                         + 2 * cpad * 4)
    return pl.pallas_call(
        _bn_relu6_kernel,
        out_shape=jax.ShapeDtypeStruct((n, h, w_sp, cpad), out_dtype),
        grid_spec=pltpu.PrefetchScalarGridSpec(
            num_scalar_prefetch=0,
            grid=(n, nh),
            in_specs=[
                pl.BlockSpec((1, th, w_sp, cpad), lambda i, j: (i, j, 0, 0)),
                pl.BlockSpec((1, cpad), lambda i, j: (0, 0)),
                pl.BlockSpec((1, cpad), lambda i, j: (0, 0)),
            ],
            out_specs=pl.BlockSpec((1, th, w_sp, cpad), lambda i, j: (i, j, 0, 0)),
        ),
        compiler_params=pltpu.CompilerParams(
            dimension_semantics=("parallel", "parallel"),
            vmem_limit_bytes=vmem_limit,
        ),
        cost_estimate=pl.CostEstimate(flops=int(4 * y.size), transcendentals=0,
                                      bytes_accessed=bytes_accessed),
    )(y, scale, shift)


# ----------------------------------------------------------------------------
# Plain-JAX glue (upsample as matmuls, weight/BN prep)
# ----------------------------------------------------------------------------
def _interp_matrix(n_in, n_out):
    """align_corners=True linear interpolation weights as a dense hat matrix."""
    scale = 0.0 if n_out == 1 else (n_in - 1) / (n_out - 1)
    pos = jnp.arange(n_out, dtype=jnp.float32)[:, None] * scale
    idx = jnp.arange(n_in, dtype=jnp.float32)[None, :]
    return jnp.clip(1.0 - jnp.abs(pos - idx), 0.0, 1.0)          # (n_out, n_in)


def upsample_bilinear_x2_ac(x_nhwc):
    """nn.UpsamplingBilinear2d(scale_factor=2) via two small matmuls (no gathers)."""
    n, h, w, c = x_nhwc.shape
    mh = _interp_matrix(h, 2 * h)
    mw = _interp_matrix(w, 2 * w)
    return jnp.einsum("Hh,nhwc,Ww->nHWc", mh, x_nhwc.astype(jnp.float32), mw,
                      precision=lax.Precision.HIGHEST)


def _prep_weight(w_oihw, cin_total, cout_pad, dtype):
    """PyTorch (Cout, Cin, 3, 3) -> (3, 3*Cin_total, Cout_pad), zero padded,
    with the dx axis folded into K (matches the in-kernel channel-concat order)."""
    cout, cin = w_oihw.shape[0], w_oihw.shape[1]
    w = jnp.transpose(w_oihw.astype(jnp.float32), (2, 3, 1, 0))  # (3, 3, Cin, Cout)
    w = jnp.pad(w, ((0, 0), (0, 0), (0, cin_total - cin), (0, cout_pad - cout)))
    return w.reshape(3, 3 * cin_total, cout_pad).astype(dtype)


def _fold_bn(stats, gamma_pad, beta_pad, rows_per_tile):
    """Per-tile (sum, centered M2) -> per-channel scale/shift (training-mode BN,
    biased variance), merged Chan-style for numerical robustness."""
    sums = stats[:, :, 0, :].astype(jnp.float32)                 # (N, nh, Cpad)
    m2s = stats[:, :, 1, :].astype(jnp.float32)
    n_tiles = sums.shape[0] * sums.shape[1]
    m_count = n_tiles * rows_per_tile
    mean = jnp.sum(sums, axis=(0, 1)) / m_count
    tile_mean = sums / rows_per_tile
    m2 = jnp.sum(m2s, axis=(0, 1)) \
        + rows_per_tile * jnp.sum((tile_mean - mean) ** 2, axis=(0, 1))
    var = jnp.maximum(m2 / m_count, 0.0)
    scale = gamma_pad * lax.rsqrt(var + _BN_EPS)
    shift = beta_pad - mean * scale
    return (scale.reshape(1, -1).astype(jnp.float32),
            shift.reshape(1, -1).astype(jnp.float32))


def unet_skip_up_forward(params, feat_encoder, feat_up, *, max_rows=8192):
    """feat_encoder: (N, Ce, H, W), feat_up: (N, Cu, H/2, W/2) -> (N, Cout, H, W)."""
    fe = jnp.transpose(feat_encoder, (0, 2, 3, 1)).astype(jnp.float32)
    fu = jnp.transpose(feat_up, (0, 2, 3, 1)).astype(jnp.float32)
    fu = upsample_bilinear_x2_ac(fu)
    # TODO(synk): fuse the upsample matmuls + channel concat into conv #1's
    # input path (pass fe / fu as separate kernel operands) to drop this
    # materialized concat as well.
    x = jnp.concatenate([fe, fu], axis=-1).astype(jnp.bfloat16)  # torch.cat(dim=1), NHWC

    n, h, w, c1 = x.shape
    assert h % 2 == 0 and h >= 2, "spatial height must be even (x2 upsample output)"
    cout = params["g1"].shape[0]
    cpad = _round_up(cout, _LANE)

    vmem_limit = _vmem_limit_bytes()
    th = _pick_row_tile(n, h, w, max(c1, cpad), cpad, vmem_limit // 2, max_rows)
    rows_per_tile = th * w

    gamma1 = jnp.pad(params["g1"].astype(jnp.float32), (0, cpad - cout))
    beta1 = jnp.pad(params["bt1"].astype(jnp.float32), (0, cpad - cout))
    gamma2 = jnp.pad(params["g2"].astype(jnp.float32), (0, cpad - cout))
    beta2 = jnp.pad(params["bt2"].astype(jnp.float32), (0, cpad - cout))
    w1 = _prep_weight(params["w1"], c1, cpad, jnp.bfloat16)      # (3, 3*C1,   Cpad)
    w2 = _prep_weight(params["w2"], cpad, cpad, jnp.bfloat16)    # (3, 3*Cpad, Cpad)
    # params["b1"] / params["b2"] are intentionally unused: a per-channel conv
    # bias is exactly cancelled by training-mode BatchNorm's mean subtraction.

    # --- CBR #1: conv + stats (its BN+ReLU6 is applied lazily, fused below) ---
    id_scale = jnp.ones((1, c1), jnp.float32)
    id_shift = jnp.zeros((1, c1), jnp.float32)
    y1, st1 = conv3x3_bn_stats(x, id_scale, id_shift, w1, th=th, cpad=cpad,
                               apply_input_act=False, out_dtype=jnp.bfloat16,
                               vmem_limit=vmem_limit)
    s1, b1 = _fold_bn(st1, gamma1, beta1, rows_per_tile)

    # --- CBR #2: BN1+ReLU6 fused into the conv's input load; conv + stats ---
    y2, st2 = conv3x3_bn_stats(y1, s1, b1, w2, th=th, cpad=cpad,
                               apply_input_act=True, out_dtype=jnp.bfloat16,
                               vmem_limit=vmem_limit)
    s2, b2 = _fold_bn(st2, gamma2, beta2, rows_per_tile)

    # --- final BN + ReLU6 (standalone, lane-dense) ---
    a2 = bn_relu6_apply(y2, s2, b2, th, vmem_limit, out_dtype=jnp.float32)

    # TODO(synk): optionally fuse the channel slice + NHWC->NCHW transpose into
    # the final BN kernel when the consumer really needs NCHW.
    return jnp.transpose(a2[..., :cout], (0, 3, 1, 2))


# ----------------------------------------------------------------------------
# Pure-JAX reference (for the on-device sanity check)
# ----------------------------------------------------------------------------
def _conv_bn_relu6_ref(x_nchw, w, b, g, bt, conv_dtype):
    y = lax.conv_general_dilated(
        x_nchw.astype(conv_dtype), w.astype(conv_dtype), (1, 1), ((1, 1), (1, 1)),
        dimension_numbers=("NCHW", "OIHW", "NCHW"),
        preferred_element_type=jnp.float32,
        precision=lax.Precision.HIGHEST)
    y = y + b[None, :, None, None]
    mean = jnp.mean(y, axis=(0, 2, 3), keepdims=True)
    var = jnp.mean((y - mean) ** 2, axis=(0, 2, 3), keepdims=True)
    y = (y - mean) * lax.rsqrt(var + _BN_EPS) * g[None, :, None, None] \
        + bt[None, :, None, None]
    return jnp.clip(y, 0.0, 6.0)


def unet_skip_up_ref(params, feat_encoder, feat_up, conv_dtype=jnp.float32):
    fu = jnp.transpose(feat_up, (0, 2, 3, 1)).astype(jnp.float32)
    fu = jnp.transpose(upsample_bilinear_x2_ac(fu), (0, 3, 1, 2))
    x = jnp.concatenate([feat_encoder.astype(jnp.float32), fu], axis=1)
    x = _conv_bn_relu6_ref(x, params["w1"], params["b1"], params["g1"],
                           params["bt1"], conv_dtype)
    x = _conv_bn_relu6_ref(x, params["w2"], params["b2"], params["g2"],
                           params["bt2"], conv_dtype)
    return x


# ----------------------------------------------------------------------------
def init_params(key, in_channel, out_channel):
    ks = jax.random.split(key, 8)
    return {
        "w1": 0.1 * jax.random.normal(ks[0], (out_channel, in_channel, 3, 3), jnp.float32),
        "b1": 0.05 * jax.random.normal(ks[1], (out_channel,), jnp.float32),
        "g1": 1.0 + 0.1 * jax.random.normal(ks[2], (out_channel,), jnp.float32),
        "bt1": 0.1 * jax.random.normal(ks[3], (out_channel,), jnp.float32),
        "w2": 0.1 * jax.random.normal(ks[4], (out_channel, out_channel, 3, 3), jnp.float32),
        "b2": 0.05 * jax.random.normal(ks[5], (out_channel,), jnp.float32),
        "g2": 1.0 + 0.1 * jax.random.normal(ks[6], (out_channel,), jnp.float32),
        "bt2": 0.1 * jax.random.normal(ks[7], (out_channel,), jnp.float32),
    }


if __name__ == "__main__":
    key = jax.random.PRNGKey(0)
    k_enc, k_up, k_par = jax.random.split(key, 3)

    N, Ce, H, W = 2, 4, 16, 16          # encoder skip features
    Cu = 8                              # decoder features at half resolution
    in_channel, out_channel = Ce + Cu, 8

    feat_encoder = jax.random.normal(k_enc, (N, Ce, H, W), jnp.float32)
    feat_up = jax.random.normal(k_up, (N, Cu, H // 2, W // 2), jnp.float32)
    params = init_params(k_par, in_channel, out_channel)

    # Small row budget so the test exercises a multi-tile grid and the in-VMEM
    # halo handling (H=16 -> TH=8 -> 2 row tiles per image, 4 steps per conv).
    fwd = jax.jit(functools.partial(unet_skip_up_forward, max_rows=128))
    out = jax.block_until_ready(fwd(params, feat_encoder, feat_up))
    assert out.shape == (N, out_channel, H, W)
    assert bool(jnp.all(jnp.isfinite(out)))

    # Check vs a reference using the same bf16 conv operands (documents the
    # bf16-intermediate error) and, more loosely, vs a full-f32 reference.
    ref_bf16 = jax.block_until_ready(jax.jit(functools.partial(
        unet_skip_up_ref, conv_dtype=jnp.bfloat16))(params, feat_encoder, feat_up))
    ref_f32 = jax.block_until_ready(jax.jit(functools.partial(
        unet_skip_up_ref, conv_dtype=jnp.float32))(params, feat_encoder, feat_up))

    err_bf16 = float(jnp.max(jnp.abs(out - ref_bf16)))
    err_f32 = float(jnp.max(jnp.abs(out - ref_f32)))
    assert err_bf16 < 8e-2, f"mismatch vs bf16-operand reference: {err_bf16}"
    assert err_f32 < 2e-1, f"mismatch vs f32 reference: {err_f32}"
    print("KERNEL_OK")
</pallas_src>

<mosaic_0001>
module attributes {stable_mosaic.version = 11 : i64} {
  func.func @_conv3x3_bn_stats_kernel(%arg0: i32, %arg1: i32, %arg2: memref<1x8x16x12xbf16, #tpu.memory_space<vmem>>, %arg3: memref<1x2x16x12xbf16, #tpu.memory_space<vmem>>, %arg4: memref<1x2x16x12xbf16, #tpu.memory_space<vmem>>, %arg5: memref<1x12xf32, #tpu.memory_space<vmem>>, %arg6: memref<1x12xf32, #tpu.memory_space<vmem>>, %arg7: memref<3x36x128xbf16, #tpu.memory_space<vmem>>, %arg8: memref<1x8x16x128xbf16, #tpu.memory_space<vmem>>, %arg9: memref<1x1x2x128xf32, #tpu.memory_space<vmem>>) attributes {dimension_semantics = [#tpu.dimension_semantics<parallel>, #tpu.dimension_semantics<parallel>], iteration_bounds = array<i64: 2, 2>, scalar_prefetch = 0 : i64, scratch_operands = 0 : i64, tpu.core_type = #tpu.core_type<tc>, window_params = [{transform_indices = @transform_0, window_bounds = array<i64: 1, 8, 16, 12>}, {transform_indices = @transform_1, window_bounds = array<i64: 1, 2, 16, 12>}, {transform_indices = @transform_2, window_bounds = array<i64: 1, 2, 16, 12>}, {pipeline_mode = #tpu.pipeline_mode<synchronous>, transform_indices = @transform_3, window_bounds = array<i64: 1, 12>}, {pipeline_mode = #tpu.pipeline_mode<synchronous>, transform_indices = @transform_4, window_bounds = array<i64: 1, 12>}, {pipeline_mode = #tpu.pipeline_mode<synchronous>, transform_indices = @transform_5, window_bounds = array<i64: 3, 36, 128>}, {transform_indices = @transform_6, window_bounds = array<i64: 1, 8, 16, 128>}, {transform_indices = @transform_7, window_bounds = array<i64: 1, 1, 2, 128>}]} {
    %c0 = arith.constant 0 : index
    %c0_0 = arith.constant 0 : index
    %c0_1 = arith.constant 0 : index
    %c0_2 = arith.constant 0 : index
    %0 = vector.load %arg2[%c0, %c0_0, %c0_1, %c0_2] : memref<1x8x16x12xbf16, #tpu.memory_space<vmem>>, vector<1x8x16x12xbf16>
    %1 = vector.shape_cast %0 : vector<1x8x16x12xbf16> to vector<8x16x12xbf16>
    %c0_3 = arith.constant 0 : index
    %c0_4 = arith.constant 0 : index
    %c0_5 = arith.constant 0 : index
    %c0_6 = arith.constant 0 : index
    %2 = vector.load %arg3[%c0_3, %c0_4, %c0_5, %c0_6] : memref<1x2x16x12xbf16, #tpu.memory_space<vmem>>, vector<1x2x16x12xbf16>
    %3 = vector.shape_cast %2 : vector<1x2x16x12xbf16> to vector<2x16x12xbf16>
    %4 = vector.extract_strided_slice %3 {offsets = [1, 0, 0], sizes = [1, 16, 12], strides = [1, 1, 1]} : vector<2x16x12xbf16> to vector<1x16x12xbf16>
    %c0_7 = arith.constant 0 : index
    %c0_8 = arith.constant 0 : index
    %c0_9 = arith.constant 0 : index
    %c0_10 = arith.constant 0 : index
    %5 = vector.load %arg4[%c0_7, %c0_8, %c0_9, %c0_10] : memref<1x2x16x12xbf16, #tpu.memory_space<vmem>>, vector<1x2x16x12xbf16>
    %6 = vector.shape_cast %5 : vector<1x2x16x12xbf16> to vector<2x16x12xbf16>
    %7 = vector.extract_strided_slice %6 {offsets = [0, 0, 0], sizes = [1, 16, 12], strides = [1, 1, 1]} : vector<2x16x12xbf16> to vector<1x16x12xbf16>
    %c0_i32 = arith.constant 0 : i32
    %8 = arith.cmpi sgt, %arg1, %c0_i32 : i32
    %9 = arith.extui %8 : i1 to i32
    %10 = arith.sitofp %9 : i32 to f32
    %11 = arith.truncf %10 : f32 to bf16
    %12 = vector.broadcast %11 : bf16 to vector<1x16x12xbf16>
    %13 = arith.mulf %4, %12 : vector<1x16x12xbf16>
    %c1_i32 = arith.constant 1 : i32
    %14 = arith.cmpi slt, %arg1, %c1_i32 : i32
    %15 = arith.extui %14 : i1 to i32
    %16 = arith.sitofp %15 : i32 to f32
    %17 = arith.truncf %16 : f32 to bf16
    %18 = vector.broadcast %17 : bf16 to vector<1x16x12xbf16>
    %19 = arith.mulf %7, %18 : vector<1x16x12xbf16>
    %20 = tpu.concatenate %13, %1, %19 in 0 : vector<1x16x12xbf16>, vector<8x16x12xbf16>, vector<1x16x12xbf16> -> vector<10x16x12xbf16>
    %cst = arith.constant 0.000000e+00 : bf16
    %21 = vector.broadcast %cst : bf16 to vector<10x1x12xbf16>
    %22 = tpu.concatenate %21, %20, %21 in 1 : vector<10x1x12xbf16>, vector<10x16x12xbf16>, vector<10x1x12xbf16> -> vector<10x18x12xbf16>
    %cst_11 = arith.constant 0.000000e+00 : f32
    %23 = vector.broadcast %cst_11 : f32 to vector<128x128xf32>
    %24 = vector.extract_strided_slice %22 {offsets = [0, 0, 0], sizes = [8, 18, 12], strides = [1, 1, 1]} : vector<10x18x12xbf16> to vector<8x18x12xbf16>
    %c0_12 = arith.constant 0 : index
    %c0_13 = arith.constant 0 : index
    %c0_14 = arith.constant 0 : index
    %25 = vector.load %arg7[%c0_12, %c0_13, %c0_14] : memref<3x36x128xbf16, #tpu.memory_space<vmem>>, vector<1x36x128xbf16>
    %26 = vector.shape_cast %25 : vector<1x36x128xbf16> to vector<36x128xbf16>
    %27 = vector.extract_strided_slice %24 {offsets = [0, 0, 0], sizes = [8, 16, 12], strides = [1, 1, 1]} : vector<8x18x12xbf16> to vector<8x16x12xbf16>
    %28 = vector.shape_cast %27 : vector<8x16x12xbf16> to vector<128x12xbf16>
    %29 = vector.extract_strided_slice %26 {offsets = [0, 0], sizes = [12, 128], strides = [1, 1]} : vector<36x128xbf16> to vector<12x128xbf16>
    %cst_15 = arith.constant dense<0.000000e+00> : vector<128x128xf32>
    %30 = tpu.matmul %28, %29, %cst_15 {dimension_numbers = #tpu.dot_dimension_numbers<[1], [0], [0], [1], [0, 0, 1, 1], [], []>} : vector<128x12xbf16>, vector<12x128xbf16>, vector<128x128xf32> -> vector<128x128xf32>
    %31 = arith.addf %23, %30 : vector<128x128xf32>
    %32 = vector.extract_strided_slice %24 {offsets = [0, 1, 0], sizes = [8, 16, 12], strides = [1, 1, 1]} : vector<8x18x12xbf16> to vector<8x16x12xbf16>
    %33 = vector.shape_cast %32 : vector<8x16x12xbf16> to vector<128x12xbf16>
    %34 = vector.extract_strided_slice %26 {offsets = [12, 0], sizes = [12, 128], strides = [1, 1]} : vector<36x128xbf16> to vector<12x128xbf16>
    %cst_16 = arith.constant dense<0.000000e+00> : vector<128x128xf32>
    %35 = tpu.matmul %33, %34, %cst_16 {dimension_numbers = #tpu.dot_dimension_numbers<[1], [0], [0], [1], [0, 0, 1, 1], [], []>} : vector<128x12xbf16>, vector<12x128xbf16>, vector<128x128xf32> -> vector<128x128xf32>
    %36 = arith.addf %31, %35 : vector<128x128xf32>
    %37 = vector.extract_strided_slice %24 {offsets = [0, 2, 0], sizes = [8, 16, 12], strides = [1, 1, 1]} : vector<8x18x12xbf16> to vector<8x16x12xbf16>
    %38 = vector.shape_cast %37 : vector<8x16x12xbf16> to vector<128x12xbf16>
    %39 = vector.extract_strided_slice %26 {offsets = [24, 0], sizes = [12, 128], strides = [1, 1]} : vector<36x128xbf16> to vector<12x128xbf16>
    %cst_17 = arith.constant dense<0.000000e+00> : vector<128x128xf32>
    %40 = tpu.matmul %38, %39, %cst_17 {dimension_numbers = #tpu.dot_dimension_numbers<[1], [0], [0], [1], [0, 0, 1, 1], [], []>} : vector<128x12xbf16>, vector<12x128xbf16>, vector<128x128xf32> -> vector<128x128xf32>
    %41 = arith.addf %36, %40 : vector<128x128xf32>
    %42 = vector.extract_strided_slice %22 {offsets = [1, 0, 0], sizes = [8, 18, 12], strides = [1, 1, 1]} : vector<10x18x12xbf16> to vector<8x18x12xbf16>
    %c1 = arith.constant 1 : index
    %c0_18 = arith.constant 0 : index
    %c0_19 = arith.constant 0 : index
    %43 = vector.load %arg7[%c1, %c0_18, %c0_19] : memref<3x36x128xbf16, #tpu.memory_space<vmem>>, vector<1x36x128xbf16>
    %44 = vector.shape_cast %43 : vector<1x36x128xbf16> to vector<36x128xbf16>
    %45 = vector.extract_strided_slice %42 {offsets = [0, 0, 0], sizes = [8, 16, 12], strides = [1, 1, 1]} : vector<8x18x12xbf16> to vector<8x16x12xbf16>
    %46 = vector.shape_cast %45 : vector<8x16x12xbf16> to vector<128x12xbf16>
    %47 = vector.extract_strided_slice %44 {offsets = [0, 0], sizes = [12, 128], strides = [1, 1]} : vector<36x128xbf16> to vector<12x128xbf16>
    %cst_20 = arith.constant dense<0.000000e+00> : vector<128x128xf32>
    %48 = tpu.matmul %46, %47, %cst_20 {dimension_numbers = #tpu.dot_dimension_numbers<[1], [0], [0], [1], [0, 0, 1, 1], [], []>} : vector<128x12xbf16>, vector<12x128xbf16>, vector<128x128xf32> -> vector<128x128xf32>
    %49 = arith.addf %41, %48 : vector<128x128xf32>
    %50 = vector.extract_strided_slice %42 {offsets = [0, 1, 0], sizes = [8, 16, 12], strides = [1, 1, 1]} : vector<8x18x12xbf16> to vector<8x16x12xbf16>
    %51 = vector.shape_cast %50 : vector<8x16x12xbf16> to vector<128x12xbf16>
    %52 = vector.extract_strided_slice %44 {offsets = [12, 0], sizes = [12, 128], strides = [1, 1]} : vector<36x128xbf16> to vector<12x128xbf16>
    %cst_21 = arith.constant dense<0.000000e+00> : vector<128x128xf32>
    %53 = tpu.matmul %51, %52, %cst_21 {dimension_numbers = #tpu.dot_dimension_numbers<[1], [0], [0], [1], [0, 0, 1, 1], [], []>} : vector<128x12xbf16>, vector<12x128xbf16>, vector<128x128xf32> -> vector<128x128xf32>
    %54 = arith.addf %49, %53 : vector<128x128xf32>
    %55 = vector.extract_strided_slice %42 {offsets = [0, 2, 0], sizes = [8, 16, 12], strides = [1, 1, 1]} : vector<8x18x12xbf16> to vector<8x16x12xbf16>
    %56 = vector.shape_cast %55 : vector<8x16x12xbf16> to vector<128x12xbf16>
    %57 = vector.extract_strided_slice %44 {offsets = [24, 0], sizes = [12, 128], strides = [1, 1]} : vector<36x128xbf16> to vector<12x128xbf16>
    %cst_22 = arith.constant dense<0.000000e+00> : vector<128x128xf32>
    %58 = tpu.matmul %56, %57, %cst_22 {dimension_numbers = #tpu.dot_dimension_numbers<[1], [0], [0], [1], [0, 0, 1, 1], [], []>} : vector<128x12xbf16>, vector<12x128xbf16>, vector<128x128xf32> -> vector<128x128xf32>
    %59 = arith.addf %54, %58 : vector<128x128xf32>
    %60 = vector.extract_strided_slice %22 {offsets = [2, 0, 0], sizes = [8, 18, 12], strides = [1, 1, 1]} : vector<10x18x12xbf16> to vector<8x18x12xbf16>
    %c2 = arith.constant 2 : index
    %c0_23 = arith.constant 0 : index
    %c0_24 = arith.constant 0 : index
    %61 = vector.load %arg7[%c2, %c0_23, %c0_24] : memref<3x36x128xbf16, #tpu.memory_space<vmem>>, vector<1x36x128xbf16>
    %62 = vector.shape_cast %61 : vector<1x36x128xbf16> to vector<36x128xbf16>
    %63 = vector.extract_strided_slice %60 {offsets = [0, 0, 0], sizes = [8, 16, 12], strides = [1, 1, 1]} : vector<8x18x12xbf16> to vector<8x16x12xbf16>
    %64 = vector.shape_cast %63 : vector<8x16x12xbf16> to vector<128x12xbf16>
    %65 = vector.extract_strided_slice %62 {offsets = [0, 0], sizes = [12, 128], strides = [1, 1]} : vector<36x128xbf16> to vector<12x128xbf16>
    %cst_25 = arith.constant dense<0.000000e+00> : vector<128x128xf32>
    %66 = tpu.matmul %64, %65, %cst_25 {dimension_numbers = #tpu.dot_dimension_numbers<[1], [0], [0], [1], [0, 0, 1, 1], [], []>} : vector<128x12xbf16>, vector<12x128xbf16>, vector<128x128xf32> -> vector<128x128xf32>
    %67 = arith.addf %59, %66 : vector<128x128xf32>
    %68 = vector.extract_strided_slice %60 {offsets = [0, 1, 0], sizes = [8, 16, 12], strides = [1, 1, 1]} : vector<8x18x12xbf16> to vector<8x16x12xbf16>
    %69 = vector.shape_cast %68 : vector<8x16x12xbf16> to vector<128x12xbf16>
    %70 = vector.extract_strided_slice %62 {offsets = [12, 0], sizes = [12, 128], strides = [1, 1]} : vector<36x128xbf16> to vector<12x128xbf16>
    %cst_26 = arith.constant dense<0.000000e+00> : vector<128x128xf32>
    %71 = tpu.matmul %69, %70, %cst_26 {dimension_numbers = #tpu.dot_dimension_numbers<[1], [0], [0], [1], [0, 0, 1, 1], [], []>} : vector<128x12xbf16>, vector<12x128xbf16>, vector<128x128xf32> -> vector<128x128xf32>
    %72 = arith.addf %67, %71 : vector<128x128xf32>
    %73 = vector.extract_strided_slice %60 {offsets = [0, 2, 0], sizes = [8, 16, 12], strides = [1, 1, 1]} : vector<8x18x12xbf16> to vector<8x16x12xbf16>
    %74 = vector.shape_cast %73 : vector<8x16x12xbf16> to vector<128x12xbf16>
    %75 = vector.extract_strided_slice %62 {offsets = [24, 0], sizes = [12, 128], strides = [1, 1]} : vector<36x128xbf16> to vector<12x128xbf16>
    %cst_27 = arith.constant dense<0.000000e+00> : vector<128x128xf32>
    %76 = tpu.matmul %74, %75, %cst_27 {dimension_numbers = #tpu.dot_dimension_numbers<[1], [0], [0], [1], [0, 0, 1, 1], [], []>} : vector<128x12xbf16>, vector<12x128xbf16>, vector<128x128xf32> -> vector<128x128xf32>
    %77 = arith.addf %72, %76 : vector<128x128xf32>
    %78 = vector.shape_cast %77 : vector<128x128xf32> to vector<8x16x128xf32>
    %79 = arith.truncf %78 : vector<8x16x128xf32> to vector<8x16x128xbf16>
    %c0_28 = arith.constant 0 : index
    %c0_29 = arith.constant 0 : index
    %c0_30 = arith.constant 0 : index
    %c0_31 = arith.constant 0 : index
    %80 = vector.load %arg8[%c0_28, %c0_29, %c0_30, %c0_31] : memref<1x8x16x128xbf16, #tpu.memory_space<vmem>>, vector<1x8x16x128xbf16>
    %81 = vector.shape_cast %80 : vector<1x8x16x128xbf16> to vector<8x16x128xbf16>
    %82 = vector.shape_cast %79 : vector<8x16x128xbf16> to vector<1x8x16x128xbf16>
    tpu.vector_store %arg8[%c0_28, %c0_29, %c0_30, %c0_31], %82 {strides = array<i32>} : memref<1x8x16x128xbf16, #tpu.memory_space<vmem>>, vector<1x8x16x128xbf16>,
    %cst_32 = arith.constant dense<0.000000e+00> : vector<128xf32>
    %83 = vector.multi_reduction <add>, %77, %cst_32 [0] : vector<128x128xf32> to vector<128xf32>
    %84 = vector.shape_cast %83 : vector<128xf32> to vector<1x128xf32>
    %cst_33 = arith.constant 7.812500e-03 : f32
    %85 = vector.broadcast %cst_33 : f32 to vector<1x128xf32>
    %86 = arith.mulf %84, %85 : vector<1x128xf32>
    %87 = vector.broadcast %86 : vector<1x128xf32> to vector<128x128xf32>
    %88 = arith.subf %77, %87 : vector<128x128xf32>
    %89 = arith.mulf %88, %88 : vector<128x128xf32>
    %cst_34 = arith.constant dense<0.000000e+00> : vector<128xf32>
    %90 = vector.multi_reduction <add>, %89, %cst_34 [0] : vector<128x128xf32> to vector<128xf32>
    %91 = vector.shape_cast %90 : vector<128xf32> to vector<1x128xf32>
    %92 = tpu.concatenate %84, %91 in 0 : vector<1x128xf32>, vector<1x128xf32> -> vector<2x128xf32>
    %c0_35 = arith.constant 0 : index
    %c0_36 = arith.constant 0 : index
    %c0_37 = arith.constant 0 : index
    %c0_38 = arith.constant 0 : index
    %93 = vector.load %arg9[%c0_35, %c0_36, %c0_37, %c0_38] : memref<1x1x2x128xf32, #tpu.memory_space<vmem>>, vector<1x1x2x128xf32>
    %94 = vector.shape_cast %93 : vector<1x1x2x128xf32> to vector<2x128xf32>
    %95 = vector.shape_cast %92 : vector<2x128xf32> to vector<1x1x2x128xf32>
    tpu.vector_store %arg9[%c0_35, %c0_36, %c0_37, %c0_38], %95 {strides = array<i32>} : memref<1x1x2x128xf32, #tpu.memory_space<vmem>>, vector<1x1x2x128xf32>,
    return
  }
  func.func @transform_0(%arg0: i32, %arg1: i32) -> (i32, i32, i32, i32) {
    %c0_i32 = arith.constant 0 : i32
    %c0_i32_0 = arith.constant 0 : i32
    %c0_i32_1 = arith.constant 0 : i32
    return %arg0, %arg1, %c0_i32, %c0_i32_0 : i32, i32, i32, i32
  }
  func.func @transform_1(%arg0: i32, %arg1: i32) -> (i32, i32, i32, i32) {
    %c4_i32 = arith.constant 4 : i32
    %0 = arith.muli %arg1, %c4_i32 : i32
    %c1_i32 = arith.constant 1 : i32
    %1 = arith.subi %0, %c1_i32 : i32
    %c0_i32 = arith.constant 0 : i32
    %2 = arith.maxsi %1, %c0_i32 : i32
    %c0_i32_0 = arith.constant 0 : i32
    %c0_i32_1 = arith.constant 0 : i32
    %c0_i32_2 = arith.constant 0 : i32
    return %arg0, %2, %c0_i32_0, %c0_i32_1 : i32, i32, i32, i32
  }
  func.func @transform_2(%arg0: i32, %arg1: i32) -> (i32, i32, i32, i32) {
    %c1_i32 = arith.constant 1 : i32
    %0 = arith.addi %arg1, %c1_i32 : i32
    %c4_i32 = arith.constant 4 : i32
    %1 = arith.muli %0, %c4_i32 : i32
    %c7_i32 = arith.constant 7 : i32
    %2 = arith.minsi %1, %c7_i32 : i32
    %c0_i32 = arith.constant 0 : i32
    %c0_i32_0 = arith.constant 0 : i32
    %c0_i32_1 = arith.constant 0 : i32
    return %arg0, %2, %c0_i32, %c0_i32_0 : i32, i32, i32, i32
  }
  func.func @transform_3(%arg0: i32, %arg1: i32) -> (i32, i32) {
    %c0_i32 = arith.constant 0 : i32
    %c0_i32_0 = arith.constant 0 : i32
    %c0_i32_1 = arith.constant 0 : i32
    return %c0_i32, %c0_i32_0 : i32, i32
  }
  func.func @transform_4(%arg0: i32, %arg1: i32) -> (i32, i32) {
    %c0_i32 = arith.constant 0 : i32
    %c0_i32_0 = arith.constant 0 : i32
    %c0_i32_1 = arith.constant 0 : i32
    return %c0_i32, %c0_i32_0 : i32, i32
  }
  func.func @transform_5(%arg0: i32, %arg1: i32) -> (i32, i32, i32) {
    %c0_i32 = arith.constant 0 : i32
    %c0_i32_0 = arith.constant 0 : i32
    %c0_i32_1 = arith.constant 0 : i32
    %c0_i32_2 = arith.constant 0 : i32
    return %c0_i32, %c0_i32_0, %c0_i32_1 : i32, i32, i32
  }
  func.func @transform_6(%arg0: i32, %arg1: i32) -> (i32, i32, i32, i32) {
    %c0_i32 = arith.constant 0 : i32
    %c0_i32_0 = arith.constant 0 : i32
    %c0_i32_1 = arith.constant 0 : i32
    return %arg0, %arg1, %c0_i32, %c0_i32_0 : i32, i32, i32, i32
  }
  func.func @transform_7(%arg0: i32, %arg1: i32) -> (i32, i32, i32, i32) {
    %c0_i32 = arith.constant 0 : i32
    %c0_i32_0 = arith.constant 0 : i32
    %c0_i32_1 = arith.constant 0 : i32
    return %arg0, %arg1, %c0_i32, %c0_i32_0 : i32, i32, i32, i32
  }
}

module attributes {stable_mosaic.version = 11 : i64} {
  func.func @_bn_relu6_kernel(%arg0: i32, %arg1: i32, %arg2: memref<1x8x16x128xbf16, #tpu.memory_space<vmem>>, %arg3: memref<1x128xf32, #tpu.memory_space<vmem>>, %arg4: memref<1x128xf32, #tpu.memory_space<vmem>>, %arg5: memref<1x8x16x128xf32, #tpu.memory_space<vmem>>) attributes {dimension_semantics = [#tpu.dimension_semantics<parallel>, #tpu.dimension_semantics<parallel>], iteration_bounds = array<i64: 2, 2>, scalar_prefetch = 0 : i64, scratch_operands = 0 : i64, tpu.core_type = #tpu.core_type<tc>, window_params = [{transform_indices = @transform_0, window_bounds = array<i64: 1, 8, 16, 128>}, {pipeline_mode = #tpu.pipeline_mode<synchronous>, transform_indices = @transform_1, window_bounds = array<i64: 1, 128>}, {pipeline_mode = #tpu.pipeline_mode<synchronous>, transform_indices = @transform_2, window_bounds = array<i64: 1, 128>}, {transform_indices = @transform_3, window_bounds = array<i64: 1, 8, 16, 128>}]} {
    %c0 = arith.constant 0 : index
    %c0_0 = arith.constant 0 : index
    %c0_1 = arith.constant 0 : index
    %c0_2 = arith.constant 0 : index
    %0 = vector.load %arg2[%c0, %c0_0, %c0_1, %c0_2] : memref<1x8x16x128xbf16, #tpu.memory_space<vmem>>, vector<1x8x16x128xbf16>
    %1 = arith.extf %0 : vector<1x8x16x128xbf16> to vector<1x8x16x128xf32>
    %c0_3 = arith.constant 0 : index
    %c0_4 = arith.constant 0 : index
    %2 = vector.load %arg3[%c0_3, %c0_4] : memref<1x128xf32, #tpu.memory_space<vmem>>, vector<1x128xf32>
    %3 = vector.shape_cast %2 : vector<1x128xf32> to vector<1x1x1x128xf32>
    %c0_5 = arith.constant 0 : index
    %c0_6 = arith.constant 0 : index
    %4 = vector.load %arg4[%c0_5, %c0_6] : memref<1x128xf32, #tpu.memory_space<vmem>>, vector<1x128xf32>
    %5 = vector.shape_cast %4 : vector<1x128xf32> to vector<1x1x1x128xf32>
    %6 = vector.broadcast %3 : vector<1x1x1x128xf32> to vector<1x8x16x128xf32>
    %7 = arith.mulf %1, %6 : vector<1x8x16x128xf32>
    %8 = vector.broadcast %5 : vector<1x1x1x128xf32> to vector<1x8x16x128xf32>
    %9 = arith.addf %7, %8 : vector<1x8x16x128xf32>
    %cst = arith.constant 0.000000e+00 : f32
    %cst_7 = arith.constant 6.000000e+00 : f32
    %10 = vector.broadcast %cst : f32 to vector<1x8x16x128xf32>
    %11 = arith.maximumf %10, %9 : vector<1x8x16x128xf32>
    %12 = vector.broadcast %cst_7 : f32 to vector<1x8x16x128xf32>
    %13 = arith.minimumf %12, %11 : vector<1x8x16x128xf32>
    %c0_8 = arith.constant 0 : index
    %c0_9 = arith.constant 0 : index
    %c0_10 = arith.constant 0 : index
    %c0_11 = arith.constant 0 : index
    %14 = vector.load %arg5[%c0_8, %c0_9, %c0_10, %c0_11] : memref<1x8x16x128xf32, #tpu.memory_space<vmem>>, vector<1x8x16x128xf32>
    tpu.vector_store %arg5[%c0_8, %c0_9, %c0_10, %c0_11], %13 {strides = array<i32>} : memref<1x8x16x128xf32, #tpu.memory_space<vmem>>, vector<1x8x16x128xf32>,
    return
  }
  func.func @transform_0(%arg0: i32, %arg1: i32) -> (i32, i32, i32, i32) {
    %c0_i32 = arith.constant 0 : i32
    %c0_i32_0 = arith.constant 0 : i32
    %c0_i32_1 = arith.constant 0 : i32
    return %arg0, %arg1, %c0_i32, %c0_i32_0 : i32, i32, i32, i32
  }
  func.func @transform_1(%arg0: i32, %arg1: i32) -> (i32, i32) {
    %c0_i32 = arith.constant 0 : i32
    %c0_i32_0 = arith.constant 0 : i32
    %c0_i32_1 = arith.constant 0 : i32
    return %c0_i32, %c0_i32_0 : i32, i32
  }
  func.func @transform_2(%arg0: i32, %arg1: i32) -> (i32, i32) {
    %c0_i32 = arith.constant 0 : i32
    %c0_i32_0 = arith.constant 0 : i32
    %c0_i32_1 = arith.constant 0 : i32
    return %c0_i32, %c0_i32_0 : i32, i32
  }
  func.func @transform_3(%arg0: i32, %arg1: i32) -> (i32, i32, i32, i32) {
    %c0_i32 = arith.constant 0 : i32
    %c0_i32_0 = arith.constant 0 : i32
    %c0_i32_1 = arith.constant 0 : i32
    return %arg0, %arg1, %c0_i32, %c0_i32_0 : i32, i32, i32, i32
  }
}

module attributes {stable_mosaic.version = 11 : i64} {
  func.func @_conv3x3_bn_stats_kernel(%arg0: i32, %arg1: i32, %arg2: memref<1x8x16x128xbf16, #tpu.memory_space<vmem>>, %arg3: memref<1x2x16x128xbf16, #tpu.memory_space<vmem>>, %arg4: memref<1x2x16x128xbf16, #tpu.memory_space<vmem>>, %arg5: memref<1x128xf32, #tpu.memory_space<vmem>>, %arg6: memref<1x128xf32, #tpu.memory_space<vmem>>, %arg7: memref<3x384x128xbf16, #tpu.memory_space<vmem>>, %arg8: memref<1x8x16x128xbf16, #tpu.memory_space<vmem>>, %arg9: memref<1x1x2x128xf32, #tpu.memory_space<vmem>>) attributes {dimension_semantics = [#tpu.dimension_semantics<parallel>, #tpu.dimension_semantics<parallel>], iteration_bounds = array<i64: 2, 2>, scalar_prefetch = 0 : i64, scratch_operands = 0 : i64, tpu.core_type = #tpu.core_type<tc>, window_params = [{transform_indices = @transform_0, window_bounds = array<i64: 1, 8, 16, 128>}, {transform_indices = @transform_1, window_bounds = array<i64: 1, 2, 16, 128>}, {transform_indices = @transform_2, window_bounds = array<i64: 1, 2, 16, 128>}, {pipeline_mode = #tpu.pipeline_mode<synchronous>, transform_indices = @transform_3, window_bounds = array<i64: 1, 128>}, {pipeline_mode = #tpu.pipeline_mode<synchronous>, transform_indices = @transform_4, window_bounds = array<i64: 1, 128>}, {pipeline_mode = #tpu.pipeline_mode<synchronous>, transform_indices = @transform_5, window_bounds = array<i64: 3, 384, 128>}, {transform_indices = @transform_6, window_bounds = array<i64: 1, 8, 16, 128>}, {transform_indices = @transform_7, window_bounds = array<i64: 1, 1, 2, 128>}]} {
    %c0 = arith.constant 0 : index
    %c0_0 = arith.constant 0 : index
    %c0_1 = arith.constant 0 : index
    %c0_2 = arith.constant 0 : index
    %0 = vector.load %arg2[%c0, %c0_0, %c0_1, %c0_2] : memref<1x8x16x128xbf16, #tpu.memory_space<vmem>>, vector<1x8x16x128xbf16>
    %1 = vector.shape_cast %0 : vector<1x8x16x128xbf16> to vector<8x16x128xbf16>
    %c0_3 = arith.constant 0 : index
    %c0_4 = arith.constant 0 : index
    %c0_5 = arith.constant 0 : index
    %c0_6 = arith.constant 0 : index
    %2 = vector.load %arg3[%c0_3, %c0_4, %c0_5, %c0_6] : memref<1x2x16x128xbf16, #tpu.memory_space<vmem>>, vector<1x2x16x128xbf16>
    %3 = vector.shape_cast %2 : vector<1x2x16x128xbf16> to vector<2x16x128xbf16>
    %4 = vector.extract_strided_slice %3 {offsets = [1, 0, 0], sizes = [1, 16, 128], strides = [1, 1, 1]} : vector<2x16x128xbf16> to vector<1x16x128xbf16>
    %c0_7 = arith.constant 0 : index
    %c0_8 = arith.constant 0 : index
    %c0_9 = arith.constant 0 : index
    %c0_10 = arith.constant 0 : index
    %5 = vector.load %arg4[%c0_7, %c0_8, %c0_9, %c0_10] : memref<1x2x16x128xbf16, #tpu.memory_space<vmem>>, vector<1x2x16x128xbf16>
    %6 = vector.shape_cast %5 : vector<1x2x16x128xbf16> to vector<2x16x128xbf16>
    %7 = vector.extract_strided_slice %6 {offsets = [0, 0, 0], sizes = [1, 16, 128], strides = [1, 1, 1]} : vector<2x16x128xbf16> to vector<1x16x128xbf16>
    %c0_11 = arith.constant 0 : index
    %c0_12 = arith.constant 0 : index
    %8 = vector.load %arg5[%c0_11, %c0_12] : memref<1x128xf32, #tpu.memory_space<vmem>>, vector<1x128xf32>
    %9 = vector.shape_cast %8 : vector<1x128xf32> to vector<1x1x128xf32>
    %c0_13 = arith.constant 0 : index
    %c0_14 = arith.constant 0 : index
    %10 = vector.load %arg6[%c0_13, %c0_14] : memref<1x128xf32, #tpu.memory_space<vmem>>, vector<1x128xf32>
    %11 = vector.shape_cast %10 : vector<1x128xf32> to vector<1x1x128xf32>
    %12 = arith.extf %1 : vector<8x16x128xbf16> to vector<8x16x128xf32>
    %13 = vector.broadcast %9 : vector<1x1x128xf32> to vector<8x16x128xf32>
    %14 = arith.mulf %12, %13 : vector<8x16x128xf32>
    %15 = vector.broadcast %11 : vector<1x1x128xf32> to vector<8x16x128xf32>
    %16 = arith.addf %14, %15 : vector<8x16x128xf32>
    %cst = arith.constant 0.000000e+00 : f32
    %cst_15 = arith.constant 6.000000e+00 : f32
    %17 = vector.broadcast %cst : f32 to vector<8x16x128xf32>
    %18 = arith.maximumf %17, %16 : vector<8x16x128xf32>
    %19 = vector.broadcast %cst_15 : f32 to vector<8x16x128xf32>
    %20 = arith.minimumf %19, %18 : vector<8x16x128xf32>
    %21 = arith.truncf %20 : vector<8x16x128xf32> to vector<8x16x128xbf16>
    %22 = arith.extf %4 : vector<1x16x128xbf16> to vector<1x16x128xf32>
    %23 = vector.broadcast %9 : vector<1x1x128xf32> to vector<1x16x128xf32>
    %24 = arith.mulf %22, %23 : vector<1x16x128xf32>
    %25 = vector.broadcast %11 : vector<1x1x128xf32> to vector<1x16x128xf32>
    %26 = arith.addf %24, %25 : vector<1x16x128xf32>
    %cst_16 = arith.constant 0.000000e+00 : f32
    %cst_17 = arith.constant 6.000000e+00 : f32
    %27 = vector.broadcast %cst_16 : f32 to vector<1x16x128xf32>
    %28 = arith.maximumf %27, %26 : vector<1x16x128xf32>
    %29 = vector.broadcast %cst_17 : f32 to vector<1x16x128xf32>
    %30 = arith.minimumf %29, %28 : vector<1x16x128xf32>
    %31 = arith.truncf %30 : vector<1x16x128xf32> to vector<1x16x128xbf16>
    %32 = arith.extf %7 : vector<1x16x128xbf16> to vector<1x16x128xf32>
    %33 = vector.broadcast %9 : vector<1x1x128xf32> to vector<1x16x128xf32>
    %34 = arith.mulf %32, %33 : vector<1x16x128xf32>
    %35 = vector.broadcast %11 : vector<1x1x128xf32> to vector<1x16x128xf32>
    %36 = arith.addf %34, %35 : vector<1x16x128xf32>
    %cst_18 = arith.constant 0.000000e+00 : f32
    %cst_19 = arith.constant 6.000000e+00 : f32
    %37 = vector.broadcast %cst_18 : f32 to vector<1x16x128xf32>
    %38 = arith.maximumf %37, %36 : vector<1x16x128xf32>
    %39 = vector.broadcast %cst_19 : f32 to vector<1x16x128xf32>
    %40 = arith.minimumf %39, %38 : vector<1x16x128xf32>
    %41 = arith.truncf %40 : vector<1x16x128xf32> to vector<1x16x128xbf16>
    %c0_i32 = arith.constant 0 : i32
    %42 = arith.cmpi sgt, %arg1, %c0_i32 : i32
    %43 = arith.extui %42 : i1 to i32
    %44 = arith.sitofp %43 : i32 to f32
    %45 = arith.truncf %44 : f32 to bf16
    %46 = vector.broadcast %45 : bf16 to vector<1x16x128xbf16>
    %47 = arith.mulf %31, %46 : vector<1x16x128xbf16>
    %c1_i32 = arith.constant 1 : i32
    %48 = arith.cmpi slt, %arg1, %c1_i32 : i32
    %49 = arith.extui %48 : i1 to i32
    %50 = arith.sitofp %49 : i32 to f32
    %51 = arith.truncf %50 : f32 to bf16
    %52 = vector.broadcast %51 : bf16 to vector<1x16x128xbf16>
    %53 = arith.mulf %41, %52 : vector<1x16x128xbf16>
    %54 = tpu.concatenate %47, %21, %53 in 0 : vector<1x16x128xbf16>, vector<8x16x128xbf16>, vector<1x16x128xbf16> -> vector<10x16x128xbf16>
    %cst_20 = arith.constant 0.000000e+00 : bf16
    %55 = vector.broadcast %cst_20 : bf16 to vector<10x1x128xbf16>
    %56 = tpu.concatenate %55, %54, %55 in 1 : vector<10x1x128xbf16>, vector<10x16x128xbf16>, vector<10x1x128xbf16> -> vector<10x18x128xbf16>
    %cst_21 = arith.constant 0.000000e+00 : f32
    %57 = vector.broadcast %cst_21 : f32 to vector<128x128xf32>
    %58 = vector.extract_strided_slice %56 {offsets = [0, 0, 0], sizes = [10, 16, 128], strides = [1, 1, 1]} : vector<10x18x128xbf16> to vector<10x16x128xbf16>
    %59 = vector.extract_strided_slice %56 {offsets = [0, 1, 0], sizes = [10, 16, 128], strides = [1, 1, 1]} : vector<10x18x128xbf16> to vector<10x16x128xbf16>
    %60 = vector.extract_strided_slice %56 {offsets = [0, 2, 0], sizes = [10, 16, 128], strides = [1, 1, 1]} : vector<10x18x128xbf16> to vector<10x16x128xbf16>
    %61 = tpu.concatenate %58, %59, %60 in 2 : vector<10x16x128xbf16>, vector<10x16x128xbf16>, vector<10x16x128xbf16> -> vector<10x16x384xbf16>
    %62 = vector.extract_strided_slice %61 {offsets = [0, 0, 0], sizes = [8, 16, 384], strides = [1, 1, 1]} : vector<10x16x384xbf16> to vector<8x16x384xbf16>
    %63 = vector.shape_cast %62 : vector<8x16x384xbf16> to vector<128x384xbf16>
    %c0_22 = arith.constant 0 : index
    %c0_23 = arith.constant 0 : index
    %c0_24 = arith.constant 0 : index
    %64 = vector.load %arg7[%c0_22, %c0_23, %c0_24] : memref<3x384x128xbf16, #tpu.memory_space<vmem>>, vector<1x384x128xbf16>
    %65 = vector.shape_cast %64 : vector<1x384x128xbf16> to vector<384x128xbf16>
    %cst_25 = arith.constant dense<0.000000e+00> : vector<128x128xf32>
    %66 = tpu.matmul %63, %65, %cst_25 {dimension_numbers = #tpu.dot_dimension_numbers<[1], [0], [0], [1], [0, 0, 1, 1], [], []>} : vector<128x384xbf16>, vector<384x128xbf16>, vector<128x128xf32> -> vector<128x128xf32>
    %67 = arith.addf %57, %66 : vector<128x128xf32>
    %68 = vector.extract_strided_slice %61 {offsets = [1, 0, 0], sizes = [8, 16, 384], strides = [1, 1, 1]} : vector<10x16x384xbf16> to vector<8x16x384xbf16>
    %69 = vector.shape_cast %68 : vector<8x16x384xbf16> to vector<128x384xbf16>
    %c1 = arith.constant 1 : index
    %c0_26 = arith.constant 0 : index
    %c0_27 = arith.constant 0 : index
    %70 = vector.load %arg7[%c1, %c0_26, %c0_27] : memref<3x384x128xbf16, #tpu.memory_space<vmem>>, vector<1x384x128xbf16>
    %71 = vector.shape_cast %70 : vector<1x384x128xbf16> to vector<384x128xbf16>
    %cst_28 = arith.constant dense<0.000000e+00> : vector<128x128xf32>
    %72 = tpu.matmul %69, %71, %cst_28 {dimension_numbers = #tpu.dot_dimension_numbers<[1], [0], [0], [1], [0, 0, 1, 1], [], []>} : vector<128x384xbf16>, vector<384x128xbf16>, vector<128x128xf32> -> vector<128x128xf32>
    %73 = arith.addf %67, %72 : vector<128x128xf32>
    %74 = vector.extract_strided_slice %61 {offsets = [2, 0, 0], sizes = [8, 16, 384], strides = [1, 1, 1]} : vector<10x16x384xbf16> to vector<8x16x384xbf16>
    %75 = vector.shape_cast %74 : vector<8x16x384xbf16> to vector<128x384xbf16>
    %c2 = arith.constant 2 : index
    %c0_29 = arith.constant 0 : index
    %c0_30 = arith.constant 0 : index
    %76 = vector.load %arg7[%c2, %c0_29, %c0_30] : memref<3x384x128xbf16, #tpu.memory_space<vmem>>, vector<1x384x128xbf16>
    %77 = vector.shape_cast %76 : vector<1x384x128xbf16> to vector<384x128xbf16>
    %cst_31 = arith.constant dense<0.000000e+00> : vector<128x128xf32>
    %78 = tpu.matmul %75, %77, %cst_31 {dimension_numbers = #tpu.dot_dimension_numbers<[1], [0], [0], [1], [0, 0, 1, 1], [], []>} : vector<128x384xbf16>, vector<384x128xbf16>, vector<128x128xf32> -> vector<128x128xf32>
    %79 = arith.addf %73, %78 : vector<128x128xf32>
    %80 = vector.shape_cast %79 : vector<128x128xf32> to vector<8x16x128xf32>
    %81 = arith.truncf %80 : vector<8x16x128xf32> to vector<8x16x128xbf16>
    %c0_32 = arith.constant 0 : index
    %c0_33 = arith.constant 0 : index
    %c0_34 = arith.constant 0 : index
    %c0_35 = arith.constant 0 : index
    %82 = vector.load %arg8[%c0_32, %c0_33, %c0_34, %c0_35] : memref<1x8x16x128xbf16, #tpu.memory_space<vmem>>, vector<1x8x16x128xbf16>
    %83 = vector.shape_cast %82 : vector<1x8x16x128xbf16> to vector<8x16x128xbf16>
    %84 = vector.shape_cast %81 : vector<8x16x128xbf16> to vector<1x8x16x128xbf16>
    tpu.vector_store %arg8[%c0_32, %c0_33, %c0_34, %c0_35], %84 {strides = array<i32>} : memref<1x8x16x128xbf16, #tpu.memory_space<vmem>>, vector<1x8x16x128xbf16>,
    %cst_36 = arith.constant dense<0.000000e+00> : vector<128xf32>
    %85 = vector.multi_reduction <add>, %79, %cst_36 [0] : vector<128x128xf32> to vector<128xf32>
    %86 = vector.shape_cast %85 : vector<128xf32> to vector<1x128xf32>
    %cst_37 = arith.constant 7.812500e-03 : f32
    %87 = vector.broadcast %cst_37 : f32 to vector<1x128xf32>
    %88 = arith.mulf %86, %87 : vector<1x128xf32>
    %89 = vector.broadcast %88 : vector<1x128xf32> to vector<128x128xf32>
    %90 = arith.subf %79, %89 : vector<128x128xf32>
    %91 = arith.mulf %90, %90 : vector<128x128xf32>
    %cst_38 = arith.constant dense<0.000000e+00> : vector<128xf32>
    %92 = vector.multi_reduction <add>, %91, %cst_38 [0] : vector<128x128xf32> to vector<128xf32>
    %93 = vector.shape_cast %92 : vector<128xf32> to vector<1x128xf32>
    %94 = tpu.concatenate %86, %93 in 0 : vector<1x128xf32>, vector<1x128xf32> -> vector<2x128xf32>
    %c0_39 = arith.constant 0 : index
    %c0_40 = arith.constant 0 : index
    %c0_41 = arith.constant 0 : index
    %c0_42 = arith.constant 0 : index
    %95 = vector.load %arg9[%c0_39, %c0_40, %c0_41, %c0_42] : memref<1x1x2x128xf32, #tpu.memory_space<vmem>>, vector<1x1x2x128xf32>
    %96 = vector.shape_cast %95 : vector<1x1x2x128xf32> to vector<2x128xf32>
    %97 = vector.shape_cast %94 : vector<2x128xf32> to vector<1x1x2x128xf32>
    tpu.vector_store %arg9[%c0_39, %c0_40, %c0_41, %c0_42], %97 {strides = array<i32>} : memref<1x1x2x128xf32, #tpu.memory_space<vmem>>, vector<1x1x2x128xf32>,
    return
  }
  func.func @transform_0(%arg0: i32, %arg1: i32) -> (i32, i32, i32, i32) {
    %c0_i32 = arith.constant 0 : i32
    %c0_i32_0 = arith.constant 0 : i32
    %c0_i32_1 = arith.constant 0 : i32
    return %arg0, %arg1, %c0_i32, %c0_i32_0 : i32, i32, i32, i32
  }
  func.func @transform_1(%arg0: i32, %arg1: i32) -> (i32, i32, i32, i32) {
    %c4_i32 = arith.constant 4 : i32
    %0 = arith.muli %arg1, %c4_i32 : i32
    %c1_i32 = arith.constant 1 : i32
    %1 = arith.subi %0, %c1_i32 : i32
    %c0_i32 = arith.constant 0 : i32
    %2 = arith.maxsi %1, %c0_i32 : i32
    %c0_i32_0 = arith.constant 0 : i32
    %c0_i32_1 = arith.constant 0 : i32
    %c0_i32_2 = arith.constant 0 : i32
    return %arg0, %2, %c0_i32_0, %c0_i32_1 : i32, i32, i32, i32
  }
  func.func @transform_2(%arg0: i32, %arg1: i32) -> (i32, i32, i32, i32) {
    %c1_i32 = arith.constant 1 : i32
    %0 = arith.addi %arg1, %c1_i32 : i32
    %c4_i32 = arith.constant 4 : i32
    %1 = arith.muli %0, %c4_i32 : i32
    %c7_i32 = arith.constant 7 : i32
    %2 = arith.minsi %1, %c7_i32 : i32
    %c0_i32 = arith.constant 0 : i32
    %c0_i32_0 = arith.constant 0 : i32
    %c0_i32_1 = arith.constant 0 : i32
    return %arg0, %2, %c0_i32, %c0_i32_0 : i32, i32, i32, i32
  }
  func.func @transform_3(%arg0: i32, %arg1: i32) -> (i32, i32) {
    %c0_i32 = arith.constant 0 : i32
    %c0_i32_0 = arith.constant 0 : i32
    %c0_i32_1 = arith.constant 0 : i32
    return %c0_i32, %c0_i32_0 : i32, i32
  }
  func.func @transform_4(%arg0: i32, %arg1: i32) -> (i32, i32) {
    %c0_i32 = arith.constant 0 : i32
    %c0_i32_0 = arith.constant 0 : i32
    %c0_i32_1 = arith.constant 0 : i32
    return %c0_i32, %c0_i32_0 : i32, i32
  }
  func.func @transform_5(%arg0: i32, %arg1: i32) -> (i32, i32, i32) {
    %c0_i32 = arith.constant 0 : i32
    %c0_i32_0 = arith.constant 0 : i32
    %c0_i32_1 = arith.constant 0 : i32
    %c0_i32_2 = arith.constant 0 : i32
    return %c0_i32, %c0_i32_0, %c0_i32_1 : i32, i32, i32
  }
  func.func @transform_6(%arg0: i32, %arg1: i32) -> (i32, i32, i32, i32) {
    %c0_i32 = arith.constant 0 : i32
    %c0_i32_0 = arith.constant 0 : i32
    %c0_i32_1 = arith.constant 0 : i32
    return %arg0, %arg1, %c0_i32, %c0_i32_0 : i32, i32, i32, i32
  }
  func.func @transform_7(%arg0: i32, %arg1: i32) -> (i32, i32, i32, i32) {
    %c0_i32 = arith.constant 0 : i32
    %c0_i32_0 = arith.constant 0 : i32
    %c0_i32_1 = arith.constant 0 : i32
    return %arg0, %arg1, %c0_i32, %c0_i32_0 : i32, i32, i32, i32
  }
}

</mosaic_0001>

<llo_original>
// kernel: unet_skip_up_forward.5
$region0: #{unet_skip_up_forward.5}
  #allocation0 [shape = 'u32[]', space=smem, size = 0x4, offset = 0x4, fixed_abs, tag = 'smem constant byte address 0x4 - core index']
  #allocation1 [shape = 'u32[144,128]{1,0:T(1,128)}', space=vmem, size = 0x12000, scoped, tag = 'internal scratch']
  %s0 = inlined_call_operand.hbm [shape: bf16[2,16,16,128], index: 0, kind: input, shape index: {}]
  %s1 = inlined_call_operand.hbm [shape: f32[1,128], index: 1, kind: input, shape index: {}]
  %s2 = inlined_call_operand.hbm [shape: f32[1,128], index: 2, kind: input, shape index: {}]
  %s3 = inlined_call_operand.hbm [shape: f32[2,16,16,128], index: 3, kind: output, shape index: {}]
  %s4 = sld [smem:[#allocation0]]
  $region57: #{unet_skip_up_forward.5} parent=0
    _
  %s6 = ssub.s32 1, %s4
  %s7 = scalar_select 0, %s6, %s4
  $region1: #{unet_skip_up_forward.5} parent=0
    #allocation2 [shape = 'u8[65536]{0}', space=vmem, size = 0x10000, scoped, tag = 'input window, operand 0']
    #allocation3 [shape = 's32[2]{0}', space=sflag, size = 0x8, scoped, tag = 'scoped memory for unet_skip_up_forward.5']
    #allocation4 [shape = 's32[2]{0}', space=sflag, size = 0x8, scoped, tag = 'scoped memory for unet_skip_up_forward.5']
    #allocation5 [shape = 'u8[512]{0}', space=vmem, size = 0x400, scoped, tag = 'input window, operand 1, single buffered']
    #allocation6 [shape = 's32[1]{0}', space=sflag, size = 0x4, scoped, tag = 'scoped memory for unet_skip_up_forward.5']
    #allocation7 [shape = 'u8[512]{0}', space=vmem, size = 0x400, scoped, tag = 'input window, operand 2, single buffered']
    #allocation8 [shape = 'u8[131072]{0}', space=vmem, size = 0x20000, scoped, tag = 'output window, operand 0']
    %8 = vsyncpa [#allocation3], 0
    %s9 = scalar_lea.sflag [#allocation3], 1
    %10 = vsyncpa %s9, 0
    %11 = vsyncpa [#allocation6], 0
    %12 = vsyncpa [#allocation4], 0
    %s13 = scalar_lea.sflag [#allocation4], 1
    %14 = vsyncpa %s13, 0
    loop: start=0, step=1, limit=6
    $region2: #{unet_skip_up_forward.5} parent=1 // loop_pre_header
      _
    $region3: #{unet_skip_up_forward.5} parent=1 // loop_header
      %s16 = sphi 0, %s20
      %p17 = scmp.ge.s32.totalorder %s16, 6
      %s23 = sphi 0, %s35
      %s24 = sphi 0, %s31
      %s25 = sphi 0, %s23
      %s26 = sphi 0, %s24
      %s27 = sphi 0, %s25
      %s28 = sphi 0, %s26
      %s40 = sphi 0, %s42
      %s43 = sphi 0, %s40
      %s44 = sphi 0, %s43
      %s60 = sphi 0, %s44
      %s64 = sphi 0, %s64
      %s66 = sphi 0, %s64
      %s67 = sphi 0, %s66
      %s81 = sphi 0, %s67
      %s85 = sphi 0, %s85
      %s87 = sphi 0, %s85
      %s88 = sphi 0, %s87
      %s102 = sphi 0, %s88
      %s110 = sphi 0, %s112
      %s113 = sphi 0, %s110
      %s114 = sphi 0, %s113
      %s130 = sphi 0, %s114
    $region4: #{unet_skip_up_forward.5} parent=1 // loop_header_branch
      %19 = sbr.rel (%p17) target = $region8
    $region5: #{unet_skip_up_forward.5} parent=1 // loop_body
      %s21 = ssub.s32 %s16, 1
      %s22 = ssub.s32 %s16, 2
      %s29 = sadd.s32 1, %s24
      %p30 = scmp.ge.s32.totalorder %s29, 2
      %s31 = scalar_select %p30, 0, %s29
      %s32 = sadd.s32 1, %s23
      %s33 = scalar_select %p30, %s32, %s23
      %p34 = scmp.ge.s32.totalorder %s33, 2
      %s35 = scalar_select %p34, 0, %s33
      %s36 = ssub.s32 %s23, %s35
      %s37 = ssub.s32 %s24, %s31
      %s38 = sor.u32 %s36, %s37
      %p39 = scmp.eq.s32.totalorder %s38, 0
      %s41 = sadd.s32 %s40, 1
      %s42 = scalar_select %p39, %s40, %s41
      %p45 = pneg %p39
      %p46 = scmp.eq.s32.totalorder %s16, 3
      %p47 = por %p45, %p46
      %p48 = scmp.ne.s32.totalorder %s40, %s43
      %p49 = scmp.eq.s32.totalorder %s16, 0
      %p50 = por %p48, %p49
      %p51 = scmp.ne.s32.totalorder %s40, %s43
      %p52 = scmp.eq.s32.totalorder %s21, 3
      %p53 = por %p51, %p52
      %p54 = scmp.ne.s32.totalorder %s43, %s44
      %p55 = scmp.eq.s32.totalorder %s21, 0
      %p56 = por %p54, %p55
      %p57 = scmp.ne.s32.totalorder %s43, %s44
      %p58 = scmp.eq.s32.totalorder %s22, 3
      %p59 = por %p57, %p58
      %p61 = scmp.ne.s32.totalorder %s44, %s60
      %p62 = scmp.eq.s32.totalorder %s22, 0
      %p63 = por %p61, %p62
      %s65 = sadd.s32 %s64, 1
      %p68 = scmp.eq.s32.totalorder %s16, 3
      %p69 = scmp.ne.s32.totalorder %s64, %s66
      %p70 = scmp.eq.s32.totalorder %s16, 0
      %p71 = por %p69, %p70
      %p72 = scmp.ne.s32.totalorder %s64, %s66
      %p73 = scmp.eq.s32.totalorder %s21, 3
      %p74 = por %p72, %p73
      %p75 = scmp.ne.s32.totalorder %s66, %s67
      %p76 = scmp.eq.s32.totalorder %s21, 0
      %p77 = por %p75, %p76
      %p78 = scmp.ne.s32.totalorder %s66, %s67
      %p79 = scmp.eq.s32.totalorder %s22, 3
      %p80 = por %p78, %p79
      %p82 = scmp.ne.s32.totalorder %s67, %s81
      %p83 = scmp.eq.s32.totalorder %s22, 0
      %p84 = por %p82, %p83
      %s86 = sadd.s32 %s85, 1
      %p89 = scmp.eq.s32.totalorder %s16, 3
      %p90 = scmp.ne.s32.totalorder %s85, %s87
      %p91 = scmp.eq.s32.totalorder %s16, 0
      %p92 = por %p90, %p91
      %p93 = scmp.ne.s32.totalorder %s85, %s87
      %p94 = scmp.eq.s32.totalorder %s21, 3
      %p95 = por %p93, %p94
      %p96 = scmp.ne.s32.totalorder %s87, %s88
      %p97 = scmp.eq.s32.totalorder %s21, 0
      %p98 = por %p96, %p97
      %p99 = scmp.ne.s32.totalorder %s87, %s88
      %p100 = scmp.eq.s32.totalorder %s22, 3
      %p101 = por %p99, %p100
      %p103 = scmp.ne.s32.totalorder %s88, %s102
      %p104 = scmp.eq.s32.totalorder %s22, 0
      %p105 = por %p103, %p104
      %s106 = ssub.s32 %s23, %s35
      %s107 = ssub.s32 %s24, %s31
      %s108 = sor.u32 %s106, %s107
      %p109 = scmp.eq.s32.totalorder %s108, 0
      %s111 = sadd.s32 %s110, 1
      %s112 = scalar_select %p109, %s110, %s111
      %p115 = pneg %p109
      %p116 = scmp.eq.s32.totalorder %s16, 3
      %p117 = por %p115, %p116
      %p118 = scmp.ne.s32.totalorder %s110, %s113
      %p119 = scmp.eq.s32.totalorder %s16, 0
      %p120 = por %p118, %p119
      %p121 = scmp.ne.s32.totalorder %s110, %s113
      %p122 = scmp.eq.s32.totalorder %s21, 3
      %p123 = por %p121, %p122
      %p124 = scmp.ne.s32.totalorder %s113, %s114
      %p125 = scmp.eq.s32.totalorder %s21, 0
      %p126 = por %p124, %p125
      %p127 = scmp.ne.s32.totalorder %s113, %s114
      %p128 = scmp.eq.s32.totalorder %s22, 3
      %p129 = por %p127, %p128
      %p131 = scmp.ne.s32.totalorder %s114, %s130
      %p132 = scmp.eq.s32.totalorder %s22, 0
      %p133 = por %p131, %p132
      %p134 = scmp.le.s32.totalorder 1, %s16
      %p135 = scmp.lt.s32.totalorder %s16, 5
      %p136 = pnand %p134, %p135
      %p137 = pneg %p136
      // Predicated region
      $region9: #{unet_skip_up_forward.5} parent=5 // pred_check
        _
      $region10: #{unet_skip_up_forward.5} parent=5 // pred_check_branch
        %139 = sbr.rel (%p136) target = $region12
      $region11: #{unet_skip_up_forward.5} parent=5 // pred_region
        %s140 = ssub.s32 %s16, 1
        // Predicated region
        $region13: #{unet_skip_up_forward.5} parent=11 // pred_check
          %p141 = pneg %p77
        $region14: #{unet_skip_up_forward.5} parent=11 // pred_check_branch
          %143 = sbr.rel (%p141) target = $region16
        $region15: #{unet_skip_up_forward.5} parent=11 // pred_region
          %s145 = ssub.s32 16, 16
          %146 = vsyncadd [#allocation6], %s145
          %s148 = sshll.u32 [#allocation5], 4
          %s149 = int_to_ptr.vmem [resolvable:$true] %s148
          %151 = dma.hbm_to_vmem [thread:$0]  %s1, 16, %s149, [#allocation6]
        $region16: #{unet_skip_up_forward.5} parent=11 // pred_fallthru
          _
        // Predicated region
        $region17: #{unet_skip_up_forward.5} parent=11 // pred_check
          %p152 = pneg %p98
        $region18: #{unet_skip_up_forward.5} parent=11 // pred_check_branch
          %154 = sbr.rel (%p152) target = $region20
        $region19: #{unet_skip_up_forward.5} parent=11 // pred_region
          %s156 = ssub.s32 16, 16
          %157 = vsyncadd [#allocation6], %s156
          %s159 = sshll.u32 [#allocation7], 4
          %s160 = int_to_ptr.vmem [resolvable:$true] %s159
          %162 = dma.hbm_to_vmem [thread:$0]  %s2, 16, %s160, [#allocation6]
        $region20: #{unet_skip_up_forward.5} parent=11 // pred_fallthru
          _
      $region12: #{unet_skip_up_forward.5} parent=5 // pred_fallthru
        _
      %p163 = scmp.lt.s32.totalorder %s16, 4
      // Predicated region
      $region21: #{unet_skip_up_forward.5} parent=5 // pred_check
        %p164 = pneg %p163
      $region22: #{unet_skip_up_forward.5} parent=5 // pred_check_branch
        %166 = sbr.rel (%p164) target = $region24
      $region23: #{unet_skip_up_forward.5} parent=5 // pred_region
        // Predicated region
        $region25: #{unet_skip_up_forward.5} parent=23 // pred_check
          %p167 = pneg %p50
        $region26: #{unet_skip_up_forward.5} parent=23 // pred_check_branch
          %169 = sbr.rel (%p167) target = $region28
        $region27: #{unet_skip_up_forward.5} parent=23 // pred_region
          %s170 = sand.u32 %s40, 1
          %s171 = scalar_lea.sflag [#allocation3], %s170
          %s172 = sand.u32 %s40, 1
          %s173 = smul.addr %s172, 64
          %s174 = scalar_lea.vmem [#allocation2], %s173
          %s175 = smul.u32 8, %s24
          %s177 = ssub.s32 1024, 1024
          %178 = vsyncadd %s171, %s177
          %s179 = smul.addr %s175, 2
          %s180 = smul.addr %s23, 32
          %s181 = sadd.s32 %s179, %s180
          %s182 = smul.addr %s181, 64
          %s183 = scalar_lea.hbm %s0, %s182
          %s184 = sshll.u32 %s174, 4
          %s185 = int_to_ptr.vmem [resolvable:$true] %s184
          %190 = dma.hbm_to_vmem [thread:$0]  %s183, 1024, %s185, %s171, 64, 64, 4
        $region28: #{unet_skip_up_forward.5} parent=23 // pred_fallthru
          _
      $region24: #{unet_skip_up_forward.5} parent=5 // pred_fallthru
        _
      %p191 = scmp.le.s32.totalorder 1, %s16
      %p192 = scmp.lt.s32.totalorder %s16, 5
      %p193 = pnand %p191, %p192
      %p194 = pneg %p193
      // Predicated region
      $region29: #{unet_skip_up_forward.5} parent=5 // pred_check
        _
      $region30: #{unet_skip_up_forward.5} parent=5 // pred_check_branch
        %196 = sbr.rel (%p193) target = $region32
      $region31: #{unet_skip_up_forward.5} parent=5 // pred_region
        %s197 = ssub.s32 %s16, 1
        %s198 = sand.u32 %s43, 1
        %s199 = scalar_lea.sflag [#allocation3], %s198
        %s200 = sand.u32 %s43, 1
        %s201 = smul.addr %s200, 64
        %s202 = scalar_lea.vmem [#allocation2], %s201
        // Predicated region
        $region33: #{unet_skip_up_forward.5} parent=31 // pred_check
          %p203 = pneg %p56
        $region34: #{unet_skip_up_forward.5} parent=31 // pred_check_branch
          %205 = sbr.rel (%p203) target = $region36
        $region35: #{unet_skip_up_forward.5} parent=31 // pred_region
          %206 = dma.done %s199, 1024
        $region36: #{unet_skip_up_forward.5} parent=31 // pred_fallthru
          _
        // Predicated region
        $region37: #{unet_skip_up_forward.5} parent=31 // pred_check
          %p207 = pneg %p77
        $region38: #{unet_skip_up_forward.5} parent=31 // pred_check_branch
          %209 = sbr.rel (%p207) target = $region40
        $region39: #{unet_skip_up_forward.5} parent=31 // pred_region
          %210 = dma.done [#allocation6], 16
        $region40: #{unet_skip_up_forward.5} parent=31 // pred_fallthru
          _
        // Predicated region
        $region41: #{unet_skip_up_forward.5} parent=31 // pred_check
          %p211 = pneg %p98
        $region42: #{unet_skip_up_forward.5} parent=31 // pred_check_branch
          %213 = sbr.rel (%p211) target = $region44
        $region43: #{unet_skip_up_forward.5} parent=31 // pred_region
          %214 = dma.done [#allocation6], 16
        $region44: #{unet_skip_up_forward.5} parent=31 // pred_fallthru
          _
        %s215 = sand.u32 %s43, 1
        %s216 = scalar_lea.sflag [#allocation3], %s215
        %s217 = sand.u32 %s43, 1
        %s218 = smul.addr %s217, 64
        %s219 = scalar_lea.vmem [#allocation2], %s218
        %p220 = pneg %p56
        %p221 = pneg %p53
        %p222 = pneg %p77
        %p223 = pneg %p74
        %p224 = pneg %p98
        %p225 = pneg %p95
        %p226 = pneg %p126
        %p227 = pneg %p123
        %s228 = sand.u32 %s113, 1
        %s229 = scalar_lea.sflag [#allocation4], %s228
        %s230 = sand.u32 %s113, 1
        %s231 = smul.addr %s230, 128
        %s232 = scalar_lea.vmem [#allocation8], %s231
        %s233 = smul.u32 8, %s26
        %s234 = smul.u32 8, %s26
        %v235 = vld [vmem:[%s202] sm:$0xf]
        %v236 = vld [vmem:[%s202 + $0x4] sm:$0xf]
        %v237 = vld [vmem:[%s202 + $0x8] sm:$0xf]
        %v238 = vld [vmem:[%s202 + $0xc] sm:$0xf]
        %v239 = vld [vmem:[%s202 + $0x10] sm:$0xf]
        %v240 = vld [vmem:[%s202 + $0x14] sm:$0xf]
        %v241 = vld [vmem:[%s202 + $0x18] sm:$0xf]
        %v242 = vld [vmem:[%s202 + $0x1c] sm:$0xf]
        %v243 = vld [vmem:[%s202 + $0x20] sm:$0xf]
        %v244 = vld [vmem:[%s202 + $0x24] sm:$0xf]
        %v245 = vld [vmem:[%s202 + $0x28] sm:$0xf]
        %v246 = vld [vmem:[%s202 + $0x2c] sm:$0xf]
        %v247 = vld [vmem:[%s202 + $0x30] sm:$0xf]
        %v248 = vld [vmem:[%s202 + $0x34] sm:$0xf]
        %v249 = vld [vmem:[%s202 + $0x38] sm:$0xf]
        %v250 = vld [vmem:[%s202 + $0x3c] sm:$0xf]
        %v251 = vunpack.c.l.bf16 %v235
        %v252 = vunpack.c.l.bf16 %v236
        %v253 = vunpack.c.l.bf16 %v237
        %v254 = vunpack.c.l.bf16 %v238
        %v255 = vunpack.c.l.bf16 %v239
        %v256 = vunpack.c.l.bf16 %v240
        %v257 = vunpack.c.l.bf16 %v241
        %v258 = vunpack.c.l.bf16 %v242
        %v259 = vunpack.c.l.bf16 %v243
        %v260 = vunpack.c.l.bf16 %v244
        %v261 = vunpack.c.l.bf16 %v245
        %v262 = vunpack.c.l.bf16 %v246
        %v263 = vunpack.c.l.bf16 %v247
        %v264 = vunpack.c.l.bf16 %v248
        %v265 = vunpack.c.l.bf16 %v249
        %v266 = vunpack.c.l.bf16 %v250
        %v267 = vld [vmem:[#allocation5] sm:$0x1]
        %v268 = vld [vmem:[#allocation7] sm:$0x1]
        %v270 = vlaneseq
        %v271 = vshrl.u32 %v270, 7
        %v272 = vsub.s32 0, %v271
        %v273 = vrot.slane %v267, %v272
        %v275 = vmul.f32 %v251, %v273
        %v276 = vmul.f32 %v252, %v273
        %v277 = vmul.f32 %v253, %v273
        %v278 = vmul.f32 %v254, %v273
        %v279 = vmul.f32 %v255, %v273
        %v280 = vmul.f32 %v256, %v273
        %v281 = vmul.f32 %v257, %v273
        %v282 = vmul.f32 %v258, %v273
        %v283 = vmul.f32 %v259, %v273
        %v284 = vmul.f32 %v260, %v273
        %v285 = vmul.f32 %v261, %v273
        %v286 = vmul.f32 %v262, %v273
        %v287 = vmul.f32 %v263, %v273
        %v288 = vmul.f32 %v264, %v273
        %v289 = vmul.f32 %v265, %v273
        %v290 = vmul.f32 %v266, %v273
        %v292 = vlaneseq
        %v293 = vshrl.u32 %v292, 7
        %v294 = vsub.s32 0, %v293
        %v295 = vrot.slane %v268, %v294
        %v297 = vadd.f32 %v275, %v295
        %v298 = vadd.f32 %v276, %v295
        %v299 = vadd.f32 %v277, %v295
        %v300 = vadd.f32 %v278, %v295
        %v301 = vadd.f32 %v279, %v295
        %v302 = vadd.f32 %v280, %v295
        %v303 = vadd.f32 %v281, %v295
        %v304 = vadd.f32 %v282, %v295
        %v305 = vadd.f32 %v283, %v295
        %v306 = vadd.f32 %v284, %v295
        %v307 = vadd.f32 %v285, %v295
        %v308 = vadd.f32 %v286, %v295
        %v309 = vadd.f32 %v287, %v295
        %v310 = vadd.f32 %v288, %v295
        %v311 = vadd.f32 %v289, %v295
        %v312 = vadd.f32 %v290, %v295
        %v313 = vmax.f32 %v297, 0.0
        %v314 = vmax.f32 %v298, 0.0
        %v315 = vmax.f32 %v299, 0.0
        %v316 = vmax.f32 %v300, 0.0
        %v317 = vmax.f32 %v301, 0.0
        %v318 = vmax.f32 %v302, 0.0
        %v319 = vmax.f32 %v303, 0.0
        %v320 = vmax.f32 %v304, 0.0
        %v321 = vmax.f32 %v305, 0.0
        %v322 = vmax.f32 %v306, 0.0
        %v323 = vmax.f32 %v307, 0.0
        %v324 = vmax.f32 %v308, 0.0
        %v325 = vmax.f32 %v309, 0.0
        %v326 = vmax.f32 %v310, 0.0
        %v327 = vmax.f32 %v311, 0.0
        %v328 = vmax.f32 %v312, 0.0
        %v329 = vmin.f32 %v313, 6.0
        %v330 = vmin.f32 %v314, 6.0
        %v331 = vmin.f32 %v315, 6.0
        %v332 = vmin.f32 %v316, 6.0
        %v333 = vmin.f32 %v317, 6.0
        %v334 = vmin.f32 %v318, 6.0
        %v335 = vmin.f32 %v319, 6.0
        %v336 = vmin.f32 %v320, 6.0
        %v337 = vmin.f32 %v321, 6.0
        %v338 = vmin.f32 %v322, 6.0
        %v339 = vmin.f32 %v323, 6.0
        %v340 = vmin.f32 %v324, 6.0
        %v341 = vmin.f32 %v325, 6.0
        %v342 = vmin.f32 %v326, 6.0
        %v343 = vmin.f32 %v327, 6.0
        %v344 = vmin.f32 %v328, 6.0
        %345 = vst [vmem:[%s232] sm:$0xff] %v329
        %346 = vst [vmem:[%s232 + $0x8] sm:$0xff] %v330
        %347 = vst [vmem:[%s232 + $0x10] sm:$0xff] %v331
        %348 = vst [vmem:[%s232 + $0x18] sm:$0xff] %v332
        %349 = vst [vmem:[%s232 + $0x20] sm:$0xff] %v333
        %350 = vst [vmem:[%s232 + $0x28] sm:$0xff] %v334
        %351 = vst [vmem:[%s232 + $0x30] sm:$0xff] %v335
        %352 = vst [vmem:[%s232 + $0x38] sm:$0xff] %v336
        %353 = vst [vmem:[%s232 + $0x40] sm:$0xff] %v337
        %354 = vst [vmem:[%s232 + $0x48] sm:$0xff] %v338
        %355 = vst [vmem:[%s232 + $0x50] sm:$0xff] %v339
        %356 = vst [vmem:[%s232 + $0x58] sm:$0xff] %v340
        %357 = vst [vmem:[%s232 + $0x60] sm:$0xff] %v341
        %358 = vst [vmem:[%s232 + $0x68] sm:$0xff] %v342
        %359 = vst [vmem:[%s232 + $0x70] sm:$0xff] %v343
        %360 = vst [vmem:[%s232 + $0x78] sm:$0xff] %v344
        %s361 = sand.u32 %s113, 1
        %s362 = scalar_lea.sflag [#allocation4], %s361
        %s363 = sand.u32 %s113, 1
        %s364 = smul.addr %s363, 128
        %s365 = scalar_lea.vmem [#allocation8], %s364
        // Predicated region
        $region45: #{unet_skip_up_forward.5} parent=31 // pred_check
          %p366 = pneg %p123
        $region46: #{unet_skip_up_forward.5} parent=31 // pred_check_branch
          %368 = sbr.rel (%p366) target = $region48
        $region47: #{unet_skip_up_forward.5} parent=31 // pred_region
          %s369 = smul.u32 8, %s26
          %s371 = ssub.s32 2048, 2048
          %372 = vsyncadd %s362, %s371
          %s373 = smul.addr %s369, 2
          %s374 = smul.addr %s25, 32
          %s375 = sadd.s32 %s373, %s374
          %s376 = smul.addr %s375, 128
          %s377 = scalar_lea.hbm %s3, %s376
          %s378 = sshll.u32 %s365, 4
          %s379 = int_to_ptr.vmem [resolvable:$true] %s378
          %384 = dma.vmem_to_hbm [thread:$0]  %s379, 2048, %s377, %s362, 128, 128, 8
        $region48: #{unet_skip_up_forward.5} parent=31 // pred_fallthru
          _
      $region32: #{unet_skip_up_forward.5} parent=5 // pred_fallthru
        _
      %p385 = scmp.le.s32.totalorder 2, %s16
      // Predicated region
      $region49: #{unet_skip_up_forward.5} parent=5 // pred_check
        %p386 = pneg %p385
      $region50: #{unet_skip_up_forward.5} parent=5 // pred_check_branch
        %388 = sbr.rel (%p386) target = $region52
      $region51: #{unet_skip_up_forward.5} parent=5 // pred_region
        %s389 = ssub.s32 %s16, 2
        // Predicated region
        $region53: #{unet_skip_up_forward.5} parent=51 // pred_check
          %p390 = pneg %p129
        $region54: #{unet_skip_up_forward.5} parent=51 // pred_check_branch
          %392 = sbr.rel (%p390) target = $region56
        $region55: #{unet_skip_up_forward.5} parent=51 // pred_region
          %s393 = sand.u32 %s114, 1
          %s394 = scalar_lea.sflag [#allocation4], %s393
          %s395 = sand.u32 %s114, 1
          %s396 = smul.addr %s395, 128
          %s397 = scalar_lea.vmem [#allocation8], %s396
          %398 = dma.done %s394, 2048
        $region56: #{unet_skip_up_forward.5} parent=51 // pred_fallthru
          _
      $region52: #{unet_skip_up_forward.5} parent=5 // pred_fallthru
        _
    $region6: #{unet_skip_up_forward.5} parent=1 // loop_footer
      %s20 = sadd.s32 1, %s16
    $region7: #{unet_skip_up_forward.5} parent=1 // loop_footer_branch
      %15 = sbr.rel target = $region3
    $region8: #{unet_skip_up_forward.5} parent=1 // loop_exit
      _
    %399 = vsyncpa [#allocation3], 1
    %s400 = scalar_lea.sflag [#allocation3], 1
    %401 = vsyncpa %s400, 1
    %402 = vsyncpa [#allocation6], 1
    %403 = vsyncpa [#allocation4], 1
    %s404 = scalar_lea.sflag [#allocation4], 1
    %405 = vsyncpa %s404, 1

// kernel: unet_skip_up_forward.3
$region0: #{unet_skip_up_forward.3}
  #allocation0 [shape = 'u32[]', space=smem, size = 0x4, offset = 0x4, fixed_abs, tag = 'smem constant byte address 0x4 - core index']
  #allocation1 [shape = 'u32[144,128]{1,0:T(1,128)}', space=vmem, size = 0x12000, scoped, tag = 'internal scratch']
  %s0 = inlined_call_operand.hbm [shape: bf16[2,16,16,12], index: 0, kind: input, shape index: {}, may-alias: {0,1,2}]
  %s1 = inlined_call_operand.hbm [shape: bf16[2,16,16,12], index: 1, kind: input, shape index: {}, may-alias: {0,1,2}]
  %s2 = inlined_call_operand.hbm [shape: bf16[2,16,16,12], index: 2, kind: input, shape index: {}, may-alias: {0,1,2}]
  %s3 = inlined_call_operand.hbm [shape: f32[1,12], index: 3, kind: input, shape index: {}]
  %s4 = inlined_call_operand.hbm [shape: f32[1,12], index: 4, kind: input, shape index: {}]
  %s5 = inlined_call_operand.hbm [shape: bf16[3,36,128], index: 5, kind: input, shape index: {}]
  %s6 = inlined_call_operand.hbm [shape: bf16[2,16,16,128], index: 6, kind: output, shape index: {0}]
  %s7 = inlined_call_operand.hbm [shape: f32[2,2,2,128], index: 7, kind: output, shape index: {1}]
  %8 = xla_tuple %s6, %s7
  %s9 = sld [smem:[#allocation0]]
  $region89: #{unet_skip_up_forward.3} parent=0
    _
  %s11 = ssub.s32 1, %s9
  %s12 = scalar_select 0, %s11, %s9
  $region1: #{unet_skip_up_forward.3} parent=0
    #allocation2 [shape = 'u8[65536]{0}', space=vmem, size = 0x10000, scoped, tag = 'input window, operand 0']
    #allocation3 [shape = 's32[2]{0}', space=sflag, size = 0x8, scoped, tag = 'scoped memory for unet_skip_up_forward.3']
    #allocation4 [shape = 's32[2]{0}', space=sflag, size = 0x8, scoped, tag = 'scoped memory for unet_skip_up_forward.3']
    #allocation5 [shape = 'u8[16384]{0}', space=vmem, size = 0x4000, scoped, tag = 'input window, operand 1']
    #allocation6 [shape = 's32[2]{0}', space=sflag, size = 0x8, scoped, tag = 'scoped memory for unet_skip_up_forward.3']
    #allocation7 [shape = 'u8[16384]{0}', space=vmem, size = 0x4000, scoped, tag = 'input window, operand 2']
    #allocation8 [shape = 'u8[512]{0}', space=vmem, size = 0x400, scoped, tag = 'input window, operand 3, single buffered']
    #allocation9 [shape = 's32[1]{0}', space=sflag, size = 0x4, scoped, tag = 'scoped memory for unet_skip_up_forward.3']
    #allocation10 [shape = 'u8[512]{0}', space=vmem, size = 0x400, scoped, tag = 'input window, operand 4, single buffered']
    #allocation11 [shape = 'u8[30720]{0}', space=vmem, size = 0x7800, scoped, tag = 'input window, operand 5, single buffered']
    #allocation12 [shape = 's32[1]{0}', space=sflag, size = 0x4, scoped, tag = 'scoped memory for unet_skip_up_forward.3']
    #allocation13 [shape = 'u8[65536]{0}', space=vmem, size = 0x10000, scoped, tag = 'output window, operand 0']
    #allocation14 [shape = 'u8[2048]{0}', space=vmem, size = 0x800, scoped, tag = 'output window, operand 1']
    #allocation15 [shape = 's32[2]{0}', space=sflag, size = 0x8, scoped, tag = 'scoped memory for unet_skip_up_forward.3']
    %13 = vsyncpa [#allocation3], 0
    %s14 = scalar_lea.sflag [#allocation3], 1
    %15 = vsyncpa %s14, 0
    %16 = vsyncpa [#allocation6], 0
    %s17 = scalar_lea.sflag [#allocation6], 1
    %18 = vsyncpa %s17, 0
    %19 = vsyncpa [#allocation9], 0
    %20 = vsyncpa [#allocation12], 0
    %21 = vsyncpa [#allocation4], 0
    %s22 = scalar_lea.sflag [#allocation4], 1
    %23 = vsyncpa %s22, 0
    %24 = vsyncpa [#allocation15], 0
    %s25 = scalar_lea.sflag [#allocation15], 1
    %26 = vsyncpa %s25, 0
    loop: start=0, step=1, limit=6
    $region2: #{unet_skip_up_forward.3} parent=1 // loop_pre_header
      _
    $region3: #{unet_skip_up_forward.3} parent=1 // loop_header
      %s28 = sphi 0, %s32
      %p29 = scmp.ge.s32.totalorder %s28, 6
      %s35 = sphi 0, %s47
      %s36 = sphi 0, %s43
      %s37 = sphi 0, %s35
      %s38 = sphi 0, %s36
      %s39 = sphi 0, %s37
      %s40 = sphi 0, %s38
      %s52 = sphi 0, %s54
      %s55 = sphi 0, %s52
      %s56 = sphi 0, %s55
      %s72 = sphi 0, %s56
      %s88 = sphi 0, %s90
      %s91 = sphi 0, %s88
      %s92 = sphi 0, %s91
      %s108 = sphi 0, %s92
      %s124 = sphi 0, %s126
      %s127 = sphi 0, %s124
      %s128 = sphi 0, %s127
      %s144 = sphi 0, %s128
      %s148 = sphi 0, %s148
      %s150 = sphi 0, %s148
      %s151 = sphi 0, %s150
      %s165 = sphi 0, %s151
      %s169 = sphi 0, %s169
      %s171 = sphi 0, %s169
      %s172 = sphi 0, %s171
      %s186 = sphi 0, %s172
      %s190 = sphi 0, %s190
      %s192 = sphi 0, %s190
      %s193 = sphi 0, %s192
      %s207 = sphi 0, %s193
      %s215 = sphi 0, %s217
      %s218 = sphi 0, %s215
      %s219 = sphi 0, %s218
      %s235 = sphi 0, %s219
      %s243 = sphi 0, %s245
      %s246 = sphi 0, %s243
      %s247 = sphi 0, %s246
      %s263 = sphi 0, %s247
    $region4: #{unet_skip_up_forward.3} parent=1 // loop_header_branch
      %31 = sbr.rel (%p29) target = $region8
    $region5: #{unet_skip_up_forward.3} parent=1 // loop_body
      %s33 = ssub.s32 %s28, 1
      %s34 = ssub.s32 %s28, 2
      %s41 = sadd.s32 1, %s36
      %p42 = scmp.ge.s32.totalorder %s41, 2
      %s43 = scalar_select %p42, 0, %s41
      %s44 = sadd.s32 1, %s35
      %s45 = scalar_select %p42, %s44, %s35
      %p46 = scmp.ge.s32.totalorder %s45, 2
      %s47 = scalar_select %p46, 0, %s45
      %s48 = ssub.s32 %s35, %s47
      %s49 = ssub.s32 %s36, %s43
      %s50 = sor.u32 %s48, %s49
      %p51 = scmp.eq.s32.totalorder %s50, 0
      %s53 = sadd.s32 %s52, 1
      %s54 = scalar_select %p51, %s52, %s53
      %p57 = pneg %p51
      %p58 = scmp.eq.s32.totalorder %s28, 3
      %p59 = por %p57, %p58
      %p60 = scmp.ne.s32.totalorder %s52, %s55
      %p61 = scmp.eq.s32.totalorder %s28, 0
      %p62 = por %p60, %p61
      %p63 = scmp.ne.s32.totalorder %s52, %s55
      %p64 = scmp.eq.s32.totalorder %s33, 3
      %p65 = por %p63, %p64
      %p66 = scmp.ne.s32.totalorder %s55, %s56
      %p67 = scmp.eq.s32.totalorder %s33, 0
      %p68 = por %p66, %p67
      %p69 = scmp.ne.s32.totalorder %s55, %s56
      %p70 = scmp.eq.s32.totalorder %s34, 3
      %p71 = por %p69, %p70
      %p73 = scmp.ne.s32.totalorder %s56, %s72
      %p74 = scmp.eq.s32.totalorder %s34, 0
      %p75 = por %p73, %p74
      %s76 = smul.u32 %s36, 4
      %s77 = ssub.s32 %s76, 1
      %p78 = scmp.gt.s32.totalorder %s77, 0
      %s79 = scalar_select %p78, %s77, 0
      %s80 = smul.u32 %s43, 4
      %s81 = ssub.s32 %s80, 1
      %p82 = scmp.gt.s32.totalorder %s81, 0
      %s83 = scalar_select %p82, %s81, 0
      %s84 = ssub.s32 %s35, %s47
      %s85 = ssub.s32 %s79, %s83
      %s86 = sor.u32 %s84, %s85
      %p87 = scmp.eq.s32.totalorder %s86, 0
      %s89 = sadd.s32 %s88, 1
      %s90 = scalar_select %p87, %s88, %s89
      %p93 = pneg %p87
      %p94 = scmp.eq.s32.totalorder %s28, 3
      %p95 = por %p93, %p94
      %p96 = scmp.ne.s32.totalorder %s88, %s91
      %p97 = scmp.eq.s32.totalorder %s28, 0
      %p98 = por %p96, %p97
      %p99 = scmp.ne.s32.totalorder %s88, %s91
      %p100 = scmp.eq.s32.totalorder %s33, 3
      %p101 = por %p99, %p100
      %p102 = scmp.ne.s32.totalorder %s91, %s92
      %p103 = scmp.eq.s32.totalorder %s33, 0
      %p104 = por %p102, %p103
      %p105 = scmp.ne.s32.totalorder %s91, %s92
      %p106 = scmp.eq.s32.totalorder %s34, 3
      %p107 = por %p105, %p106
      %p109 = scmp.ne.s32.totalorder %s92, %s108
      %p110 = scmp.eq.s32.totalorder %s34, 0
      %p111 = por %p109, %p110
      %s112 = sadd.s32 %s36, 1
      %s113 = smul.u32 %s112, 4
      %p114 = scmp.lt.s32.totalorder %s113, 7
      %s115 = scalar_select %p114, %s113, 7
      %s116 = sadd.s32 %s43, 1
      %s117 = smul.u32 %s116, 4
      %p118 = scmp.lt.s32.totalorder %s117, 7
      %s119 = scalar_select %p118, %s117, 7
      %s120 = ssub.s32 %s35, %s47
      %s121 = ssub.s32 %s115, %s119
      %s122 = sor.u32 %s120, %s121
      %p123 = scmp.eq.s32.totalorder %s122, 0
      %s125 = sadd.s32 %s124, 1
      %s126 = scalar_select %p123, %s124, %s125
      %p129 = pneg %p123
      %p130 = scmp.eq.s32.totalorder %s28, 3
      %p131 = por %p129, %p130
      %p132 = scmp.ne.s32.totalorder %s124, %s127
      %p133 = scmp.eq.s32.totalorder %s28, 0
      %p134 = por %p132, %p133
      %p135 = scmp.ne.s32.totalorder %s124, %s127
      %p136 = scmp.eq.s32.totalorder %s33, 3
      %p137 = por %p135, %p136
      %p138 = scmp.ne.s32.totalorder %s127, %s128
      %p139 = scmp.eq.s32.totalorder %s33, 0
      %p140 = por %p138, %p139
      %p141 = scmp.ne.s32.totalorder %s127, %s128
      %p142 = scmp.eq.s32.totalorder %s34, 3
      %p143 = por %p141, %p142
      %p145 = scmp.ne.s32.totalorder %s128, %s144
      %p146 = scmp.eq.s32.totalorder %s34, 0
      %p147 = por %p145, %p146
      %s149 = sadd.s32 %s148, 1
      %p152 = scmp.eq.s32.totalorder %s28, 3
      %p153 = scmp.ne.s32.totalorder %s148, %s150
      %p154 = scmp.eq.s32.totalorder %s28, 0
      %p155 = por %p153, %p154
      %p156 = scmp.ne.s32.totalorder %s148, %s150
      %p157 = scmp.eq.s32.totalorder %s33, 3
      %p158 = por %p156, %p157
      %p159 = scmp.ne.s32.totalorder %s150, %s151
      %p160 = scmp.eq.s32.totalorder %s33, 0
      %p161 = por %p159, %p160
      %p162 = scmp.ne.s32.totalorder %s150, %s151
      %p163 = scmp.eq.s32.totalorder %s34, 3
      %p164 = por %p162, %p163
      %p166 = scmp.ne.s32.totalorder %s151, %s165
      %p167 = scmp.eq.s32.totalorder %s34, 0
      %p168 = por %p166, %p167
      %s170 = sadd.s32 %s169, 1
      %p173 = scmp.eq.s32.totalorder %s28, 3
      %p174 = scmp.ne.s32.totalorder %s169, %s171
      %p175 = scmp.eq.s32.totalorder %s28, 0
      %p176 = por %p174, %p175
      %p177 = scmp.ne.s32.totalorder %s169, %s171
      %p178 = scmp.eq.s32.totalorder %s33, 3
      %p179 = por %p177, %p178
      %p180 = scmp.ne.s32.totalorder %s171, %s172
      %p181 = scmp.eq.s32.totalorder %s33, 0
      %p182 = por %p180, %p181
      %p183 = scmp.ne.s32.totalorder %s171, %s172
      %p184 = scmp.eq.s32.totalorder %s34, 3
      %p185 = por %p183, %p184
      %p187 = scmp.ne.s32.totalorder %s172, %s186
      %p188 = scmp.eq.s32.totalorder %s34, 0
      %p189 = por %p187, %p188
      %s191 = sadd.s32 %s190, 1
      %p194 = scmp.eq.s32.totalorder %s28, 3
      %p195 = scmp.ne.s32.totalorder %s190, %s192
      %p196 = scmp.eq.s32.totalorder %s28, 0
      %p197 = por %p195, %p196
      %p198 = scmp.ne.s32.totalorder %s190, %s192
      %p199 = scmp.eq.s32.totalorder %s33, 3
      %p200 = por %p198, %p199
      %p201 = scmp.ne.s32.totalorder %s192, %s193
      %p202 = scmp.eq.s32.totalorder %s33, 0
      %p203 = por %p201, %p202
      %p204 = scmp.ne.s32.totalorder %s192, %s193
      %p205 = scmp.eq.s32.totalorder %s34, 3
      %p206 = por %p204, %p205
      %p208 = scmp.ne.s32.totalorder %s193, %s207
      %p209 = scmp.eq.s32.totalorder %s34, 0
      %p210 = por %p208, %p209
      %s211 = ssub.s32 %s35, %s47
      %s212 = ssub.s32 %s36, %s43
      %s213 = sor.u32 %s211, %s212
      %p214 = scmp.eq.s32.totalorder %s213, 0
      %s216 = sadd.s32 %s215, 1
      %s217 = scalar_select %p214, %s215, %s216
      %p220 = pneg %p214
      %p221 = scmp.eq.s32.totalorder %s28, 3
      %p222 = por %p220, %p221
      %p223 = scmp.ne.s32.totalorder %s215, %s218
      %p224 = scmp.eq.s32.totalorder %s28, 0
      %p225 = por %p223, %p224
      %p226 = scmp.ne.s32.totalorder %s215, %s218
      %p227 = scmp.eq.s32.totalorder %s33, 3
      %p228 = por %p226, %p227
      %p229 = scmp.ne.s32.totalorder %s218, %s219
      %p230 = scmp.eq.s32.totalorder %s33, 0
      %p231 = por %p229, %p230
      %p232 = scmp.ne.s32.totalorder %s218, %s219
      %p233 = scmp.eq.s32.totalorder %s34, 3
      %p234 = por %p232, %p233
      %p236 = scmp.ne.s32.totalorder %s219, %s235
      %p237 = scmp.eq.s32.totalorder %s34, 0
      %p238 = por %p236, %p237
      %s239 = ssub.s32 %s35, %s47
      %s240 = ssub.s32 %s36, %s43
      %s241 = sor.u32 %s239, %s240
      %p242 = scmp.eq.s32.totalorder %s241, 0
      %s244 = sadd.s32 %s243, 1
      %s245 = scalar_select %p242, %s243, %s244
      %p248 = pneg %p242
      %p249 = scmp.eq.s32.totalorder %s28, 3
      %p250 = por %p248, %p249
      %p251 = scmp.ne.s32.totalorder %s243, %s246
      %p252 = scmp.eq.s32.totalorder %s28, 0
      %p253 = por %p251, %p252
      %p254 = scmp.ne.s32.totalorder %s243, %s246
      %p255 = scmp.eq.s32.totalorder %s33, 3
      %p256 = por %p254, %p255
      %p257 = scmp.ne.s32.totalorder %s246, %s247
      %p258 = scmp.eq.s32.totalorder %s33, 0
      %p259 = por %p257, %p258
      %p260 = scmp.ne.s32.totalorder %s246, %s247
      %p261 = scmp.eq.s32.totalorder %s34, 3
      %p262 = por %p260, %p261
      %p264 = scmp.ne.s32.totalorder %s247, %s263
      %p265 = scmp.eq.s32.totalorder %s34, 0
      %p266 = por %p264, %p265
      %p267 = scmp.le.s32.totalorder 1, %s28
      %p268 = scmp.lt.s32.totalorder %s28, 5
      %p269 = pnand %p267, %p268
      %p270 = pneg %p269
      // Predicated region
      $region9: #{unet_skip_up_forward.3} parent=5 // pred_check
        _
      $region10: #{unet_skip_up_forward.3} parent=5 // pred_check_branch
        %272 = sbr.rel (%p269) target = $region12
      $region11: #{unet_skip_up_forward.3} parent=5 // pred_region
        %s273 = ssub.s32 %s28, 1
        // Predicated region
        $region13: #{unet_skip_up_forward.3} parent=11 // pred_check
          %p274 = pneg %p161
        $region14: #{unet_skip_up_forward.3} parent=11 // pred_check_branch
          %276 = sbr.rel (%p274) target = $region16
        $region15: #{unet_skip_up_forward.3} parent=11 // pred_region
          %s278 = ssub.s32 16, 16
          %279 = vsyncadd [#allocation9], %s278
          %s281 = sshll.u32 [#allocation8], 4
          %s282 = int_to_ptr.vmem [resolvable:$true] %s281
          %284 = dma.hbm_to_vmem [thread:$0]  %s3, 16, %s282, [#allocation9]
        $region16: #{unet_skip_up_forward.3} parent=11 // pred_fallthru
          _
        // Predicated region
        $region17: #{unet_skip_up_forward.3} parent=11 // pred_check
          %p285 = pneg %p182
        $region18: #{unet_skip_up_forward.3} parent=11 // pred_check_branch
          %287 = sbr.rel (%p285) target = $region20
        $region19: #{unet_skip_up_forward.3} parent=11 // pred_region
          %s289 = ssub.s32 16, 16
          %290 = vsyncadd [#allocation9], %s289
          %s292 = sshll.u32 [#allocation10], 4
          %s293 = int_to_ptr.vmem [resolvable:$true] %s292
          %295 = dma.hbm_to_vmem [thread:$0]  %s4, 16, %s293, [#allocation9]
        $region20: #{unet_skip_up_forward.3} parent=11 // pred_fallthru
          _
        // Predicated region
        $region21: #{unet_skip_up_forward.3} parent=11 // pred_check
          %p296 = pneg %p203
        $region22: #{unet_skip_up_forward.3} parent=11 // pred_check_branch
          %298 = sbr.rel (%p296) target = $region24
        $region23: #{unet_skip_up_forward.3} parent=11 // pred_region
          %s300 = ssub.s32 960, 960
          %301 = vsyncadd [#allocation12], %s300
          %s302 = sshll.u32 [#allocation11], 4
          %s303 = int_to_ptr.vmem [resolvable:$true] %s302
          %308 = dma.hbm_to_vmem [thread:$0]  %s5, 960, %s303, [#allocation12], 64, 64, 4
        $region24: #{unet_skip_up_forward.3} parent=11 // pred_fallthru
          _
      $region12: #{unet_skip_up_forward.3} parent=5 // pred_fallthru
        _
      %p309 = scmp.lt.s32.totalorder %s28, 4
      // Predicated region
      $region25: #{unet_skip_up_forward.3} parent=5 // pred_check
        %p310 = pneg %p309
      $region26: #{unet_skip_up_forward.3} parent=5 // pred_check_branch
        %312 = sbr.rel (%p310) target = $region28
      $region27: #{unet_skip_up_forward.3} parent=5 // pred_region
        // Predicated region
        $region29: #{unet_skip_up_forward.3} parent=27 // pred_check
          %p313 = pneg %p62
        $region30: #{unet_skip_up_forward.3} parent=27 // pred_check_branch
          %315 = sbr.rel (%p313) target = $region32
        $region31: #{unet_skip_up_forward.3} parent=27 // pred_region
          %s316 = sand.u32 %s52, 1
          %s317 = scalar_lea.sflag [#allocation3], %s316
          %s318 = sand.u32 %s52, 1
          %s319 = smul.addr %s318, 64
          %s320 = scalar_lea.vmem [#allocation2], %s319
          %s321 = smul.u32 8, %s36
          %s323 = ssub.s32 1024, 1024
          %324 = vsyncadd %s317, %s323
          %s325 = smul.addr %s321, 2
          %s326 = smul.addr %s35, 32
          %s327 = sadd.s32 %s325, %s326
          %s328 = smul.addr %s327, 64
          %s329 = scalar_lea.hbm %s0, %s328
          %s330 = sshll.u32 %s320, 4
          %s331 = int_to_ptr.vmem [resolvable:$true] %s330
          %336 = dma.hbm_to_vmem [thread:$0]  %s329, 1024, %s331, %s317, 64, 64, 4
        $region32: #{unet_skip_up_forward.3} parent=27 // pred_fallthru
          _
        // Predicated region
        $region33: #{unet_skip_up_forward.3} parent=27 // pred_check
          %p337 = pneg %p98
        $region34: #{unet_skip_up_forward.3} parent=27 // pred_check_branch
          %339 = sbr.rel (%p337) target = $region36
        $region35: #{unet_skip_up_forward.3} parent=27 // pred_region
          %s340 = sand.u32 %s28, 1
          %s341 = scalar_lea.sflag [#allocation6], %s340
          %s342 = sand.u32 %s88, 1
          %s343 = smul.addr %s342, 16
          %s344 = scalar_lea.vmem [#allocation5], %s343
          %s345 = smul.u32 %s36, 4
          %s346 = ssub.s32 %s345, 1
          %p347 = scmp.gt.s32.totalorder %s346, 0
          %s348 = scalar_select %p347, %s346, 0
          %s349 = smul.u32 2, %s348
          %s351 = ssub.s32 256, 256
          %352 = vsyncadd %s341, %s351
          %s353 = smul.addr %s349, 2
          %s354 = smul.addr %s35, 32
          %s355 = sadd.s32 %s353, %s354
          %s356 = smul.addr %s355, 64
          %s357 = scalar_lea.hbm %s1, %s356
          %s358 = sshll.u32 %s344, 4
          %s359 = int_to_ptr.vmem [resolvable:$true] %s358
          %364 = dma.hbm_to_vmem [thread:$0]  %s357, 256, %s359, %s341, 64, 64, 4
        $region36: #{unet_skip_up_forward.3} parent=27 // pred_fallthru
          _
        // Predicated region
        $region37: #{unet_skip_up_forward.3} parent=27 // pred_check
          %p365 = pneg %p134
        $region38: #{unet_skip_up_forward.3} parent=27 // pred_check_branch
          %367 = sbr.rel (%p365) target = $region40
        $region39: #{unet_skip_up_forward.3} parent=27 // pred_region
          %s368 = sand.u32 %s28, 1
          %s369 = scalar_lea.sflag [#allocation6], %s368
          %s370 = sand.u32 %s124, 1
          %s371 = smul.addr %s370, 16
          %s372 = scalar_lea.vmem [#allocation7], %s371
          %s373 = sadd.s32 %s36, 1
          %s374 = smul.u32 %s373, 4
          %p375 = scmp.lt.s32.totalorder %s374, 7
          %s376 = scalar_select %p375, %s374, 7
          %s377 = smul.u32 2, %s376
          %s379 = ssub.s32 256, 256
          %380 = vsyncadd %s369, %s379
          %s381 = smul.addr %s377, 2
          %s382 = smul.addr %s35, 32
          %s383 = sadd.s32 %s381, %s382
          %s384 = smul.addr %s383, 64
          %s385 = scalar_lea.hbm %s2, %s384
          %s386 = sshll.u32 %s372, 4
          %s387 = int_to_ptr.vmem [resolvable:$true] %s386
          %392 = dma.hbm_to_vmem [thread:$0]  %s385, 256, %s387, %s369, 64, 64, 4
        $region40: #{unet_skip_up_forward.3} parent=27 // pred_fallthru
          _
      $region28: #{unet_skip_up_forward.3} parent=5 // pred_fallthru
        _
      %p393 = scmp.le.s32.totalorder 1, %s28
      %p394 = scmp.lt.s32.totalorder %s28, 5
      %p395 = pnand %p393, %p394
      %p396 = pneg %p395
      // Predicated region
      $region41: #{unet_skip_up_forward.3} parent=5 // pred_check
        _
      $region42: #{unet_skip_up_forward.3} parent=5 // pred_check_branch
        %398 = sbr.rel (%p395) target = $region44
      $region43: #{unet_skip_up_forward.3} parent=5 // pred_region
        %s399 = ssub.s32 %s28, 1
        %s400 = sand.u32 %s55, 1
        %s401 = scalar_lea.sflag [#allocation3], %s400
        %s402 = sand.u32 %s55, 1
        %s403 = smul.addr %s402, 64
        %s404 = scalar_lea.vmem [#allocation2], %s403
        // Predicated region
        $region45: #{unet_skip_up_forward.3} parent=43 // pred_check
          %p405 = pneg %p68
        $region46: #{unet_skip_up_forward.3} parent=43 // pred_check_branch
          %407 = sbr.rel (%p405) target = $region48
        $region47: #{unet_skip_up_forward.3} parent=43 // pred_region
          %408 = dma.done %s401, 1024
        $region48: #{unet_skip_up_forward.3} parent=43 // pred_fallthru
          _
        %s409 = sand.u32 %s33, 1
        %s410 = scalar_lea.sflag [#allocation6], %s409
        %s411 = sand.u32 %s91, 1
        %s412 = smul.addr %s411, 16
        %s413 = scalar_lea.vmem [#allocation5], %s412
        // Predicated region
        $region49: #{unet_skip_up_forward.3} parent=43 // pred_check
          %p414 = pneg %p104
        $region50: #{unet_skip_up_forward.3} parent=43 // pred_check_branch
          %416 = sbr.rel (%p414) target = $region52
        $region51: #{unet_skip_up_forward.3} parent=43 // pred_region
          %417 = dma.done %s410, 256
        $region52: #{unet_skip_up_forward.3} parent=43 // pred_fallthru
          _
        %s418 = sand.u32 %s33, 1
        %s419 = scalar_lea.sflag [#allocation6], %s418
        %s420 = sand.u32 %s127, 1
        %s421 = smul.addr %s420, 16
        %s422 = scalar_lea.vmem [#allocation7], %s421
        // Predicated region
        $region53: #{unet_skip_up_forward.3} parent=43 // pred_check
          %p423 = pneg %p140
        $region54: #{unet_skip_up_forward.3} parent=43 // pred_check_branch
          %425 = sbr.rel (%p423) target = $region56
        $region55: #{unet_skip_up_forward.3} parent=43 // pred_region
          %426 = dma.done %s419, 256
        $region56: #{unet_skip_up_forward.3} parent=43 // pred_fallthru
          _
        // Predicated region
        $region57: #{unet_skip_up_forward.3} parent=43 // pred_check
          %p427 = pneg %p161
        $region58: #{unet_skip_up_forward.3} parent=43 // pred_check_branch
          %429 = sbr.rel (%p427) target = $region60
        $region59: #{unet_skip_up_forward.3} parent=43 // pred_region
          %430 = dma.done [#allocation9], 16
        $region60: #{unet_skip_up_forward.3} parent=43 // pred_fallthru
          _
        // Predicated region
        $region61: #{unet_skip_up_forward.3} parent=43 // pred_check
          %p431 = pneg %p182
        $region62: #{unet_skip_up_forward.3} parent=43 // pred_check_branch
          %433 = sbr.rel (%p431) target = $region64
        $region63: #{unet_skip_up_forward.3} parent=43 // pred_region
          %434 = dma.done [#allocation9], 16
        $region64: #{unet_skip_up_forward.3} parent=43 // pred_fallthru
          _
        // Predicated region
        $region65: #{unet_skip_up_forward.3} parent=43 // pred_check
          %p435 = pneg %p203
        $region66: #{unet_skip_up_forward.3} parent=43 // pred_check_branch
          %437 = sbr.rel (%p435) target = $region68
        $region67: #{unet_skip_up_forward.3} parent=43 // pred_region
          %438 = dma.done [#allocation12], 960
        $region68: #{unet_skip_up_forward.3} parent=43 // pred_fallthru
          _
        %s439 = sand.u32 %s55, 1
        %s440 = scalar_lea.sflag [#allocation3], %s439
        %s441 = sand.u32 %s55, 1
        %s442 = smul.addr %s441, 64
        %s443 = scalar_lea.vmem [#allocation2], %s442
        %p444 = pneg %p68
        %p445 = pneg %p65
        %s446 = sand.u32 %s33, 1
        %s447 = scalar_lea.sflag [#allocation6], %s446
        %s448 = sand.u32 %s91, 1
        %s449 = smul.addr %s448, 16
        %s450 = scalar_lea.vmem [#allocation5], %s449
        %p451 = pneg %p104
        %p452 = pneg %p101
        %s453 = sand.u32 %s33, 1
        %s454 = scalar_lea.sflag [#allocation6], %s453
        %s455 = sand.u32 %s127, 1
        %s456 = smul.addr %s455, 16
        %s457 = scalar_lea.vmem [#allocation7], %s456
        %p458 = pneg %p140
        %p459 = pneg %p137
        %p460 = pneg %p161
        %p461 = pneg %p158
        %p462 = pneg %p182
        %p463 = pneg %p179
        %p464 = pneg %p203
        %p465 = pneg %p200
        %p466 = pneg %p231
        %p467 = pneg %p228
        %s468 = sand.u32 %s218, 1
        %s469 = scalar_lea.sflag [#allocation4], %s468
        %s470 = sand.u32 %s218, 1
        %s471 = smul.addr %s470, 64
        %s472 = scalar_lea.vmem [#allocation13], %s471
        %p473 = pneg %p259
        %p474 = pneg %p256
        %s475 = sand.u32 %s246, 1
        %s476 = scalar_lea.sflag [#allocation15], %s475
        %s477 = sand.u32 %s246, 1
        %s478 = smul.addr %s477, 2
        %s479 = scalar_lea.vmem [#allocation14], %s478
        %s480 = smul.u32 8, %s38
        %s481 = smul.u32 %s38, 4
        %s482 = ssub.s32 %s481, 1
        %p483 = scmp.gt.s32.totalorder %s482, 0
        %s484 = scalar_select %p483, %s482, 0
        %s485 = smul.u32 2, %s484
        %s486 = sadd.s32 %s38, 1
        %s487 = smul.u32 %s486, 4
        %p488 = scmp.lt.s32.totalorder %s487, 7
        %s489 = scalar_select %p488, %s487, 7
        %s490 = smul.u32 2, %s489
        %s491 = smul.u32 8, %s38
        %v493 = vld [vmem:[%s404] sm:$0xf]
        %v494 = vld [vmem:[%s404 + $0x4] sm:$0xf]
        %v495 = vld [vmem:[%s404 + $0x8] sm:$0xf]
        %v496 = vld [vmem:[%s404 + $0xc] sm:$0xf]
        %v497 = vld [vmem:[%s404 + $0x10] sm:$0xf]
        %v498 = vld [vmem:[%s404 + $0x14] sm:$0xf]
        %v499 = vld [vmem:[%s404 + $0x18] sm:$0xf]
        %v500 = vld [vmem:[%s404 + $0x1c] sm:$0xf]
        %v501 = vld [vmem:[%s404 + $0x20] sm:$0xf]
        %v502 = vld [vmem:[%s404 + $0x24] sm:$0xf]
        %v503 = vld [vmem:[%s404 + $0x28] sm:$0xf]
        %v504 = vld [vmem:[%s404 + $0x2c] sm:$0xf]
        %v505 = vld [vmem:[%s404 + $0x30] sm:$0xf]
        %v506 = vld [vmem:[%s404 + $0x34] sm:$0xf]
        %v507 = vld [vmem:[%s404 + $0x38] sm:$0xf]
        %v508 = vld [vmem:[%s404 + $0x3c] sm:$0xf]
        %v509 = vld [vmem:[%s413 + $0x8] sm:$0xf]
        %v510 = vld [vmem:[%s413 + $0xc] sm:$0xf]
        %v511 = vld [vmem:[%s422] sm:$0xf]
        %v512 = vld [vmem:[%s422 + $0x4] sm:$0xf]
        %p513 = scmp.gt.s32.totalorder %s38, 0
        %s514 = scalar_select %p513, 1, 0
        %s515 = scvt.s32.f32 %s514
        %p517 = scmp.ne.f32.partialorder %s515, %s515
        %s518 = sshrl.u32 %s515, 16
        %s519 = sand.u32 %s518, 1
        %s520 = sadd.s32 32767, %s519
        %s521 = sadd.s32 %s515, %s520
        %s522 = sand.u32 %s521, 4294901760
        %s523 = scalar_select %p517, 2143289344, %s522
        %s525 = sshrl.u32 %s523, 16
        %s526 = sshll.u32 %s525, 16
        %s527 = sor.u32 %s525, %s526
        %v528 = vstv %s527
        %v530 = vmul.bf16 %v509, %v528
        %v531 = vmul.bf16 %v510, %v528
        %p532 = scmp.lt.s32.totalorder %s38, 1
        %s533 = scalar_select %p532, 1, 0
        %s534 = scvt.s32.f32 %s533
        %p536 = scmp.ne.f32.partialorder %s534, %s534
        %s537 = sshrl.u32 %s534, 16
        %s538 = sand.u32 %s537, 1
        %s539 = sadd.s32 32767, %s538
        %s540 = sadd.s32 %s534, %s539
        %s541 = sand.u32 %s540, 4294901760
        %s542 = scalar_select %p536, 2143289344, %s541
        %s544 = sshrl.u32 %s542, 16
        %s545 = sshll.u32 %s544, 16
        %s546 = sor.u32 %s544, %s545
        %v547 = vstv %s546
        %v549 = vmul.bf16 %v511, %v547
        %v550 = vmul.bf16 %v512, %v547
        %v571 = vunpack.c.l.b16 %v530
        %v572 = vunpack.c.l.b16 %v531
        %v573 = vunpack.c.l.b16 %v493
        %v574 = vunpack.c.l.b16 %v494
        %v575 = vunpack.c.l.b16 %v495
        %v576 = vunpack.c.l.b16 %v496
        %v577 = vunpack.c.l.b16 %v497
        %v578 = vunpack.c.l.b16 %v498
        %v579 = vunpack.c.l.b16 %v499
        %v580 = vunpack.c.l.b16 %v500
        %v581 = vunpack.c.l.b16 %v501
        %v582 = vunpack.c.l.b16 %v502
        %v583 = vunpack.c.l.b16 %v503
        %v584 = vunpack.c.l.b16 %v504
        %v585 = vunpack.c.l.b16 %v505
        %v586 = vunpack.c.l.b16 %v506
        %v587 = vunpack.c.l.b16 %v507
        %v588 = vunpack.c.l.b16 %v508
        %v589 = vunpack.c.l.b16 %v549
        %v590 = vunpack.c.l.b16 %v550
        %v591 = vpack.c.b16 %v572, %v571
        %v592 = vpack.c.b16 %v574, %v573
        %v593 = vpack.c.b16 %v576, %v575
        %v594 = vpack.c.b16 %v578, %v577
        %v595 = vpack.c.b16 %v580, %v579
        %v596 = vpack.c.b16 %v582, %v581
        %v597 = vpack.c.b16 %v584, %v583
        %v598 = vpack.c.b16 %v586, %v585
        %v599 = vpack.c.b16 %v588, %v587
        %v600 = vpack.c.b16 %v590, %v589
        %v602 = vshrl.u32 %v591, 16
        %v604 = vrot.slane %v602, 7
        %v605 = vshll.u32 %v591, 16
        %v607 = vor.u32 %v604, %v605
        %v609 = vshrl.u32 %v592, 16
        %v611 = vrot.slane %v609, 7
        %v612 = vshll.u32 %v592, 16
        %v614 = vor.u32 %v611, %v612
        %v616 = vshrl.u32 %v593, 16
        %v618 = vrot.slane %v616, 7
        %v619 = vshll.u32 %v593, 16
        %v621 = vor.u32 %v618, %v619
        %v623 = vshrl.u32 %v594, 16
        %v625 = vrot.slane %v623, 7
        %v626 = vshll.u32 %v594, 16
        %v628 = vor.u32 %v625, %v626
        %v630 = vshrl.u32 %v595, 16
        %v632 = vrot.slane %v630, 7
        %v633 = vshll.u32 %v595, 16
        %v635 = vor.u32 %v632, %v633
        %v637 = vshrl.u32 %v596, 16
        %v639 = vrot.slane %v637, 7
        %v640 = vshll.u32 %v596, 16
        %v642 = vor.u32 %v639, %v640
        %v644 = vshrl.u32 %v597, 16
        %v646 = vrot.slane %v644, 7
        %v647 = vshll.u32 %v597, 16
        %v649 = vor.u32 %v646, %v647
        %v651 = vshrl.u32 %v598, 16
        %v653 = vrot.slane %v651, 7
        %v654 = vshll.u32 %v598, 16
        %v656 = vor.u32 %v653, %v654
        %v658 = vshrl.u32 %v599, 16
        %v660 = vrot.slane %v658, 7
        %v661 = vshll.u32 %v599, 16
        %v663 = vor.u32 %v660, %v661
        %v665 = vshrl.u32 %v600, 16
        %v667 = vrot.slane %v665, 7
        %v668 = vshll.u32 %v600, 16
        %v670 = vor.u32 %v667, %v668
        %vm691 = vcmask 1040384
        %vm692 = vsmask.f32 256
        %vm693 = vmand %vm691, %vm692
        %v694 = vsel %vm693, 0, %v607
        %v695 = vsel %vm693, 0, %v614
        %v696 = vsel %vm693, 0, %v621
        %v697 = vsel %vm693, 0, %v628
        %v698 = vsel %vm693, 0, %v635
        %v699 = vsel %vm693, 0, %v642
        %v700 = vsel %vm693, 0, %v649
        %v701 = vsel %vm693, 0, %v656
        %v702 = vsel %vm693, 0, %v663
        %v703 = vsel %vm693, 0, %v670
        %v704 = vsel %vm693, %v604, 0
        %v705 = vsel %vm693, %v611, 0
        %v706 = vsel %vm693, %v618, 0
        %v707 = vsel %vm693, %v625, 0
        %v708 = vsel %vm693, %v632, 0
        %v709 = vsel %vm693, %v639, 0
        %v710 = vsel %vm693, %v646, 0
        %v711 = vsel %vm693, %v653, 0
        %v712 = vsel %vm693, %v660, 0
        %v713 = vsel %vm693, %v667, 0
        %v714 = vld [vmem:[#allocation11] sm:$0xf]
        %v715 = vld [vmem:[#allocation11 + $0x4] sm:$0xf]
        %v716 = vld [vmem:[#allocation11 + $0x8] sm:$0xf]
        %v717 = vld [vmem:[#allocation11 + $0xc] sm:$0xf]
        %v718 = vld [vmem:[#allocation11 + $0x10] sm:$0x3]
        %vm719 = vsmask.f32 7424
        %v721 = vshrl.u32 %v694, 16
        %v723 = vshll.u32 %v694, 16
        %v725 = vrot.slane %v723, 1
        %v726 = vor.u32 %v721, %v725
        %v728 = vshll.u32 %v704, 16
        %v730 = vrot.slane %v728, 1
        %v731 = vsel %vm719, %v726, %v730
        %v733 = vshrl.u32 %v695, 16
        %v735 = vshll.u32 %v695, 16
        %v737 = vrot.slane %v735, 1
        %v738 = vor.u32 %v733, %v737
        %v740 = vshll.u32 %v705, 16
        %v742 = vrot.slane %v740, 1
        %v743 = vsel %vm719, %v738, %v742
        %v745 = vshrl.u32 %v696, 16
        %v747 = vshll.u32 %v696, 16
        %v749 = vrot.slane %v747, 1
        %v750 = vor.u32 %v745, %v749
        %v752 = vshll.u32 %v706, 16
        %v754 = vrot.slane %v752, 1
        %v755 = vsel %vm719, %v750, %v754
        %v757 = vshrl.u32 %v697, 16
        %v759 = vshll.u32 %v697, 16
        %v761 = vrot.slane %v759, 1
        %v762 = vor.u32 %v757, %v761
        %v764 = vshll.u32 %v707, 16
        %v766 = vrot.slane %v764, 1
        %v767 = vsel %vm719, %v762, %v766
        %v769 = vshrl.u32 %v698, 16
        %v771 = vshll.u32 %v698, 16
        %v773 = vrot.slane %v771, 1
        %v774 = vor.u32 %v769, %v773
        %v776 = vshll.u32 %v708, 16
        %v778 = vrot.slane %v776, 1
        %v779 = vsel %vm719, %v774, %v778
        %v781 = vshrl.u32 %v699, 16
        %v783 = vshll.u32 %v699, 16
        %v785 = vrot.slane %v783, 1
        %v786 = vor.u32 %v781, %v785
        %v788 = vshll.u32 %v709, 16
        %v790 = vrot.slane %v788, 1
        %v791 = vsel %vm719, %v786, %v790
        %v793 = vshrl.u32 %v700, 16
        %v795 = vshll.u32 %v700, 16
        %v797 = vrot.slane %v795, 1
        %v798 = vor.u32 %v793, %v797
        %v800 = vshll.u32 %v710, 16
        %v802 = vrot.slane %v800, 1
        %v803 = vsel %vm719, %v798, %v802
        %v805 = vshrl.u32 %v701, 16
        %v807 = vshll.u32 %v701, 16
        %v809 = vrot.slane %v807, 1
        %v810 = vor.u32 %v805, %v809
        %v812 = vshll.u32 %v711, 16
        %v814 = vrot.slane %v812, 1
        %v815 = vsel %vm719, %v810, %v814
        %v818 = vunpack.c.l.b16 %v715
        %v819 = vunpack.c.l.b16 %v716
        %v820 = vpack.c.b16 %v819, %v818
        %v821 = vrot.slane %v820, 2
        %vm822 = vcmask 97280
        %v824 = vsel %vm822, %v731, 0
        %v827 = vsel %vm822, %v743, 0
        %v830 = vsel %vm822, %v755, 0
        %v833 = vsel %vm822, %v767, 0
        %v836 = vsel %vm822, %v779, 0
        %v839 = vsel %vm822, %v791, 0
        %v842 = vsel %vm822, %v803, 0
        %v845 = vsel %vm822, %v815, 0
        %vm847 = vcmask 1045504
        %v849 = vsel %vm847, %v821, 0
        %851 = vmatprep.subr.bf16.mxu0 0
        %852 = vmatpush1.bf16.msra.mxu0 %v849
        %853 = vmatprep.subr.bf16.mxu0 0
        %854 = vmatpush1.bf16.msra.mxu0 0
        %855 = vmatprep.subr.bf16.mxu0 0
        %856 = vmatpush1.bf16.msra.mxu0 0
        %857 = vmatprep.subr.bf16.mxu0 0
        %858 = vmatpush1.bf16.msra.mxu0 0
        %859 = vmatprep.subr.bf16.mxu0 0
        %860 = vmatpush1.bf16.msra.mxu0 0
        %861 = vmatprep.subr.bf16.mxu0 0
        %862 = vmatpush1.bf16.msra.mxu0 0
        %863 = vmatprep.subr.bf16.mxu0 0
        %864 = vmatpush1.bf16.msra.mxu0 0
        %865 = vmatprep.subr.bf16.mxu0 0
        %866 = vmatpush1.bf16.msra.mxu0 0
        %867 = vmatprep.subr.bf16.mxu0 0
        %868 = vmatpush1.bf16.msra.mxu0 0
        %869 = vmatprep.subr.bf16.mxu0 0
        %870 = vmatpush1.bf16.msra.mxu0 0
        %871 = vmatprep.subr.bf16.mxu0 0
        %872 = vmatpush1.bf16.msra.mxu0 0
        %873 = vmatprep.subr.bf16.mxu0 0
        %874 = vmatpush1.bf16.msra.mxu0 0
        %875 = vmatprep.subr.bf16.mxu0 0
        %876 = vmatpush1.bf16.msra.mxu0 0
        %877 = vmatprep.subr.bf16.mxu0 0
        %878 = vmatpush1.bf16.msra.mxu0 0
        %879 = vmatprep.subr.bf16.mxu0 0
        %880 = vmatpush1.bf16.msra.mxu0 0
        %881 = vmatprep.subr.bf16.mxu0 0
        %882 = vmatpush1.bf16.msra.mxu0 0
        %883 = vmatprep.mubr.bf16.mxu0 0
        %884 = vmatmul.mubr.bf16.gmra.mrb[0].mxu0 %v824
        %v885 = vpop.f32.mrb[0].mxu0
        %v886 = vadd.f32 0.0, %v885
        %v887 = vpop.f32.mrb[0].mxu0
        %v888 = vpop.f32.mrb[0].mxu0
        %v889 = vadd.f32 0.0, %v888
        %v890 = vpop.f32.mrb[0].mxu0
        %891 = vmatprep.mubr.bf16.mxu0 0
        %892 = vmatmul.mubr.bf16.gmra.mrb[0].mxu0 %v827
        %v893 = vpop.f32.mrb[0].mxu0
        %v894 = vadd.f32 0.0, %v893
        %v895 = vpop.f32.mrb[0].mxu0
        %v896 = vpop.f32.mrb[0].mxu0
        %v897 = vadd.f32 0.0, %v896
        %v898 = vpop.f32.mrb[0].mxu0
        %899 = vmatprep.mubr.bf16.mxu0 0
        %900 = vmatmul.mubr.bf16.gmra.mrb[0].mxu0 %v830
        %v901 = vpop.f32.mrb[0].mxu0
        %v902 = vadd.f32 0.0, %v901
        %v903 = vpop.f32.mrb[0].mxu0
        %v904 = vpop.f32.mrb[0].mxu0
        %v905 = vadd.f32 0.0, %v904
        %v906 = vpop.f32.mrb[0].mxu0
        %907 = vmatprep.mubr.bf16.mxu0 0
        %908 = vmatmul.mubr.bf16.gmra.mrb[0].mxu0 %v833
        %v909 = vpop.f32.mrb[0].mxu0
        %v910 = vadd.f32 0.0, %v909
        %v911 = vpop.f32.mrb[0].mxu0
        %v912 = vpop.f32.mrb[0].mxu0
        %v913 = vadd.f32 0.0, %v912
        %v914 = vpop.f32.mrb[0].mxu0
        %915 = vmatprep.mubr.bf16.mxu0 0
        %916 = vmatmul.mubr.bf16.gmra.mrb[0].mxu0 %v836
        %v917 = vpop.f32.mrb[0].mxu0
        %v918 = vadd.f32 0.0, %v917
        %v919 = vpop.f32.mrb[0].mxu0
        %v920 = vpop.f32.mrb[0].mxu0
        %v921 = vadd.f32 0.0, %v920
        %v922 = vpop.f32.mrb[0].mxu0
        %923 = vmatprep.mubr.bf16.mxu0 0
        %924 = vmatmul.mubr.bf16.gmra.mrb[0].mxu0 %v839
        %v925 = vpop.f32.mrb[0].mxu0
        %v926 = vadd.f32 0.0, %v925
        %v927 = vpop.f32.mrb[0].mxu0
        %v928 = vpop.f32.mrb[0].mxu0
        %v929 = vadd.f32 0.0, %v928
        %v930 = vpop.f32.mrb[0].mxu0
        %931 = vmatprep.mubr.bf16.mxu0 0
        %932 = vmatmul.mubr.bf16.gmra.mrb[0].mxu0 %v842
        %v933 = vpop.f32.mrb[0].mxu0
        %v934 = vadd.f32 0.0, %v933
        %v935 = vpop.f32.mrb[0].mxu0
        %v936 = vpop.f32.mrb[0].mxu0
        %v937 = vadd.f32 0.0, %v936
        %v938 = vpop.f32.mrb[0].mxu0
        %939 = vmatprep.mubr.bf16.mxu0 0
        %940 = vmatmul.mubr.bf16.gmra.mrb[0].mxu0 %v845
        %v941 = vpop.f32.mrb[0].mxu0
        %v942 = vadd.f32 0.0, %v941
        %v943 = vpop.f32.mrb[0].mxu0
        %v944 = vpop.f32.mrb[0].mxu0
        %v945 = vadd.f32 0.0, %v944
        %v946 = vpop.f32.mrb[0].mxu0
        %947 = vdwg.mxu0
        %v949 = vunpack.c.l.b16 %v714
        %v950 = vpack.c.b16 %v818, %v949
        %v951 = vsel %vm822, %v694, 0
        %v953 = vsel %vm822, %v695, 0
        %v955 = vsel %vm822, %v696, 0
        %v957 = vsel %vm822, %v697, 0
        %v959 = vsel %vm822, %v698, 0
        %v961 = vsel %vm822, %v699, 0
        %v963 = vsel %vm822, %v700, 0
        %v965 = vsel %vm822, %v701, 0
        %v968 = vsel %vm847, %v950, 0
        %970 = vmatprep.subr.bf16.mxu0 0
        %971 = vmatpush1.bf16.msra.mxu0 %v968
        %972 = vmatprep.subr.bf16.mxu0 0
        %973 = vmatpush1.bf16.msra.mxu0 0
        %974 = vmatprep.subr.bf16.mxu0 0
        %975 = vmatpush1.bf16.msra.mxu0 0
        %976 = vmatprep.subr.bf16.mxu0 0
        %977 = vmatpush1.bf16.msra.mxu0 0
        %978 = vmatprep.subr.bf16.mxu0 0
        %979 = vmatpush1.bf16.msra.mxu0 0
        %980 = vmatprep.subr.bf16.mxu0 0
        %981 = vmatpush1.bf16.msra.mxu0 0
        %982 = vmatprep.subr.bf16.mxu0 0
        %983 = vmatpush1.bf16.msra.mxu0 0
        %984 = vmatprep.subr.bf16.mxu0 0
        %985 = vmatpush1.bf16.msra.mxu0 0
        %986 = vmatprep.subr.bf16.mxu0 0
        %987 = vmatpush1.bf16.msra.mxu0 0
        %988 = vmatprep.subr.bf16.mxu0 0
        %989 = vmatpush1.bf16.msra.mxu0 0
        %990 = vmatprep.subr.bf16.mxu0 0
        %991 = vmatpush1.bf16.msra.mxu0 0
        %992 = vmatprep.subr.bf16.mxu0 0
        %993 = vmatpush1.bf16.msra.mxu0 0
        %994 = vmatprep.subr.bf16.mxu0 0
        %995 = vmatpush1.bf16.msra.mxu0 0
        %996 = vmatprep.subr.bf16.mxu0 0
        %997 = vmatpush1.bf16.msra.mxu0 0
        %998 = vmatprep.subr.bf16.mxu0 0
        %999 = vmatpush1.bf16.msra.mxu0 0
        %1000 = vmatprep.subr.bf16.mxu0 0
        %1001 = vmatpush1.bf16.msra.mxu0 0
        %1002 = vmatprep.mubr.bf16.mxu0 0
        %1003 = vmatmul.mubr.bf16.gmra.mrb[0].mxu0 %v951
        %v1004 = vpop.f32.mrb[0].mxu0
        %v1005 = vadd.f32 %v886, %v1004
        %v1006 = vpop.f32.mrb[0].mxu0
        %v1007 = vpop.f32.mrb[0].mxu0
        %v1008 = vadd.f32 %v889, %v1007
        %v1009 = vpop.f32.mrb[0].mxu0
        %1010 = vmatprep.mubr.bf16.mxu0 0
        %1011 = vmatmul.mubr.bf16.gmra.mrb[0].mxu0 %v953
        %v1012 = vpop.f32.mrb[0].mxu0
        %v1013 = vadd.f32 %v894, %v1012
        %v1014 = vpop.f32.mrb[0].mxu0
        %v1015 = vpop.f32.mrb[0].mxu0
        %v1016 = vadd.f32 %v897, %v1015
        %v1017 = vpop.f32.mrb[0].mxu0
        %1018 = vmatprep.mubr.bf16.mxu0 0
        %1019 = vmatmul.mubr.bf16.gmra.mrb[0].mxu0 %v955
        %v1020 = vpop.f32.mrb[0].mxu0
        %v1021 = vadd.f32 %v902, %v1020
        %v1022 = vpop.f32.mrb[0].mxu0
        %v1023 = vpop.f32.mrb[0].mxu0
        %v1024 = vadd.f32 %v905, %v1023
        %v1025 = vpop.f32.mrb[0].mxu0
        %1026 = vmatprep.mubr.bf16.mxu0 0
        %1027 = vmatmul.mubr.bf16.gmra.mrb[0].mxu0 %v957
        %v1028 = vpop.f32.mrb[0].mxu0
        %v1029 = vadd.f32 %v910, %v1028
        %v1030 = vpop.f32.mrb[0].mxu0
        %v1031 = vpop.f32.mrb[0].mxu0
        %v1032 = vadd.f32 %v913, %v1031
        %v1033 = vpop.f32.mrb[0].mxu0
        %1034 = vmatprep.mubr.bf16.mxu0 0
        %1035 = vmatmul.mubr.bf16.gmra.mrb[0].mxu0 %v959
        %v1036 = vpop.f32.mrb[0].mxu0
        %v1037 = vadd.f32 %v918, %v1036
        %v1038 = vpop.f32.mrb[0].mxu0
        %v1039 = vpop.f32.mrb[0].mxu0
        %v1040 = vadd.f32 %v921, %v1039
        %v1041 = vpop.f32.mrb[0].mxu0
        %1042 = vmatprep.mubr.bf16.mxu0 0
        %1043 = vmatmul.mubr.bf16.gmra.mrb[0].mxu0 %v961
        %v1044 = vpop.f32.mrb[0].mxu0
        %v1045 = vadd.f32 %v926, %v1044
        %v1046 = vpop.f32.mrb[0].mxu0
        %v1047 = vpop.f32.mrb[0].mxu0
        %v1048 = vadd.f32 %v929, %v1047
        %v1049 = vpop.f32.mrb[0].mxu0
        %1050 = vmatprep.mubr.bf16.mxu0 0
        %1051 = vmatmul.mubr.bf16.gmra.mrb[0].mxu0 %v963
        %v1052 = vpop.f32.mrb[0].mxu0
        %v1053 = vadd.f32 %v934, %v1052
        %v1054 = vpop.f32.mrb[0].mxu0
        %v1055 = vpop.f32.mrb[0].mxu0
        %v1056 = vadd.f32 %v937, %v1055
        %v1057 = vpop.f32.mrb[0].mxu0
        %1058 = vmatprep.mubr.bf16.mxu0 0
        %1059 = vmatmul.mubr.bf16.gmra.mrb[0].mxu0 %v965
        %v1060 = vpop.f32.mrb[0].mxu0
        %v1061 = vadd.f32 %v942, %v1060
        %v1062 = vpop.f32.mrb[0].mxu0
        %v1063 = vpop.f32.mrb[0].mxu0
        %v1064 = vadd.f32 %v945, %v1063
        %v1065 = vpop.f32.mrb[0].mxu0
        %1066 = vdwg.mxu0
        %vm1083 = vcmask 1046528
        %v1084 = vrot.slane %v694, 1
        %v1085 = vrot.slane %v704, 1
        %v1086 = vsel %vm1083, %v1084, %v1085
        %v1087 = vrot.slane %v695, 1
        %v1088 = vrot.slane %v705, 1
        %v1089 = vsel %vm1083, %v1087, %v1088
        %v1090 = vrot.slane %v696, 1
        %v1091 = vrot.slane %v706, 1
        %v1092 = vsel %vm1083, %v1090, %v1091
        %v1093 = vrot.slane %v697, 1
        %v1094 = vrot.slane %v707, 1
        %v1095 = vsel %vm1083, %v1093, %v1094
        %v1096 = vrot.slane %v698, 1
        %v1097 = vrot.slane %v708, 1
        %v1098 = vsel %vm1083, %v1096, %v1097
        %v1099 = vrot.slane %v699, 1
        %v1100 = vrot.slane %v709, 1
        %v1101 = vsel %vm1083, %v1099, %v1100
        %v1102 = vrot.slane %v700, 1
        %v1103 = vrot.slane %v710, 1
        %v1104 = vsel %vm1083, %v1102, %v1103
        %v1105 = vrot.slane %v701, 1
        %v1106 = vrot.slane %v711, 1
        %v1107 = vsel %vm1083, %v1105, %v1106
        %v1110 = vunpack.c.l.b16 %v717
        %v1111 = vunpack.c.l.b16 %v718
        %v1112 = vpack.c.b16 %v1111, %v1110
        %v1114 = vsel %vm822, %v1086, 0
        %v1117 = vsel %vm822, %v1089, 0
        %v1120 = vsel %vm822, %v1092, 0
        %v1123 = vsel %vm822, %v1095, 0
        %v1126 = vsel %vm822, %v1098, 0
        %v1129 = vsel %vm822, %v1101, 0
        %v1132 = vsel %vm822, %v1104, 0
        %v1135 = vsel %vm822, %v1107, 0
        %v1138 = vsel %vm847, %v1112, 0
        %1140 = vmatprep.subr.bf16.mxu0 0
        %1141 = vmatpush1.bf16.msra.mxu0 %v1138
        %1142 = vmatprep.subr.bf16.mxu0 0
        %1143 = vmatpush1.bf16.msra.mxu0 0
        %1144 = vmatprep.subr.bf16.mxu0 0
        %1145 = vmatpush1.bf16.msra.mxu0 0
        %1146 = vmatprep.subr.bf16.mxu0 0
        %1147 = vmatpush1.bf16.msra.mxu0 0
        %1148 = vmatprep.subr.bf16.mxu0 0
        %1149 = vmatpush1.bf16.msra.mxu0 0
        %1150 = vmatprep.subr.bf16.mxu0 0
        %1151 = vmatpush1.bf16.msra.mxu0 0
        %1152 = vmatprep.subr.bf16.mxu0 0
        %1153 = vmatpush1.bf16.msra.mxu0 0
        %1154 = vmatprep.subr.bf16.mxu0 0
        %1155 = vmatpush1.bf16.msra.mxu0 0
        %1156 = vmatprep.subr.bf16.mxu0 0
        %1157 = vmatpush1.bf16.msra.mxu0 0
        %1158 = vmatprep.subr.bf16.mxu0 0
        %1159 = vmatpush1.bf16.msra.mxu0 0
        %1160 = vmatprep.subr.bf16.mxu0 0
        %1161 = vmatpush1.bf16.msra.mxu0 0
        %1162 = vmatprep.subr.bf16.mxu0 0
        %1163 = vmatpush1.bf16.msra.mxu0 0
        %1164 = vmatprep.subr.bf16.mxu0 0
        %1165 = vmatpush1.bf16.msra.mxu0 0
        %1166 = vmatprep.subr.bf16.mxu0 0
        %1167 = vmatpush1.bf16.msra.mxu0 0
        %1168 = vmatprep.subr.bf16.mxu0 0
        %1169 = vmatpush1.bf16.msra.mxu0 0
        %1170 = vmatprep.subr.bf16.mxu0 0
        %1171 = vmatpush1.bf16.msra.mxu0 0
        %1172 = vmatprep.mubr.bf16.mxu0 0
        %1173 = vmatmul.mubr.bf16.gmra.mrb[0].mxu0 %v1114
        %v1174 = vpop.f32.mrb[0].mxu0
        %v1175 = vadd.f32 0.0, %v1174
        %v1176 = vpop.f32.mrb[0].mxu0
        %v1177 = vpop.f32.mrb[0].mxu0
        %v1178 = vadd.f32 0.0, %v1177
        %v1179 = vpop.f32.mrb[0].mxu0
        %1180 = vmatprep.mubr.bf16.mxu0 0
        %1181 = vmatmul.mubr.bf16.gmra.mrb[0].mxu0 %v1117
        %v1182 = vpop.f32.mrb[0].mxu0
        %v1183 = vadd.f32 0.0, %v1182
        %v1184 = vpop.f32.mrb[0].mxu0
        %v1185 = vpop.f32.mrb[0].mxu0
        %v1186 = vadd.f32 0.0, %v1185
        %v1187 = vpop.f32.mrb[0].mxu0
        %1188 = vmatprep.mubr.bf16.mxu0 0
        %1189 = vmatmul.mubr.bf16.gmra.mrb[0].mxu0 %v1120
        %v1190 = vpop.f32.mrb[0].mxu0
        %v1191 = vadd.f32 0.0, %v1190
        %v1192 = vpop.f32.mrb[0].mxu0
        %v1193 = vpop.f32.mrb[0].mxu0
        %v1194 = vadd.f32 0.0, %v1193
        %v1195 = vpop.f32.mrb[0].mxu0
        %1196 = vmatprep.mubr.bf16.mxu0 0
        %1197 = vmatmul.mubr.bf16.gmra.mrb[0].mxu0 %v1123
        %v1198 = vpop.f32.mrb[0].mxu0
        %v1199 = vadd.f32 0.0, %v1198
        %v1200 = vpop.f32.mrb[0].mxu0
        %v1201 = vpop.f32.mrb[0].mxu0
        %v1202 = vadd.f32 0.0, %v1201
        %v1203 = vpop.f32.mrb[0].mxu0
        %1204 = vmatprep.mubr.bf16.mxu0 0
        %1205 = vmatmul.mubr.bf16.gmra.mrb[0].mxu0 %v1126
        %v1206 = vpop.f32.mrb[0].mxu0
        %v1207 = vadd.f32 0.0, %v1206
        %v1208 = vpop.f32.mrb[0].mxu0
        %v1209 = vpop.f32.mrb[0].mxu0
        %v1210 = vadd.f32 0.0, %v1209
        %v1211 = vpop.f32.mrb[0].mxu0
        %1212 = vmatprep.mubr.bf16.mxu0 0
        %1213 = vmatmul.mubr.bf16.gmra.mrb[0].mxu0 %v1129
        %v1214 = vpop.f32.mrb[0].mxu0
        %v1215 = vadd.f32 0.0, %v1214
        %v1216 = vpop.f32.mrb[0].mxu0
        %v1217 = vpop.f32.mrb[0].mxu0
        %v1218 = vadd.f32 0.0, %v1217
        %v1219 = vpop.f32.mrb[0].mxu0
        %1220 = vmatprep.mubr.bf16.mxu0 0
        %1221 = vmatmul.mubr.bf16.gmra.mrb[0].mxu0 %v1132
        %v1222 = vpop.f32.mrb[0].mxu0
        %v1223 = vadd.f32 0.0, %v1222
        %v1224 = vpop.f32.mrb[0].mxu0
        %v1225 = vpop.f32.mrb[0].mxu0
        %v1226 = vadd.f32 0.0, %v1225
        %v1227 = vpop.f32.mrb[0].mxu0
        %1228 = vmatprep.mubr.bf16.mxu0 0
        %1229 = vmatmul.mubr.bf16.gmra.mrb[0].mxu0 %v1135
        %v1230 = vpop.f32.mrb[0].mxu0
        %v1231 = vadd.f32 0.0, %v1230
        %v1232 = vpop.f32.mrb[0].mxu0
        %v1233 = vpop.f32.mrb[0].mxu0
        %v1234 = vadd.f32 0.0, %v1233
        %v1235 = vpop.f32.mrb[0].mxu0
        %1236 = vdwg.mxu0
        %v1237 = vadd.f32 %v1005, %v1175
        %v1238 = vadd.f32 %v1008, %v1178
        %v1239 = vadd.f32 %v1013, %v1183
        %v1240 = vadd.f32 %v1016, %v1186
        %v1241 = vadd.f32 %v1021, %v1191
        %v1242 = vadd.f32 %v1024, %v1194
        %v1243 = vadd.f32 %v1029, %v1199
        %v1244 = vadd.f32 %v1032, %v1202
        %v1245 = vadd.f32 %v1037, %v1207
        %v1246 = vadd.f32 %v1040, %v1210
        %v1247 = vadd.f32 %v1045, %v1215
        %v1248 = vadd.f32 %v1048, %v1218
        %v1249 = vadd.f32 %v1053, %v1223
        %v1250 = vadd.f32 %v1056, %v1226
        %v1251 = vadd.f32 %v1061, %v1231
        %v1252 = vadd.f32 %v1064, %v1234
        %s1253 = scalar_lea.vmem [#allocation11], 20
        %v1254 = vld [vmem:[%s1253] sm:$0xf]
        %v1255 = vld [vmem:[%s1253 + $0x4] sm:$0xf]
        %v1256 = vld [vmem:[%s1253 + $0x8] sm:$0xf]
        %v1257 = vld [vmem:[%s1253 + $0xc] sm:$0xf]
        %v1258 = vld [vmem:[%s1253 + $0x10] sm:$0x3]
        %v1261 = vunpack.c.l.b16 %v1254
        %v1262 = vunpack.c.l.b16 %v1255
        %v1263 = vpack.c.b16 %v1262, %v1261
        %v1265 = vsel %vm822, %v702, 0
        %v1268 = vsel %vm847, %v1263, 0
        %1270 = vmatprep.subr.bf16.mxu0 0
        %1271 = vmatpush1.bf16.msra.mxu0 %v1268
        %1272 = vmatprep.subr.bf16.mxu0 0
        %1273 = vmatpush1.bf16.msra.mxu0 0
        %1274 = vmatprep.subr.bf16.mxu0 0
        %1275 = vmatpush1.bf16.msra.mxu0 0
        %1276 = vmatprep.subr.bf16.mxu0 0
        %1277 = vmatpush1.bf16.msra.mxu0 0
        %1278 = vmatprep.subr.bf16.mxu0 0
        %1279 = vmatpush1.bf16.msra.mxu0 0
        %1280 = vmatprep.subr.bf16.mxu0 0
        %1281 = vmatpush1.bf16.msra.mxu0 0
        %1282 = vmatprep.subr.bf16.mxu0 0
        %1283 = vmatpush1.bf16.msra.mxu0 0
        %1284 = vmatprep.subr.bf16.mxu0 0
        %1285 = vmatpush1.bf16.msra.mxu0 0
        %1286 = vmatprep.subr.bf16.mxu0 0
        %1287 = vmatpush1.bf16.msra.mxu0 0
        %1288 = vmatprep.subr.bf16.mxu0 0
        %1289 = vmatpush1.bf16.msra.mxu0 0
        %1290 = vmatprep.subr.bf16.mxu0 0
        %1291 = vmatpush1.bf16.msra.mxu0 0
        %1292 = vmatprep.subr.bf16.mxu0 0
        %1293 = vmatpush1.bf16.msra.mxu0 0
        %1294 = vmatprep.subr.bf16.mxu0 0
        %1295 = vmatpush1.bf16.msra.mxu0 0
        %1296 = vmatprep.subr.bf16.mxu0 0
        %1297 = vmatpush1.bf16.msra.mxu0 0
        %1298 = vmatprep.subr.bf16.mxu0 0
        %1299 = vmatpush1.bf16.msra.mxu0 0
        %1300 = vmatprep.subr.bf16.mxu0 0
        %1301 = vmatpush1.bf16.msra.mxu0 0
        %1302 = vmatprep.mubr.bf16.mxu0 0
        %1303 = vmatmul.mubr.bf16.gmra.mrb[0].mxu0 %v953
        %v1304 = vpop.f32.mrb[0].mxu0
        %v1305 = vadd.f32 0.0, %v1304
        %v1306 = vpop.f32.mrb[0].mxu0
        %v1307 = vpop.f32.mrb[0].mxu0
        %v1308 = vadd.f32 0.0, %v1307
        %v1309 = vpop.f32.mrb[0].mxu0
        %1310 = vmatprep.mubr.bf16.mxu0 0
        %1311 = vmatmul.mubr.bf16.gmra.mrb[0].mxu0 %v955
        %v1312 = vpop.f32.mrb[0].mxu0
        %v1313 = vadd.f32 0.0, %v1312
        %v1314 = vpop.f32.mrb[0].mxu0
        %v1315 = vpop.f32.mrb[0].mxu0
        %v1316 = vadd.f32 0.0, %v1315
        %v1317 = vpop.f32.mrb[0].mxu0
        %1318 = vmatprep.mubr.bf16.mxu0 0
        %1319 = vmatmul.mubr.bf16.gmra.mrb[0].mxu0 %v957
        %v1320 = vpop.f32.mrb[0].mxu0
        %v1321 = vadd.f32 0.0, %v1320
        %v1322 = vpop.f32.mrb[0].mxu0
        %v1323 = vpop.f32.mrb[0].mxu0
        %v1324 = vadd.f32 0.0, %v1323
        %v1325 = vpop.f32.mrb[0].mxu0
        %1326 = vmatprep.mubr.bf16.mxu0 0
        %1327 = vmatmul.mubr.bf16.gmra.mrb[0].mxu0 %v959
        %v1328 = vpop.f32.mrb[0].mxu0
        %v1329 = vadd.f32 0.0, %v1328
        %v1330 = vpop.f32.mrb[0].mxu0
        %v1331 = vpop.f32.mrb[0].mxu0
        %v1332 = vadd.f32 0.0, %v1331
        %v1333 = vpop.f32.mrb[0].mxu0
        %1334 = vmatprep.mubr.bf16.mxu0 0
        %1335 = vmatmul.mubr.bf16.gmra.mrb[0].mxu0 %v961
        %v1336 = vpop.f32.mrb[0].mxu0
        %v1337 = vadd.f32 0.0, %v1336
        %v1338 = vpop.f32.mrb[0].mxu0
        %v1339 = vpop.f32.mrb[0].mxu0
        %v1340 = vadd.f32 0.0, %v1339
        %v1341 = vpop.f32.mrb[0].mxu0
        %1342 = vmatprep.mubr.bf16.mxu0 0
        %1343 = vmatmul.mubr.bf16.gmra.mrb[0].mxu0 %v963
        %v1344 = vpop.f32.mrb[0].mxu0
        %v1345 = vadd.f32 0.0, %v1344
        %v1346 = vpop.f32.mrb[0].mxu0
        %v1347 = vpop.f32.mrb[0].mxu0
        %v1348 = vadd.f32 0.0, %v1347
        %v1349 = vpop.f32.mrb[0].mxu0
        %1350 = vmatprep.mubr.bf16.mxu0 0
        %1351 = vmatmul.mubr.bf16.gmra.mrb[0].mxu0 %v965
        %v1352 = vpop.f32.mrb[0].mxu0
        %v1353 = vadd.f32 0.0, %v1352
        %v1354 = vpop.f32.mrb[0].mxu0
        %v1355 = vpop.f32.mrb[0].mxu0
        %v1356 = vadd.f32 0.0, %v1355
        %v1357 = vpop.f32.mrb[0].mxu0
        %1358 = vmatprep.mubr.bf16.mxu0 0
        %1359 = vmatmul.mubr.bf16.gmra.mrb[0].mxu0 %v1265
        %v1360 = vpop.f32.mrb[0].mxu0
        %v1361 = vadd.f32 0.0, %v1360
        %v1362 = vpop.f32.mrb[0].mxu0
        %v1363 = vpop.f32.mrb[0].mxu0
        %v1364 = vadd.f32 0.0, %v1363
        %v1365 = vpop.f32.mrb[0].mxu0
        %1366 = vdwg.mxu0
        %v1367 = vadd.f32 %v1237, %v1305
        %v1368 = vadd.f32 %v1238, %v1308
        %v1369 = vadd.f32 %v1239, %v1313
        %v1370 = vadd.f32 %v1240, %v1316
        %v1371 = vadd.f32 %v1241, %v1321
        %v1372 = vadd.f32 %v1242, %v1324
        %v1373 = vadd.f32 %v1243, %v1329
        %v1374 = vadd.f32 %v1244, %v1332
        %v1375 = vadd.f32 %v1245, %v1337
        %v1376 = vadd.f32 %v1246, %v1340
        %v1377 = vadd.f32 %v1247, %v1345
        %v1378 = vadd.f32 %v1248, %v1348
        %v1379 = vadd.f32 %v1249, %v1353
        %v1380 = vadd.f32 %v1250, %v1356
        %v1381 = vadd.f32 %v1251, %v1361
        %v1382 = vadd.f32 %v1252, %v1364
        %v1383 = vshrl.u32 %v702, 16
        %v1385 = vshll.u32 %v702, 16
        %v1387 = vrot.slane %v1385, 1
        %v1388 = vor.u32 %v1383, %v1387
        %v1390 = vshll.u32 %v712, 16
        %v1392 = vrot.slane %v1390, 1
        %v1393 = vsel %vm719, %v1388, %v1392
        %v1395 = vunpack.c.l.b16 %v1256
        %v1396 = vpack.c.b16 %v1395, %v1262
        %v1397 = vrot.slane %v1396, 2
        %v1399 = vsel %vm822, %v1393, 0
        %v1402 = vsel %vm847, %v1397, 0
        %1404 = vmatprep.subr.bf16.mxu0 0
        %1405 = vmatpush1.bf16.msra.mxu0 %v1402
        %1406 = vmatprep.subr.bf16.mxu0 0
        %1407 = vmatpush1.bf16.msra.mxu0 0
        %1408 = vmatprep.subr.bf16.mxu0 0
        %1409 = vmatpush1.bf16.msra.mxu0 0
        %1410 = vmatprep.subr.bf16.mxu0 0
        %1411 = vmatpush1.bf16.msra.mxu0 0
        %1412 = vmatprep.subr.bf16.mxu0 0
        %1413 = vmatpush1.bf16.msra.mxu0 0
        %1414 = vmatprep.subr.bf16.mxu0 0
        %1415 = vmatpush1.bf16.msra.mxu0 0
        %1416 = vmatprep.subr.bf16.mxu0 0
        %1417 = vmatpush1.bf16.msra.mxu0 0
        %1418 = vmatprep.subr.bf16.mxu0 0
        %1419 = vmatpush1.bf16.msra.mxu0 0
        %1420 = vmatprep.subr.bf16.mxu0 0
        %1421 = vmatpush1.bf16.msra.mxu0 0
        %1422 = vmatprep.subr.bf16.mxu0 0
        %1423 = vmatpush1.bf16.msra.mxu0 0
        %1424 = vmatprep.subr.bf16.mxu0 0
        %1425 = vmatpush1.bf16.msra.mxu0 0
        %1426 = vmatprep.subr.bf16.mxu0 0
        %1427 = vmatpush1.bf16.msra.mxu0 0
        %1428 = vmatprep.subr.bf16.mxu0 0
        %1429 = vmatpush1.bf16.msra.mxu0 0
        %1430 = vmatprep.subr.bf16.mxu0 0
        %1431 = vmatpush1.bf16.msra.mxu0 0
        %1432 = vmatprep.subr.bf16.mxu0 0
        %1433 = vmatpush1.bf16.msra.mxu0 0
        %1434 = vmatprep.subr.bf16.mxu0 0
        %1435 = vmatpush1.bf16.msra.mxu0 0
        %1436 = vmatprep.mubr.bf16.mxu0 0
        %1437 = vmatmul.mubr.bf16.gmra.mrb[0].mxu0 %v827
        %v1438 = vpop.f32.mrb[0].mxu0
        %v1439 = vadd.f32 0.0, %v1438
        %v1440 = vpop.f32.mrb[0].mxu0
        %v1441 = vpop.f32.mrb[0].mxu0
        %v1442 = vadd.f32 0.0, %v1441
        %v1443 = vpop.f32.mrb[0].mxu0
        %1444 = vmatprep.mubr.bf16.mxu0 0
        %1445 = vmatmul.mubr.bf16.gmra.mrb[0].mxu0 %v830
        %v1446 = vpop.f32.mrb[0].mxu0
        %v1447 = vadd.f32 0.0, %v1446
        %v1448 = vpop.f32.mrb[0].mxu0
        %v1449 = vpop.f32.mrb[0].mxu0
        %v1450 = vadd.f32 0.0, %v1449
        %v1451 = vpop.f32.mrb[0].mxu0
        %1452 = vmatprep.mubr.bf16.mxu0 0
        %1453 = vmatmul.mubr.bf16.gmra.mrb[0].mxu0 %v833
        %v1454 = vpop.f32.mrb[0].mxu0
        %v1455 = vadd.f32 0.0, %v1454
        %v1456 = vpop.f32.mrb[0].mxu0
        %v1457 = vpop.f32.mrb[0].mxu0
        %v1458 = vadd.f32 0.0, %v1457
        %v1459 = vpop.f32.mrb[0].mxu0
        %1460 = vmatprep.mubr.bf16.mxu0 0
        %1461 = vmatmul.mubr.bf16.gmra.mrb[0].mxu0 %v836
        %v1462 = vpop.f32.mrb[0].mxu0
        %v1463 = vadd.f32 0.0, %v1462
        %v1464 = vpop.f32.mrb[0].mxu0
        %v1465 = vpop.f32.mrb[0].mxu0
        %v1466 = vadd.f32 0.0, %v1465
        %v1467 = vpop.f32.mrb[0].mxu0
        %1468 = vmatprep.mubr.bf16.mxu0 0
        %1469 = vmatmul.mubr.bf16.gmra.mrb[0].mxu0 %v839
        %v1470 = vpop.f32.mrb[0].mxu0
        %v1471 = vadd.f32 0.0, %v1470
        %v1472 = vpop.f32.mrb[0].mxu0
        %v1473 = vpop.f32.mrb[0].mxu0
        %v1474 = vadd.f32 0.0, %v1473
        %v1475 = vpop.f32.mrb[0].mxu0
        %1476 = vmatprep.mubr.bf16.mxu0 0
        %1477 = vmatmul.mubr.bf16.gmra.mrb[0].mxu0 %v842
        %v1478 = vpop.f32.mrb[0].mxu0
        %v1479 = vadd.f32 0.0, %v1478
        %v1480 = vpop.f32.mrb[0].mxu0
        %v1481 = vpop.f32.mrb[0].mxu0
        %v1482 = vadd.f32 0.0, %v1481
        %v1483 = vpop.f32.mrb[0].mxu0
        %1484 = vmatprep.mubr.bf16.mxu0 0
        %1485 = vmatmul.mubr.bf16.gmra.mrb[0].mxu0 %v845
        %v1486 = vpop.f32.mrb[0].mxu0
        %v1487 = vadd.f32 0.0, %v1486
        %v1488 = vpop.f32.mrb[0].mxu0
        %v1489 = vpop.f32.mrb[0].mxu0
        %v1490 = vadd.f32 0.0, %v1489
        %v1491 = vpop.f32.mrb[0].mxu0
        %1492 = vmatprep.mubr.bf16.mxu0 0
        %1493 = vmatmul.mubr.bf16.gmra.mrb[0].mxu0 %v1399
        %v1494 = vpop.f32.mrb[0].mxu0
        %v1495 = vadd.f32 0.0, %v1494
        %v1496 = vpop.f32.mrb[0].mxu0
        %v1497 = vpop.f32.mrb[0].mxu0
        %v1498 = vadd.f32 0.0, %v1497
        %v1499 = vpop.f32.mrb[0].mxu0
        %1500 = vdwg.mxu0
        %v1501 = vadd.f32 %v1367, %v1439
        %v1502 = vadd.f32 %v1368, %v1442
        %v1503 = vadd.f32 %v1369, %v1447
        %v1504 = vadd.f32 %v1370, %v1450
        %v1505 = vadd.f32 %v1371, %v1455
        %v1506 = vadd.f32 %v1372, %v1458
        %v1507 = vadd.f32 %v1373, %v1463
        %v1508 = vadd.f32 %v1374, %v1466
        %v1509 = vadd.f32 %v1375, %v1471
        %v1510 = vadd.f32 %v1376, %v1474
        %v1511 = vadd.f32 %v1377, %v1479
        %v1512 = vadd.f32 %v1378, %v1482
        %v1513 = vadd.f32 %v1379, %v1487
        %v1514 = vadd.f32 %v1380, %v1490
        %v1515 = vadd.f32 %v1381, %v1495
        %v1516 = vadd.f32 %v1382, %v1498
        %v1519 = vrot.slane %v702, 1
        %v1520 = vrot.slane %v712, 1
        %v1521 = vsel %vm1083, %v1519, %v1520
        %v1524 = vunpack.c.l.b16 %v1257
        %v1525 = vunpack.c.l.b16 %v1258
        %v1526 = vpack.c.b16 %v1525, %v1524
        %v1528 = vsel %vm822, %v1521, 0
        %v1531 = vsel %vm847, %v1526, 0
        %1533 = vmatprep.subr.bf16.mxu0 0
        %1534 = vmatpush1.bf16.msra.mxu0 %v1531
        %1535 = vmatprep.subr.bf16.mxu0 0
        %1536 = vmatpush1.bf16.msra.mxu0 0
        %1537 = vmatprep.subr.bf16.mxu0 0
        %1538 = vmatpush1.bf16.msra.mxu0 0
        %1539 = vmatprep.subr.bf16.mxu0 0
        %1540 = vmatpush1.bf16.msra.mxu0 0
        %1541 = vmatprep.subr.bf16.mxu0 0
        %1542 = vmatpush1.bf16.msra.mxu0 0
        %1543 = vmatprep.subr.bf16.mxu0 0
        %1544 = vmatpush1.bf16.msra.mxu0 0
        %1545 = vmatprep.subr.bf16.mxu0 0
        %1546 = vmatpush1.bf16.msra.mxu0 0
        %1547 = vmatprep.subr.bf16.mxu0 0
        %1548 = vmatpush1.bf16.msra.mxu0 0
        %1549 = vmatprep.subr.bf16.mxu0 0
        %1550 = vmatpush1.bf16.msra.mxu0 0
        %1551 = vmatprep.subr.bf16.mxu0 0
        %1552 = vmatpush1.bf16.msra.mxu0 0
        %1553 = vmatprep.subr.bf16.mxu0 0
        %1554 = vmatpush1.bf16.msra.mxu0 0
        %1555 = vmatprep.subr.bf16.mxu0 0
        %1556 = vmatpush1.bf16.msra.mxu0 0
        %1557 = vmatprep.subr.bf16.mxu0 0
        %1558 = vmatpush1.bf16.msra.mxu0 0
        %1559 = vmatprep.subr.bf16.mxu0 0
        %1560 = vmatpush1.bf16.msra.mxu0 0
        %1561 = vmatprep.subr.bf16.mxu0 0
        %1562 = vmatpush1.bf16.msra.mxu0 0
        %1563 = vmatprep.subr.bf16.mxu0 0
        %1564 = vmatpush1.bf16.msra.mxu0 0
        %1565 = vmatprep.mubr.bf16.mxu0 0
        %1566 = vmatmul.mubr.bf16.gmra.mrb[0].mxu0 %v1117
        %v1567 = vpop.f32.mrb[0].mxu0
        %v1568 = vadd.f32 0.0, %v1567
        %v1569 = vpop.f32.mrb[0].mxu0
        %v1570 = vpop.f32.mrb[0].mxu0
        %v1571 = vadd.f32 0.0, %v1570
        %v1572 = vpop.f32.mrb[0].mxu0
        %1573 = vmatprep.mubr.bf16.mxu0 0
        %1574 = vmatmul.mubr.bf16.gmra.mrb[0].mxu0 %v1120
        %v1575 = vpop.f32.mrb[0].mxu0
        %v1576 = vadd.f32 0.0, %v1575
        %v1577 = vpop.f32.mrb[0].mxu0
        %v1578 = vpop.f32.mrb[0].mxu0
        %v1579 = vadd.f32 0.0, %v1578
        %v1580 = vpop.f32.mrb[0].mxu0
        %1581 = vmatprep.mubr.bf16.mxu0 0
        %1582 = vmatmul.mubr.bf16.gmra.mrb[0].mxu0 %v1123
        %v1583 = vpop.f32.mrb[0].mxu0
        %v1584 = vadd.f32 0.0, %v1583
        %v1585 = vpop.f32.mrb[0].mxu0
        %v1586 = vpop.f32.mrb[0].mxu0
        %v1587 = vadd.f32 0.0, %v1586
        %v1588 = vpop.f32.mrb[0].mxu0
        %1589 = vmatprep.mubr.bf16.mxu0 0
        %1590 = vmatmul.mubr.bf16.gmra.mrb[0].mxu0 %v1126
        %v1591 = vpop.f32.mrb[0].mxu0
        %v1592 = vadd.f32 0.0, %v1591
        %v1593 = vpop.f32.mrb[0].mxu0
        %v1594 = vpop.f32.mrb[0].mxu0
        %v1595 = vadd.f32 0.0, %v1594
        %v1596 = vpop.f32.mrb[0].mxu0
        %1597 = vmatprep.mubr.bf16.mxu0 0
        %1598 = vmatmul.mubr.bf16.gmra.mrb[0].mxu0 %v1129
        %v1599 = vpop.f32.mrb[0].mxu0
        %v1600 = vadd.f32 0.0, %v1599
        %v1601 = vpop.f32.mrb[0].mxu0
        %v1602 = vpop.f32.mrb[0].mxu0
        %v1603 = vadd.f32 0.0, %v1602
        %v1604 = vpop.f32.mrb[0].mxu0
        %1605 = vmatprep.mubr.bf16.mxu0 0
        %1606 = vmatmul.mubr.bf16.gmra.mrb[0].mxu0 %v1132
        %v1607 = vpop.f32.mrb[0].mxu0
        %v1608 = vadd.f32 0.0, %v1607
        %v1609 = vpop.f32.mrb[0].mxu0
        %v1610 = vpop.f32.mrb[0].mxu0
        %v1611 = vadd.f32 0.0, %v1610
        %v1612 = vpop.f32.mrb[0].mxu0
        %1613 = vmatprep.mubr.bf16.mxu0 0
        %1614 = vmatmul.mubr.bf16.gmra.mrb[0].mxu0 %v1135
        %v1615 = vpop.f32.mrb[0].mxu0
        %v1616 = vadd.f32 0.0, %v1615
        %v1617 = vpop.f32.mrb[0].mxu0
        %v1618 = vpop.f32.mrb[0].mxu0
        %v1619 = vadd.f32 0.0, %v1618
        %v1620 = vpop.f32.mrb[0].mxu0
        %1621 = vmatprep.mubr.bf16.mxu0 0
        %1622 = vmatmul.mubr.bf16.gmra.mrb[0].mxu0 %v1528
        %v1623 = vpop.f32.mrb[0].mxu0
        %v1624 = vadd.f32 0.0, %v1623
        %v1625 = vpop.f32.mrb[0].mxu0
        %v1626 = vpop.f32.mrb[0].mxu0
        %v1627 = vadd.f32 0.0, %v1626
        %v1628 = vpop.f32.mrb[0].mxu0
        %1629 = vdwg.mxu0
        %v1630 = vadd.f32 %v1501, %v1568
        %v1631 = vadd.f32 %v1502, %v1571
        %v1632 = vadd.f32 %v1503, %v1576
        %v1633 = vadd.f32 %v1504, %v1579
        %v1634 = vadd.f32 %v1505, %v1584
        %v1635 = vadd.f32 %v1506, %v1587
        %v1636 = vadd.f32 %v1507, %v1592
        %v1637 = vadd.f32 %v1508, %v1595
        %v1638 = vadd.f32 %v1509, %v1600
        %v1639 = vadd.f32 %v1510, %v1603
        %v1640 = vadd.f32 %v1511, %v1608
        %v1641 = vadd.f32 %v1512, %v1611
        %v1642 = vadd.f32 %v1513, %v1616
        %v1643 = vadd.f32 %v1514, %v1619
        %v1644 = vadd.f32 %v1515, %v1624
        %v1645 = vadd.f32 %v1516, %v1627
        %s1646 = scalar_lea.vmem [#allocation11], 40
        %v1647 = vld [vmem:[%s1646] sm:$0xf]
        %v1648 = vld [vmem:[%s1646 + $0x4] sm:$0xf]
        %v1649 = vld [vmem:[%s1646 + $0x8] sm:$0xf]
        %v1650 = vld [vmem:[%s1646 + $0xc] sm:$0xf]
        %v1651 = vld [vmem:[%s1646 + $0x10] sm:$0x3]
        %v1654 = vunpack.c.l.b16 %v1647
        %v1655 = vunpack.c.l.b16 %v1648
        %v1656 = vpack.c.b16 %v1655, %v1654
        %v1658 = vsel %vm822, %v703, 0
        %v1661 = vsel %vm847, %v1656, 0
        %1663 = vmatprep.subr.bf16.mxu0 0
        %1664 = vmatpush1.bf16.msra.mxu0 %v1661
        %1665 = vmatprep.subr.bf16.mxu0 0
        %1666 = vmatpush1.bf16.msra.mxu0 0
        %1667 = vmatprep.subr.bf16.mxu0 0
        %1668 = vmatpush1.bf16.msra.mxu0 0
        %1669 = vmatprep.subr.bf16.mxu0 0
        %1670 = vmatpush1.bf16.msra.mxu0 0
        %1671 = vmatprep.subr.bf16.mxu0 0
        %1672 = vmatpush1.bf16.msra.mxu0 0
        %1673 = vmatprep.subr.bf16.mxu0 0
        %1674 = vmatpush1.bf16.msra.mxu0 0
        %1675 = vmatprep.subr.bf16.mxu0 0
        %1676 = vmatpush1.bf16.msra.mxu0 0
        %1677 = vmatprep.subr.bf16.mxu0 0
        %1678 = vmatpush1.bf16.msra.mxu0 0
        %1679 = vmatprep.subr.bf16.mxu0 0
        %1680 = vmatpush1.bf16.msra.mxu0 0
        %1681 = vmatprep.subr.bf16.mxu0 0
        %1682 = vmatpush1.bf16.msra.mxu0 0
        %1683 = vmatprep.subr.bf16.mxu0 0
        %1684 = vmatpush1.bf16.msra.mxu0 0
        %1685 = vmatprep.subr.bf16.mxu0 0
        %1686 = vmatpush1.bf16.msra.mxu0 0
        %1687 = vmatprep.subr.bf16.mxu0 0
        %1688 = vmatpush1.bf16.msra.mxu0 0
        %1689 = vmatprep.subr.bf16.mxu0 0
        %1690 = vmatpush1.bf16.msra.mxu0 0
        %1691 = vmatprep.subr.bf16.mxu0 0
        %1692 = vmatpush1.bf16.msra.mxu0 0
        %1693 = vmatprep.subr.bf16.mxu0 0
        %1694 = vmatpush1.bf16.msra.mxu0 0
        %1695 = vmatprep.mubr.bf16.mxu0 0
        %1696 = vmatmul.mubr.bf16.gmra.mrb[0].mxu0 %v955
        %v1697 = vpop.f32.mrb[0].mxu0
        %v1698 = vadd.f32 0.0, %v1697
        %v1699 = vpop.f32.mrb[0].mxu0
        %v1700 = vpop.f32.mrb[0].mxu0
        %v1701 = vadd.f32 0.0, %v1700
        %v1702 = vpop.f32.mrb[0].mxu0
        %1703 = vmatprep.mubr.bf16.mxu0 0
        %1704 = vmatmul.mubr.bf16.gmra.mrb[0].mxu0 %v957
        %v1705 = vpop.f32.mrb[0].mxu0
        %v1706 = vadd.f32 0.0, %v1705
        %v1707 = vpop.f32.mrb[0].mxu0
        %v1708 = vpop.f32.mrb[0].mxu0
        %v1709 = vadd.f32 0.0, %v1708
        %v1710 = vpop.f32.mrb[0].mxu0
        %1711 = vmatprep.mubr.bf16.mxu0 0
        %1712 = vmatmul.mubr.bf16.gmra.mrb[0].mxu0 %v959
        %v1713 = vpop.f32.mrb[0].mxu0
        %v1714 = vadd.f32 0.0, %v1713
        %v1715 = vpop.f32.mrb[0].mxu0
        %v1716 = vpop.f32.mrb[0].mxu0
        %v1717 = vadd.f32 0.0, %v1716
        %v1718 = vpop.f32.mrb[0].mxu0
        %1719 = vmatprep.mubr.bf16.mxu0 0
        %1720 = vmatmul.mubr.bf16.gmra.mrb[0].mxu0 %v961
        %v1721 = vpop.f32.mrb[0].mxu0
        %v1722 = vadd.f32 0.0, %v1721
        %v1723 = vpop.f32.mrb[0].mxu0
        %v1724 = vpop.f32.mrb[0].mxu0
        %v1725 = vadd.f32 0.0, %v1724
        %v1726 = vpop.f32.mrb[0].mxu0
        %1727 = vmatprep.mubr.bf16.mxu0 0
        %1728 = vmatmul.mubr.bf16.gmra.mrb[0].mxu0 %v963
        %v1729 = vpop.f32.mrb[0].mxu0
        %v1730 = vadd.f32 0.0, %v1729
        %v1731 = vpop.f32.mrb[0].mxu0
        %v1732 = vpop.f32.mrb[0].mxu0
        %v1733 = vadd.f32 0.0, %v1732
        %v1734 = vpop.f32.mrb[0].mxu0
        %1735 = vmatprep.mubr.bf16.mxu0 0
        %1736 = vmatmul.mubr.bf16.gmra.mrb[0].mxu0 %v965
        %v1737 = vpop.f32.mrb[0].mxu0
        %v1738 = vadd.f32 0.0, %v1737
        %v1739 = vpop.f32.mrb[0].mxu0
        %v1740 = vpop.f32.mrb[0].mxu0
        %v1741 = vadd.f32 0.0, %v1740
        %v1742 = vpop.f32.mrb[0].mxu0
        %1743 = vmatprep.mubr.bf16.mxu0 0
        %1744 = vmatmul.mubr.bf16.gmra.mrb[0].mxu0 %v1265
        %v1745 = vpop.f32.mrb[0].mxu0
        %v1746 = vadd.f32 0.0, %v1745
        %v1747 = vpop.f32.mrb[0].mxu0
        %v1748 = vpop.f32.mrb[0].mxu0
        %v1749 = vadd.f32 0.0, %v1748
        %v1750 = vpop.f32.mrb[0].mxu0
        %1751 = vmatprep.mubr.bf16.mxu0 0
        %1752 = vmatmul.mubr.bf16.gmra.mrb[0].mxu0 %v1658
        %v1753 = vpop.f32.mrb[0].mxu0
        %v1754 = vadd.f32 0.0, %v1753
        %v1755 = vpop.f32.mrb[0].mxu0
        %v1756 = vpop.f32.mrb[0].mxu0
        %v1757 = vadd.f32 0.0, %v1756
        %v1758 = vpop.f32.mrb[0].mxu0
        %1759 = vdwg.mxu0
        %v1760 = vadd.f32 %v1630, %v1698
        %v1761 = vadd.f32 %v1631, %v1701
        %v1762 = vadd.f32 %v1632, %v1706
        %v1763 = vadd.f32 %v1633, %v1709
        %v1764 = vadd.f32 %v1634, %v1714
        %v1765 = vadd.f32 %v1635, %v1717
        %v1766 = vadd.f32 %v1636, %v1722
        %v1767 = vadd.f32 %v1637, %v1725
        %v1768 = vadd.f32 %v1638, %v1730
        %v1769 = vadd.f32 %v1639, %v1733
        %v1770 = vadd.f32 %v1640, %v1738
        %v1771 = vadd.f32 %v1641, %v1741
        %v1772 = vadd.f32 %v1642, %v1746
        %v1773 = vadd.f32 %v1643, %v1749
        %v1774 = vadd.f32 %v1644, %v1754
        %v1775 = vadd.f32 %v1645, %v1757
        %v1776 = vshrl.u32 %v703, 16
        %v1778 = vshll.u32 %v703, 16
        %v1780 = vrot.slane %v1778, 1
        %v1781 = vor.u32 %v1776, %v1780
        %v1783 = vshll.u32 %v713, 16
        %v1785 = vrot.slane %v1783, 1
        %v1786 = vsel %vm719, %v1781, %v1785
        %v1788 = vunpack.c.l.b16 %v1649
        %v1789 = vpack.c.b16 %v1788, %v1655
        %v1790 = vrot.slane %v1789, 2
        %v1792 = vsel %vm822, %v1786, 0
        %v1795 = vsel %vm847, %v1790, 0
        %1797 = vmatprep.subr.bf16.mxu0 0
        %1798 = vmatpush1.bf16.msra.mxu0 %v1795
        %1799 = vmatprep.subr.bf16.mxu0 0
        %1800 = vmatpush1.bf16.msra.mxu0 0
        %1801 = vmatprep.subr.bf16.mxu0 0
        %1802 = vmatpush1.bf16.msra.mxu0 0
        %1803 = vmatprep.subr.bf16.mxu0 0
        %1804 = vmatpush1.bf16.msra.mxu0 0
        %1805 = vmatprep.subr.bf16.mxu0 0
        %1806 = vmatpush1.bf16.msra.mxu0 0
        %1807 = vmatprep.subr.bf16.mxu0 0
        %1808 = vmatpush1.bf16.msra.mxu0 0
        %1809 = vmatprep.subr.bf16.mxu0 0
        %1810 = vmatpush1.bf16.msra.mxu0 0
        %1811 = vmatprep.subr.bf16.mxu0 0
        %1812 = vmatpush1.bf16.msra.mxu0 0
        %1813 = vmatprep.subr.bf16.mxu0 0
        %1814 = vmatpush1.bf16.msra.mxu0 0
        %1815 = vmatprep.subr.bf16.mxu0 0
        %1816 = vmatpush1.bf16.msra.mxu0 0
        %1817 = vmatprep.subr.bf16.mxu0 0
        %1818 = vmatpush1.bf16.msra.mxu0 0
        %1819 = vmatprep.subr.bf16.mxu0 0
        %1820 = vmatpush1.bf16.msra.mxu0 0
        %1821 = vmatprep.subr.bf16.mxu0 0
        %1822 = vmatpush1.bf16.msra.mxu0 0
        %1823 = vmatprep.subr.bf16.mxu0 0
        %1824 = vmatpush1.bf16.msra.mxu0 0
        %1825 = vmatprep.subr.bf16.mxu0 0
        %1826 = vmatpush1.bf16.msra.mxu0 0
        %1827 = vmatprep.subr.bf16.mxu0 0
        %1828 = vmatpush1.bf16.msra.mxu0 0
        %1829 = vmatprep.mubr.bf16.mxu0 0
        %1830 = vmatmul.mubr.bf16.gmra.mrb[0].mxu0 %v830
        %v1831 = vpop.f32.mrb[0].mxu0
        %v1832 = vadd.f32 0.0, %v1831
        %v1833 = vpop.f32.mrb[0].mxu0
        %v1834 = vpop.f32.mrb[0].mxu0
        %v1835 = vadd.f32 0.0, %v1834
        %v1836 = vpop.f32.mrb[0].mxu0
        %1837 = vmatprep.mubr.bf16.mxu0 0
        %1838 = vmatmul.mubr.bf16.gmra.mrb[0].mxu0 %v833
        %v1839 = vpop.f32.mrb[0].mxu0
        %v1840 = vadd.f32 0.0, %v1839
        %v1841 = vpop.f32.mrb[0].mxu0
        %v1842 = vpop.f32.mrb[0].mxu0
        %v1843 = vadd.f32 0.0, %v1842
        %v1844 = vpop.f32.mrb[0].mxu0
        %1845 = vmatprep.mubr.bf16.mxu0 0
        %1846 = vmatmul.mubr.bf16.gmra.mrb[0].mxu0 %v836
        %v1847 = vpop.f32.mrb[0].mxu0
        %v1848 = vadd.f32 0.0, %v1847
        %v1849 = vpop.f32.mrb[0].mxu0
        %v1850 = vpop.f32.mrb[0].mxu0
        %v1851 = vadd.f32 0.0, %v1850
        %v1852 = vpop.f32.mrb[0].mxu0
        %1853 = vmatprep.mubr.bf16.mxu0 0
        %1854 = vmatmul.mubr.bf16.gmra.mrb[0].mxu0 %v839
        %v1855 = vpop.f32.mrb[0].mxu0
        %v1856 = vadd.f32 0.0, %v1855
        %v1857 = vpop.f32.mrb[0].mxu0
        %v1858 = vpop.f32.mrb[0].mxu0
        %v1859 = vadd.f32 0.0, %v1858
        %v1860 = vpop.f32.mrb[0].mxu0
        %1861 = vmatprep.mubr.bf16.mxu0 0
        %1862 = vmatmul.mubr.bf16.gmra.mrb[0].mxu0 %v842
        %v1863 = vpop.f32.mrb[0].mxu0
        %v1864 = vadd.f32 0.0, %v1863
        %v1865 = vpop.f32.mrb[0].mxu0
        %v1866 = vpop.f32.mrb[0].mxu0
        %v1867 = vadd.f32 0.0, %v1866
        %v1868 = vpop.f32.mrb[0].mxu0
        %1869 = vmatprep.mubr.bf16.mxu0 0
        %1870 = vmatmul.mubr.bf16.gmra.mrb[0].mxu0 %v845
        %v1871 = vpop.f32.mrb[0].mxu0
        %v1872 = vadd.f32 0.0, %v1871
        %v1873 = vpop.f32.mrb[0].mxu0
        %v1874 = vpop.f32.mrb[0].mxu0
        %v1875 = vadd.f32 0.0, %v1874
        %v1876 = vpop.f32.mrb[0].mxu0
        %1877 = vmatprep.mubr.bf16.mxu0 0
        %1878 = vmatmul.mubr.bf16.gmra.mrb[0].mxu0 %v1399
        %v1879 = vpop.f32.mrb[0].mxu0
        %v1880 = vadd.f32 0.0, %v1879
        %v1881 = vpop.f32.mrb[0].mxu0
        %v1882 = vpop.f32.mrb[0].mxu0
        %v1883 = vadd.f32 0.0, %v1882
        %v1884 = vpop.f32.mrb[0].mxu0
        %1885 = vmatprep.mubr.bf16.mxu0 0
        %1886 = vmatmul.mubr.bf16.gmra.mrb[0].mxu0 %v1792
        %v1887 = vpop.f32.mrb[0].mxu0
        %v1888 = vadd.f32 0.0, %v1887
        %v1889 = vpop.f32.mrb[0].mxu0
        %v1890 = vpop.f32.mrb[0].mxu0
        %v1891 = vadd.f32 0.0, %v1890
        %v1892 = vpop.f32.mrb[0].mxu0
        %1893 = vdwg.mxu0
        %v1894 = vadd.f32 %v1760, %v1832
        %v1895 = vadd.f32 %v1761, %v1835
        %v1896 = vadd.f32 %v1762, %v1840
        %v1897 = vadd.f32 %v1763, %v1843
        %v1898 = vadd.f32 %v1764, %v1848
        %v1899 = vadd.f32 %v1765, %v1851
        %v1900 = vadd.f32 %v1766, %v1856
        %v1901 = vadd.f32 %v1767, %v1859
        %v1902 = vadd.f32 %v1768, %v1864
        %v1903 = vadd.f32 %v1769, %v1867
        %v1904 = vadd.f32 %v1770, %v1872
        %v1905 = vadd.f32 %v1771, %v1875
        %v1906 = vadd.f32 %v1772, %v1880
        %v1907 = vadd.f32 %v1773, %v1883
        %v1908 = vadd.f32 %v1774, %v1888
        %v1909 = vadd.f32 %v1775, %v1891
        %v1912 = vrot.slane %v703, 1
        %v1913 = vrot.slane %v713, 1
        %v1914 = vsel %vm1083, %v1912, %v1913
        %v1917 = vunpack.c.l.b16 %v1650
        %v1918 = vunpack.c.l.b16 %v1651
        %v1919 = vpack.c.b16 %v1918, %v1917
        %v1921 = vsel %vm822, %v1914, 0
        %v1924 = vsel %vm847, %v1919, 0
        %1926 = vmatprep.subr.bf16.mxu0 0
        %1927 = vmatpush1.bf16.msra.mxu0 %v1924
        %1928 = vmatprep.subr.bf16.mxu0 0
        %1929 = vmatpush1.bf16.msra.mxu0 0
        %1930 = vmatprep.subr.bf16.mxu0 0
        %1931 = vmatpush1.bf16.msra.mxu0 0
        %1932 = vmatprep.subr.bf16.mxu0 0
        %1933 = vmatpush1.bf16.msra.mxu0 0
        %1934 = vmatprep.subr.bf16.mxu0 0
        %1935 = vmatpush1.bf16.msra.mxu0 0
        %1936 = vmatprep.subr.bf16.mxu0 0
        %1937 = vmatpush1.bf16.msra.mxu0 0
        %1938 = vmatprep.subr.bf16.mxu0 0
        %1939 = vmatpush1.bf16.msra.mxu0 0
        %1940 = vmatprep.subr.bf16.mxu0 0
        %1941 = vmatpush1.bf16.msra.mxu0 0
        %1942 = vmatprep.subr.bf16.mxu0 0
        %1943 = vmatpush1.bf16.msra.mxu0 0
        %1944 = vmatprep.subr.bf16.mxu0 0
        %1945 = vmatpush1.bf16.msra.mxu0 0
        %1946 = vmatprep.subr.bf16.mxu0 0
        %1947 = vmatpush1.bf16.msra.mxu0 0
        %1948 = vmatprep.subr.bf16.mxu0 0
        %1949 = vmatpush1.bf16.msra.mxu0 0
        %1950 = vmatprep.subr.bf16.mxu0 0
        %1951 = vmatpush1.bf16.msra.mxu0 0
        %1952 = vmatprep.subr.bf16.mxu0 0
        %1953 = vmatpush1.bf16.msra.mxu0 0
        %1954 = vmatprep.subr.bf16.mxu0 0
        %1955 = vmatpush1.bf16.msra.mxu0 0
        %1956 = vmatprep.subr.bf16.mxu0 0
        %1957 = vmatpush1.bf16.msra.mxu0 0
        %1958 = vmatprep.mubr.bf16.mxu0 0
        %1959 = vmatmul.mubr.bf16.gmra.mrb[0].mxu0 %v1120
        %v1960 = vpop.f32.mrb[0].mxu0
        %v1961 = vadd.f32 0.0, %v1960
        %v1962 = vpop.f32.mrb[0].mxu0
        %v1963 = vpop.f32.mrb[0].mxu0
        %v1964 = vadd.f32 0.0, %v1963
        %v1965 = vpop.f32.mrb[0].mxu0
        %1966 = vmatprep.mubr.bf16.mxu0 0
        %1967 = vmatmul.mubr.bf16.gmra.mrb[0].mxu0 %v1123
        %v1968 = vpop.f32.mrb[0].mxu0
        %v1969 = vadd.f32 0.0, %v1968
        %v1970 = vpop.f32.mrb[0].mxu0
        %v1971 = vpop.f32.mrb[0].mxu0
        %v1972 = vadd.f32 0.0, %v1971
        %v1973 = vpop.f32.mrb[0].mxu0
        %1974 = vmatprep.mubr.bf16.mxu0 0
        %1975 = vmatmul.mubr.bf16.gmra.mrb[0].mxu0 %v1126
        %v1976 = vpop.f32.mrb[0].mxu0
        %v1977 = vadd.f32 0.0, %v1976
        %v1978 = vpop.f32.mrb[0].mxu0
        %v1979 = vpop.f32.mrb[0].mxu0
        %v1980 = vadd.f32 0.0, %v1979
        %v1981 = vpop.f32.mrb[0].mxu0
        %1982 = vmatprep.mubr.bf16.mxu0 0
        %1983 = vmatmul.mubr.bf16.gmra.mrb[0].mxu0 %v1129
        %v1984 = vpop.f32.mrb[0].mxu0
        %v1985 = vadd.f32 0.0, %v1984
        %v1986 = vpop.f32.mrb[0].mxu0
        %v1987 = vpop.f32.mrb[0].mxu0
        %v1988 = vadd.f32 0.0, %v1987
        %v1989 = vpop.f32.mrb[0].mxu0
        %1990 = vmatprep.mubr.bf16.mxu0 0
        %1991 = vmatmul.mubr.bf16.gmra.mrb[0].mxu0 %v1132
        %v1992 = vpop.f32.mrb[0].mxu0
        %v1993 = vadd.f32 0.0, %v1992
        %v1994 = vpop.f32.mrb[0].mxu0
        %v1995 = vpop.f32.mrb[0].mxu0
        %v1996 = vadd.f32 0.0, %v1995
        %v1997 = vpop.f32.mrb[0].mxu0
        %1998 = vmatprep.mubr.bf16.mxu0 0
        %1999 = vmatmul.mubr.bf16.gmra.mrb[0].mxu0 %v1135
        %v2000 = vpop.f32.mrb[0].mxu0
        %v2001 = vadd.f32 0.0, %v2000
        %v2002 = vpop.f32.mrb[0].mxu0
        %v2003 = vpop.f32.mrb[0].mxu0
        %v2004 = vadd.f32 0.0, %v2003
        %v2005 = vpop.f32.mrb[0].mxu0
        %2006 = vmatprep.mubr.bf16.mxu0 0
        %2007 = vmatmul.mubr.bf16.gmra.mrb[0].mxu0 %v1528
        %v2008 = vpop.f32.mrb[0].mxu0
        %v2009 = vadd.f32 0.0, %v2008
        %v2010 = vpop.f32.mrb[0].mxu0
        %v2011 = vpop.f32.mrb[0].mxu0
        %v2012 = vadd.f32 0.0, %v2011
        %v2013 = vpop.f32.mrb[0].mxu0
        %2014 = vmatprep.mubr.bf16.mxu0 0
        %2015 = vmatmul.mubr.bf16.gmra.mrb[0].mxu0 %v1921
        %v2016 = vpop.f32.mrb[0].mxu0
        %v2017 = vadd.f32 0.0, %v2016
        %v2018 = vpop.f32.mrb[0].mxu0
        %v2019 = vpop.f32.mrb[0].mxu0
        %v2020 = vadd.f32 0.0, %v2019
        %v2021 = vpop.f32.mrb[0].mxu0
        %2022 = vdwg.mxu0
        %v2023 = vadd.f32 %v1894, %v1961
        %v2024 = vadd.f32 %v1895, %v1964
        %v2025 = vadd.f32 %v1896, %v1969
        %v2026 = vadd.f32 %v1897, %v1972
        %v2027 = vadd.f32 %v1898, %v1977
        %v2028 = vadd.f32 %v1899, %v1980
        %v2029 = vadd.f32 %v1900, %v1985
        %v2030 = vadd.f32 %v1901, %v1988
        %v2031 = vadd.f32 %v1902, %v1993
        %v2032 = vadd.f32 %v1903, %v1996
        %v2033 = vadd.f32 %v1904, %v2001
        %v2034 = vadd.f32 %v1905, %v2004
        %v2035 = vadd.f32 %v1906, %v2009
        %v2036 = vadd.f32 %v1907, %v2012
        %v2037 = vadd.f32 %v1908, %v2017
        %v2038 = vadd.f32 %v1909, %v2020
        %v2039 = vpack.c.bf16 %v2024, %v2023
        %v2040 = vpack.c.bf16 %v2026, %v2025
        %v2041 = vpack.c.bf16 %v2028, %v2027
        %v2042 = vpack.c.bf16 %v2030, %v2029
        %v2043 = vpack.c.bf16 %v2032, %v2031
        %v2044 = vpack.c.bf16 %v2034, %v2033
        %v2045 = vpack.c.bf16 %v2036, %v2035
        %v2046 = vpack.c.bf16 %v2038, %v2037
        %v2055 = vunpack.c.l.b16 %v2039
        %v2056 = vunpack.c.h.b16 %v2039
        %v2057 = vunpack.c.l.b16 %v2040
        %v2058 = vunpack.c.h.b16 %v2040
        %v2059 = vunpack.c.l.b16 %v2041
        %v2060 = vunpack.c.h.b16 %v2041
        %v2061 = vunpack.c.l.b16 %v2042
        %v2062 = vunpack.c.h.b16 %v2042
        %v2063 = vunpack.c.l.b16 %v2043
        %v2064 = vunpack.c.h.b16 %v2043
        %v2065 = vunpack.c.l.b16 %v2044
        %v2066 = vunpack.c.h.b16 %v2044
        %v2067 = vunpack.c.l.b16 %v2045
        %v2068 = vunpack.c.h.b16 %v2045
        %v2069 = vunpack.c.l.b16 %v2046
        %v2070 = vunpack.c.h.b16 %v2046
        %v2071 = vpack.c.b16 %v2055, %v2055
        %v2072 = vpack.c.b16 %v2056, %v2056
        %v2073 = vpack.c.b16 %v2057, %v2057
        %v2074 = vpack.c.b16 %v2058, %v2058
        %v2075 = vpack.c.b16 %v2059, %v2059
        %v2076 = vpack.c.b16 %v2060, %v2060
        %v2077 = vpack.c.b16 %v2061, %v2061
        %v2078 = vpack.c.b16 %v2062, %v2062
        %v2079 = vpack.c.b16 %v2063, %v2063
        %v2080 = vpack.c.b16 %v2064, %v2064
        %v2081 = vpack.c.b16 %v2065, %v2065
        %v2082 = vpack.c.b16 %v2066, %v2066
        %v2083 = vpack.c.b16 %v2067, %v2067
        %v2084 = vpack.c.b16 %v2068, %v2068
        %v2085 = vpack.c.b16 %v2069, %v2069
        %v2086 = vpack.c.b16 %v2070, %v2070
        %2103 = vst [vmem:[%s472] sm:$0xf] %v2071
        %2104 = vst [vmem:[%s472 + $0x4] sm:$0xf] %v2072
        %2105 = vst [vmem:[%s472 + $0x8] sm:$0xf] %v2073
        %2106 = vst [vmem:[%s472 + $0xc] sm:$0xf] %v2074
        %2107 = vst [vmem:[%s472 + $0x10] sm:$0xf] %v2075
        %2108 = vst [vmem:[%s472 + $0x14] sm:$0xf] %v2076
        %2109 = vst [vmem:[%s472 + $0x18] sm:$0xf] %v2077
        %2110 = vst [vmem:[%s472 + $0x1c] sm:$0xf] %v2078
        %2111 = vst [vmem:[%s472 + $0x20] sm:$0xf] %v2079
        %2112 = vst [vmem:[%s472 + $0x24] sm:$0xf] %v2080
        %2113 = vst [vmem:[%s472 + $0x28] sm:$0xf] %v2081
        %2114 = vst [vmem:[%s472 + $0x2c] sm:$0xf] %v2082
        %2115 = vst [vmem:[%s472 + $0x30] sm:$0xf] %v2083
        %2116 = vst [vmem:[%s472 + $0x34] sm:$0xf] %v2084
        %2117 = vst [vmem:[%s472 + $0x38] sm:$0xf] %v2085
        %2118 = vst [vmem:[%s472 + $0x3c] sm:$0xf] %v2086
        %v2119 = vadd.f32 %v2023, %v2024
        %v2120 = vadd.f32 %v2119, %v2025
        %v2121 = vadd.f32 %v2120, %v2026
        %v2122 = vadd.f32 %v2121, %v2027
        %v2123 = vadd.f32 %v2122, %v2028
        %v2124 = vadd.f32 %v2123, %v2029
        %v2125 = vadd.f32 %v2124, %v2030
        %v2126 = vadd.f32 %v2125, %v2031
        %v2127 = vadd.f32 %v2126, %v2032
        %v2128 = vadd.f32 %v2127, %v2033
        %v2129 = vadd.f32 %v2128, %v2034
        %v2130 = vadd.f32 %v2129, %v2035
        %v2131 = vadd.f32 %v2130, %v2036
        %v2132 = vadd.f32 %v2131, %v2037
        %v2133 = vadd.f32 %v2132, %v2038
        %v2134 = vrot.slane %v2133, 4
        %v2135 = vadd.f32 %v2133, %v2134
        %v2136 = vrot.slane %v2135, 2
        %v2137 = vadd.f32 %v2135, %v2136
        %v2138 = vrot.slane %v2137, 1
        %v2139 = vadd.f32 %v2137, %v2138
        %v2140 = vmul.f32 %v2139, 0.0078125
        %v2141 = vsub.f32 %v2023, %v2140
        %v2142 = vsub.f32 %v2024, %v2140
        %v2143 = vsub.f32 %v2025, %v2140
        %v2144 = vsub.f32 %v2026, %v2140
        %v2145 = vsub.f32 %v2027, %v2140
        %v2146 = vsub.f32 %v2028, %v2140
        %v2147 = vsub.f32 %v2029, %v2140
        %v2148 = vsub.f32 %v2030, %v2140
        %v2149 = vsub.f32 %v2031, %v2140
        %v2150 = vsub.f32 %v2032, %v2140
        %v2151 = vsub.f32 %v2033, %v2140
        %v2152 = vsub.f32 %v2034, %v2140
        %v2153 = vsub.f32 %v2035, %v2140
        %v2154 = vsub.f32 %v2036, %v2140
        %v2155 = vsub.f32 %v2037, %v2140
        %v2156 = vsub.f32 %v2038, %v2140
        %v2157 = vmul.f32 %v2141, %v2141
        %v2158 = vmul.f32 %v2142, %v2142
        %v2159 = vmul.f32 %v2143, %v2143
        %v2160 = vmul.f32 %v2144, %v2144
        %v2161 = vmul.f32 %v2145, %v2145
        %v2162 = vmul.f32 %v2146, %v2146
        %v2163 = vmul.f32 %v2147, %v2147
        %v2164 = vmul.f32 %v2148, %v2148
        %v2165 = vmul.f32 %v2149, %v2149
        %v2166 = vmul.f32 %v2150, %v2150
        %v2167 = vmul.f32 %v2151, %v2151
        %v2168 = vmul.f32 %v2152, %v2152
        %v2169 = vmul.f32 %v2153, %v2153
        %v2170 = vmul.f32 %v2154, %v2154
        %v2171 = vmul.f32 %v2155, %v2155
        %v2172 = vmul.f32 %v2156, %v2156
        %v2173 = vadd.f32 %v2157, %v2158
        %v2174 = vadd.f32 %v2173, %v2159
        %v2175 = vadd.f32 %v2174, %v2160
        %v2176 = vadd.f32 %v2175, %v2161
        %v2177 = vadd.f32 %v2176, %v2162
        %v2178 = vadd.f32 %v2177, %v2163
        %v2179 = vadd.f32 %v2178, %v2164
        %v2180 = vadd.f32 %v2179, %v2165
        %v2181 = vadd.f32 %v2180, %v2166
        %v2182 = vadd.f32 %v2181, %v2167
        %v2183 = vadd.f32 %v2182, %v2168
        %v2184 = vadd.f32 %v2183, %v2169
        %v2185 = vadd.f32 %v2184, %v2170
        %v2186 = vadd.f32 %v2185, %v2171
        %v2187 = vadd.f32 %v2186, %v2172
        %v2188 = vrot.slane %v2187, 4
        %v2189 = vadd.f32 %v2187, %v2188
        %v2190 = vrot.slane %v2189, 2
        %v2191 = vadd.f32 %v2189, %v2190
        %v2192 = vrot.slane %v2191, 1
        %v2193 = vadd.f32 %v2191, %v2192
        %vm2194 = vcmask 1040384
        %v2195 = vsel %vm2194, %v2139, %v2193
        %2196 = vst [vmem:[%s479] sm:$0x3] %v2195
        %s2197 = sand.u32 %s218, 1
        %s2198 = scalar_lea.sflag [#allocation4], %s2197
        %s2199 = sand.u32 %s218, 1
        %s2200 = smul.addr %s2199, 64
        %s2201 = scalar_lea.vmem [#allocation13], %s2200
        %s2202 = sand.u32 %s246, 1
        %s2203 = scalar_lea.sflag [#allocation15], %s2202
        %s2204 = sand.u32 %s246, 1
        %s2205 = smul.addr %s2204, 2
        %s2206 = scalar_lea.vmem [#allocation14], %s2205
        // Predicated region
        $region69: #{unet_skip_up_forward.3} parent=43 // pred_check
          %p2207 = pneg %p228
        $region70: #{unet_skip_up_forward.3} parent=43 // pred_check_branch
          %2209 = sbr.rel (%p2207) target = $region72
        $region71: #{unet_skip_up_forward.3} parent=43 // pred_region
          %s2210 = smul.u32 8, %s38
          %s2212 = ssub.s32 1024, 1024
          %2213 = vsyncadd %s2198, %s2212
          %s2214 = smul.addr %s2210, 2
          %s2215 = smul.addr %s37, 32
          %s2216 = sadd.s32 %s2214, %s2215
          %s2217 = smul.addr %s2216, 64
          %s2218 = scalar_lea.hbm %s6, %s2217
          %s2219 = sshll.u32 %s2201, 4
          %s2220 = int_to_ptr.vmem [resolvable:$true] %s2219
          %2225 = dma.vmem_to_hbm [thread:$0]  %s2220, 1024, %s2218, %s2198, 64, 64, 4
        $region72: #{unet_skip_up_forward.3} parent=43 // pred_fallthru
          _
        // Predicated region
        $region73: #{unet_skip_up_forward.3} parent=43 // pred_check
          %p2226 = pneg %p256
        $region74: #{unet_skip_up_forward.3} parent=43 // pred_check_branch
          %2228 = sbr.rel (%p2226) target = $region76
        $region75: #{unet_skip_up_forward.3} parent=43 // pred_region
          %s2230 = ssub.s32 32, 32
          %2231 = vsyncadd %s2203, %s2230
          %s2232 = smul.addr %s37, 2
          %s2233 = sadd.s32 %s38, %s2232
          %s2234 = smul.addr %s2233, 32
          %s2235 = scalar_lea.hbm %s7, %s2234
          %s2237 = sshll.u32 %s2206, 4
          %s2238 = int_to_ptr.vmem [resolvable:$true] %s2237
          %2240 = dma.vmem_to_hbm [thread:$0]  %s2238, 32, %s2235, %s2203
        $region76: #{unet_skip_up_forward.3} parent=43 // pred_fallthru
          _
      $region44: #{unet_skip_up_forward.3} parent=5 // pred_fallthru
        _
      %p2241 = scmp.le.s32.totalorder 2, %s28
      // Predicated region
      $region77: #{unet_skip_up_forward.3} parent=5 // pred_check
        %p2242 = pneg %p2241
      $region78: #{unet_skip_up_forward.3} parent=5 // pred_check_branch
        %2244 = sbr.rel (%p2242) target = $region80
      $region79: #{unet_skip_up_forward.3} parent=5 // pred_region
        %s2245 = ssub.s32 %s28, 2
        // Predicated region
        $region81: #{unet_skip_up_forward.3} parent=79 // pred_check
          %p2246 = pneg %p234
        $region82: #{unet_skip_up_forward.3} parent=79 // pred_check_branch
          %2248 = sbr.rel (%p2246) target = $region84
        $region83: #{unet_skip_up_forward.3} parent=79 // pred_region
          %s2249 = sand.u32 %s219, 1
          %s2250 = scalar_lea.sflag [#allocation4], %s2249
          %s2251 = sand.u32 %s219, 1
          %s2252 = smul.addr %s2251, 64
          %s2253 = scalar_lea.vmem [#allocation13], %s2252
          %2254 = dma.done %s2250, 1024
        $region84: #{unet_skip_up_forward.3} parent=79 // pred_fallthru
          _
        // Predicated region
        $region85: #{unet_skip_up_forward.3} parent=79 // pred_check
          %p2255 = pneg %p262
        $region86: #{unet_skip_up_forward.3} parent=79 // pred_check_branch
          %2257 = sbr.rel (%p2255) target = $region88
        $region87: #{unet_skip_up_forward.3} parent=79 // pred_region
          %s2258 = sand.u32 %s247, 1
          %s2259 = scalar_lea.sflag [#allocation15], %s2258
          %s2260 = sand.u32 %s247, 1
          %s2261 = smul.addr %s2260, 2
          %s2262 = scalar_lea.vmem [#allocation14], %s2261
          %2263 = dma.done %s2259, 32
        $region88: #{unet_skip_up_forward.3} parent=79 // pred_fallthru
          _
      $region80: #{unet_skip_up_forward.3} parent=5 // pred_fallthru
        _
    $region6: #{unet_skip_up_forward.3} parent=1 // loop_footer
      %s32 = sadd.s32 1, %s28
    $region7: #{unet_skip_up_forward.3} parent=1 // loop_footer_branch
      %27 = sbr.rel target = $region3
    $region8: #{unet_skip_up_forward.3} parent=1 // loop_exit
      _
    %2264 = vsyncpa [#allocation3], 1
    %s2265 = scalar_lea.sflag [#allocation3], 1
    %2266 = vsyncpa %s2265, 1
    %2267 = vsyncpa [#allocation6], 1
    %s2268 = scalar_lea.sflag [#allocation6], 1
    %2269 = vsyncpa %s2268, 1
    %2270 = vsyncpa [#allocation9], 1
    %2271 = vsyncpa [#allocation12], 1
    %2272 = vsyncpa [#allocation4], 1
    %s2273 = scalar_lea.sflag [#allocation4], 1
    %2274 = vsyncpa %s2273, 1
    %2275 = vsyncpa [#allocation15], 1
    %s2276 = scalar_lea.sflag [#allocation15], 1
    %2277 = vsyncpa %s2276, 1

// kernel: unet_skip_up_forward.4
$region0: #{unet_skip_up_forward.4}
  #allocation0 [shape = 'u32[]', space=smem, size = 0x4, offset = 0x4, fixed_abs, tag = 'smem constant byte address 0x4 - core index']
  #allocation1 [shape = 'u32[144,128]{1,0:T(1,128)}', space=vmem, size = 0x12000, scoped, tag = 'internal scratch']
  %s0 = inlined_call_operand.hbm [shape: bf16[2,16,16,128], index: 0, kind: input, shape index: {}, may-alias: {0,1,2}]
  %s1 = inlined_call_operand.hbm [shape: bf16[2,16,16,128], index: 1, kind: input, shape index: {}, may-alias: {0,1,2}]
  %s2 = inlined_call_operand.hbm [shape: bf16[2,16,16,128], index: 2, kind: input, shape index: {}, may-alias: {0,1,2}]
  %s3 = inlined_call_operand.hbm [shape: f32[1,128], index: 3, kind: input, shape index: {}]
  %s4 = inlined_call_operand.hbm [shape: f32[1,128], index: 4, kind: input, shape index: {}]
  %s5 = inlined_call_operand.hbm [shape: bf16[3,384,128], index: 5, kind: input, shape index: {}]
  %s6 = inlined_call_operand.hbm [shape: bf16[2,16,16,128], index: 6, kind: output, shape index: {0}]
  %s7 = inlined_call_operand.hbm [shape: f32[2,2,2,128], index: 7, kind: output, shape index: {1}]
  %8 = xla_tuple %s6, %s7
  %s9 = sld [smem:[#allocation0]]
  $region89: #{unet_skip_up_forward.4} parent=0
    _
  %s11 = ssub.s32 1, %s9
  %s12 = scalar_select 0, %s11, %s9
  $region1: #{unet_skip_up_forward.4} parent=0
    #allocation2 [shape = 'u8[65536]{0}', space=vmem, size = 0x10000, scoped, tag = 'input window, operand 0']
    #allocation3 [shape = 's32[2]{0}', space=sflag, size = 0x8, scoped, tag = 'scoped memory for unet_skip_up_forward.4']
    #allocation4 [shape = 's32[2]{0}', space=sflag, size = 0x8, scoped, tag = 'scoped memory for unet_skip_up_forward.4']
    #allocation5 [shape = 'u8[16384]{0}', space=vmem, size = 0x4000, scoped, tag = 'input window, operand 1']
    #allocation6 [shape = 's32[2]{0}', space=sflag, size = 0x8, scoped, tag = 'scoped memory for unet_skip_up_forward.4']
    #allocation7 [shape = 'u8[16384]{0}', space=vmem, size = 0x4000, scoped, tag = 'input window, operand 2']
    #allocation8 [shape = 'u8[512]{0}', space=vmem, size = 0x400, scoped, tag = 'input window, operand 3, single buffered']
    #allocation9 [shape = 's32[1]{0}', space=sflag, size = 0x4, scoped, tag = 'scoped memory for unet_skip_up_forward.4']
    #allocation10 [shape = 'u8[512]{0}', space=vmem, size = 0x400, scoped, tag = 'input window, operand 4, single buffered']
    #allocation11 [shape = 'u8[294912]{0}', space=vmem, size = 0x48000, scoped, tag = 'input window, operand 5, single buffered']
    #allocation12 [shape = 's32[1]{0}', space=sflag, size = 0x4, scoped, tag = 'scoped memory for unet_skip_up_forward.4']
    #allocation13 [shape = 'u8[65536]{0}', space=vmem, size = 0x10000, scoped, tag = 'output window, operand 0']
    #allocation14 [shape = 'u8[2048]{0}', space=vmem, size = 0x800, scoped, tag = 'output window, operand 1']
    #allocation15 [shape = 's32[2]{0}', space=sflag, size = 0x8, scoped, tag = 'scoped memory for unet_skip_up_forward.4']
    %13 = vsyncpa [#allocation3], 0
    %s14 = scalar_lea.sflag [#allocation3], 1
    %15 = vsyncpa %s14, 0
    %16 = vsyncpa [#allocation6], 0
    %s17 = scalar_lea.sflag [#allocation6], 1
    %18 = vsyncpa %s17, 0
    %19 = vsyncpa [#allocation9], 0
    %20 = vsyncpa [#allocation12], 0
    %21 = vsyncpa [#allocation4], 0
    %s22 = scalar_lea.sflag [#allocation4], 1
    %23 = vsyncpa %s22, 0
    %24 = vsyncpa [#allocation15], 0
    %s25 = scalar_lea.sflag [#allocation15], 1
    %26 = vsyncpa %s25, 0
    loop: start=0, step=1, limit=6
    $region2: #{unet_skip_up_forward.4} parent=1 // loop_pre_header
      _
    $region3: #{unet_skip_up_forward.4} parent=1 // loop_header
      %s28 = sphi 0, %s32
      %p29 = scmp.ge.s32.totalorder %s28, 6
      %s35 = sphi 0, %s47
      %s36 = sphi 0, %s43
      %s37 = sphi 0, %s35
      %s38 = sphi 0, %s36
      %s39 = sphi 0, %s37
      %s40 = sphi 0, %s38
      %s52 = sphi 0, %s54
      %s55 = sphi 0, %s52
      %s56 = sphi 0, %s55
      %s72 = sphi 0, %s56
      %s88 = sphi 0, %s90
      %s91 = sphi 0, %s88
      %s92 = sphi 0, %s91
      %s108 = sphi 0, %s92
      %s124 = sphi 0, %s126
      %s127 = sphi 0, %s124
      %s128 = sphi 0, %s127
      %s144 = sphi 0, %s128
      %s148 = sphi 0, %s148
      %s150 = sphi 0, %s148
      %s151 = sphi 0, %s150
      %s165 = sphi 0, %s151
      %s169 = sphi 0, %s169
      %s171 = sphi 0, %s169
      %s172 = sphi 0, %s171
      %s186 = sphi 0, %s172
      %s190 = sphi 0, %s190
      %s192 = sphi 0, %s190
      %s193 = sphi 0, %s192
      %s207 = sphi 0, %s193
      %s215 = sphi 0, %s217
      %s218 = sphi 0, %s215
      %s219 = sphi 0, %s218
      %s235 = sphi 0, %s219
      %s243 = sphi 0, %s245
      %s246 = sphi 0, %s243
      %s247 = sphi 0, %s246
      %s263 = sphi 0, %s247
    $region4: #{unet_skip_up_forward.4} parent=1 // loop_header_branch
      %31 = sbr.rel (%p29) target = $region8
    $region5: #{unet_skip_up_forward.4} parent=1 // loop_body
      %s33 = ssub.s32 %s28, 1
      %s34 = ssub.s32 %s28, 2
      %s41 = sadd.s32 1, %s36
      %p42 = scmp.ge.s32.totalorder %s41, 2
      %s43 = scalar_select %p42, 0, %s41
      %s44 = sadd.s32 1, %s35
      %s45 = scalar_select %p42, %s44, %s35
      %p46 = scmp.ge.s32.totalorder %s45, 2
      %s47 = scalar_select %p46, 0, %s45
      %s48 = ssub.s32 %s35, %s47
      %s49 = ssub.s32 %s36, %s43
      %s50 = sor.u32 %s48, %s49
      %p51 = scmp.eq.s32.totalorder %s50, 0
      %s53 = sadd.s32 %s52, 1
      %s54 = scalar_select %p51, %s52, %s53
      %p57 = pneg %p51
      %p58 = scmp.eq.s32.totalorder %s28, 3
      %p59 = por %p57, %p58
      %p60 = scmp.ne.s32.totalorder %s52, %s55
      %p61 = scmp.eq.s32.totalorder %s28, 0
      %p62 = por %p60, %p61
      %p63 = scmp.ne.s32.totalorder %s52, %s55
      %p64 = scmp.eq.s32.totalorder %s33, 3
      %p65 = por %p63, %p64
      %p66 = scmp.ne.s32.totalorder %s55, %s56
      %p67 = scmp.eq.s32.totalorder %s33, 0
      %p68 = por %p66, %p67
      %p69 = scmp.ne.s32.totalorder %s55, %s56
      %p70 = scmp.eq.s32.totalorder %s34, 3
      %p71 = por %p69, %p70
      %p73 = scmp.ne.s32.totalorder %s56, %s72
      %p74 = scmp.eq.s32.totalorder %s34, 0
      %p75 = por %p73, %p74
      %s76 = smul.u32 %s36, 4
      %s77 = ssub.s32 %s76, 1
      %p78 = scmp.gt.s32.totalorder %s77, 0
      %s79 = scalar_select %p78, %s77, 0
      %s80 = smul.u32 %s43, 4
      %s81 = ssub.s32 %s80, 1
      %p82 = scmp.gt.s32.totalorder %s81, 0
      %s83 = scalar_select %p82, %s81, 0
      %s84 = ssub.s32 %s35, %s47
      %s85 = ssub.s32 %s79, %s83
      %s86 = sor.u32 %s84, %s85
      %p87 = scmp.eq.s32.totalorder %s86, 0
      %s89 = sadd.s32 %s88, 1
      %s90 = scalar_select %p87, %s88, %s89
      %p93 = pneg %p87
      %p94 = scmp.eq.s32.totalorder %s28, 3
      %p95 = por %p93, %p94
      %p96 = scmp.ne.s32.totalorder %s88, %s91
      %p97 = scmp.eq.s32.totalorder %s28, 0
      %p98 = por %p96, %p97
      %p99 = scmp.ne.s32.totalorder %s88, %s91
      %p100 = scmp.eq.s32.totalorder %s33, 3
      %p101 = por %p99, %p100
      %p102 = scmp.ne.s32.totalorder %s91, %s92
      %p103 = scmp.eq.s32.totalorder %s33, 0
      %p104 = por %p102, %p103
      %p105 = scmp.ne.s32.totalorder %s91, %s92
      %p106 = scmp.eq.s32.totalorder %s34, 3
      %p107 = por %p105, %p106
      %p109 = scmp.ne.s32.totalorder %s92, %s108
      %p110 = scmp.eq.s32.totalorder %s34, 0
      %p111 = por %p109, %p110
      %s112 = sadd.s32 %s36, 1
      %s113 = smul.u32 %s112, 4
      %p114 = scmp.lt.s32.totalorder %s113, 7
      %s115 = scalar_select %p114, %s113, 7
      %s116 = sadd.s32 %s43, 1
      %s117 = smul.u32 %s116, 4
      %p118 = scmp.lt.s32.totalorder %s117, 7
      %s119 = scalar_select %p118, %s117, 7
      %s120 = ssub.s32 %s35, %s47
      %s121 = ssub.s32 %s115, %s119
      %s122 = sor.u32 %s120, %s121
      %p123 = scmp.eq.s32.totalorder %s122, 0
      %s125 = sadd.s32 %s124, 1
      %s126 = scalar_select %p123, %s124, %s125
      %p129 = pneg %p123
      %p130 = scmp.eq.s32.totalorder %s28, 3
      %p131 = por %p129, %p130
      %p132 = scmp.ne.s32.totalorder %s124, %s127
      %p133 = scmp.eq.s32.totalorder %s28, 0
      %p134 = por %p132, %p133
      %p135 = scmp.ne.s32.totalorder %s124, %s127
      %p136 = scmp.eq.s32.totalorder %s33, 3
      %p137 = por %p135, %p136
      %p138 = scmp.ne.s32.totalorder %s127, %s128
      %p139 = scmp.eq.s32.totalorder %s33, 0
      %p140 = por %p138, %p139
      %p141 = scmp.ne.s32.totalorder %s127, %s128
      %p142 = scmp.eq.s32.totalorder %s34, 3
      %p143 = por %p141, %p142
      %p145 = scmp.ne.s32.totalorder %s128, %s144
      %p146 = scmp.eq.s32.totalorder %s34, 0
      %p147 = por %p145, %p146
      %s149 = sadd.s32 %s148, 1
      %p152 = scmp.eq.s32.totalorder %s28, 3
      %p153 = scmp.ne.s32.totalorder %s148, %s150
      %p154 = scmp.eq.s32.totalorder %s28, 0
      %p155 = por %p153, %p154
      %p156 = scmp.ne.s32.totalorder %s148, %s150
      %p157 = scmp.eq.s32.totalorder %s33, 3
      %p158 = por %p156, %p157
      %p159 = scmp.ne.s32.totalorder %s150, %s151
      %p160 = scmp.eq.s32.totalorder %s33, 0
      %p161 = por %p159, %p160
      %p162 = scmp.ne.s32.totalorder %s150, %s151
      %p163 = scmp.eq.s32.totalorder %s34, 3
      %p164 = por %p162, %p163
      %p166 = scmp.ne.s32.totalorder %s151, %s165
      %p167 = scmp.eq.s32.totalorder %s34, 0
      %p168 = por %p166, %p167
      %s170 = sadd.s32 %s169, 1
      %p173 = scmp.eq.s32.totalorder %s28, 3
      %p174 = scmp.ne.s32.totalorder %s169, %s171
      %p175 = scmp.eq.s32.totalorder %s28, 0
      %p176 = por %p174, %p175
      %p177 = scmp.ne.s32.totalorder %s169, %s171
      %p178 = scmp.eq.s32.totalorder %s33, 3
      %p179 = por %p177, %p178
      %p180 = scmp.ne.s32.totalorder %s171, %s172
      %p181 = scmp.eq.s32.totalorder %s33, 0
      %p182 = por %p180, %p181
      %p183 = scmp.ne.s32.totalorder %s171, %s172
      %p184 = scmp.eq.s32.totalorder %s34, 3
      %p185 = por %p183, %p184
      %p187 = scmp.ne.s32.totalorder %s172, %s186
      %p188 = scmp.eq.s32.totalorder %s34, 0
      %p189 = por %p187, %p188
      %s191 = sadd.s32 %s190, 1
      %p194 = scmp.eq.s32.totalorder %s28, 3
      %p195 = scmp.ne.s32.totalorder %s190, %s192
      %p196 = scmp.eq.s32.totalorder %s28, 0
      %p197 = por %p195, %p196
      %p198 = scmp.ne.s32.totalorder %s190, %s192
      %p199 = scmp.eq.s32.totalorder %s33, 3
      %p200 = por %p198, %p199
      %p201 = scmp.ne.s32.totalorder %s192, %s193
      %p202 = scmp.eq.s32.totalorder %s33, 0
      %p203 = por %p201, %p202
      %p204 = scmp.ne.s32.totalorder %s192, %s193
      %p205 = scmp.eq.s32.totalorder %s34, 3
      %p206 = por %p204, %p205
      %p208 = scmp.ne.s32.totalorder %s193, %s207
      %p209 = scmp.eq.s32.totalorder %s34, 0
      %p210 = por %p208, %p209
      %s211 = ssub.s32 %s35, %s47
      %s212 = ssub.s32 %s36, %s43
      %s213 = sor.u32 %s211, %s212
      %p214 = scmp.eq.s32.totalorder %s213, 0
      %s216 = sadd.s32 %s215, 1
      %s217 = scalar_select %p214, %s215, %s216
      %p220 = pneg %p214
      %p221 = scmp.eq.s32.totalorder %s28, 3
      %p222 = por %p220, %p221
      %p223 = scmp.ne.s32.totalorder %s215, %s218
      %p224 = scmp.eq.s32.totalorder %s28, 0
      %p225 = por %p223, %p224
      %p226 = scmp.ne.s32.totalorder %s215, %s218
      %p227 = scmp.eq.s32.totalorder %s33, 3
      %p228 = por %p226, %p227
      %p229 = scmp.ne.s32.totalorder %s218, %s219
      %p230 = scmp.eq.s32.totalorder %s33, 0
      %p231 = por %p229, %p230
      %p232 = scmp.ne.s32.totalorder %s218, %s219
      %p233 = scmp.eq.s32.totalorder %s34, 3
      %p234 = por %p232, %p233
      %p236 = scmp.ne.s32.totalorder %s219, %s235
      %p237 = scmp.eq.s32.totalorder %s34, 0
      %p238 = por %p236, %p237
      %s239 = ssub.s32 %s35, %s47
      %s240 = ssub.s32 %s36, %s43
      %s241 = sor.u32 %s239, %s240
      %p242 = scmp.eq.s32.totalorder %s241, 0
      %s244 = sadd.s32 %s243, 1
      %s245 = scalar_select %p242, %s243, %s244
      %p248 = pneg %p242
      %p249 = scmp.eq.s32.totalorder %s28, 3
      %p250 = por %p248, %p249
      %p251 = scmp.ne.s32.totalorder %s243, %s246
      %p252 = scmp.eq.s32.totalorder %s28, 0
      %p253 = por %p251, %p252
      %p254 = scmp.ne.s32.totalorder %s243, %s246
      %p255 = scmp.eq.s32.totalorder %s33, 3
      %p256 = por %p254, %p255
      %p257 = scmp.ne.s32.totalorder %s246, %s247
      %p258 = scmp.eq.s32.totalorder %s33, 0
      %p259 = por %p257, %p258
      %p260 = scmp.ne.s32.totalorder %s246, %s247
      %p261 = scmp.eq.s32.totalorder %s34, 3
      %p262 = por %p260, %p261
      %p264 = scmp.ne.s32.totalorder %s247, %s263
      %p265 = scmp.eq.s32.totalorder %s34, 0
      %p266 = por %p264, %p265
      %p267 = scmp.le.s32.totalorder 1, %s28
      %p268 = scmp.lt.s32.totalorder %s28, 5
      %p269 = pnand %p267, %p268
      %p270 = pneg %p269
      // Predicated region
      $region9: #{unet_skip_up_forward.4} parent=5 // pred_check
        _
      $region10: #{unet_skip_up_forward.4} parent=5 // pred_check_branch
        %272 = sbr.rel (%p269) target = $region12
      $region11: #{unet_skip_up_forward.4} parent=5 // pred_region
        %s273 = ssub.s32 %s28, 1
        // Predicated region
        $region13: #{unet_skip_up_forward.4} parent=11 // pred_check
          %p274 = pneg %p161
        $region14: #{unet_skip_up_forward.4} parent=11 // pred_check_branch
          %276 = sbr.rel (%p274) target = $region16
        $region15: #{unet_skip_up_forward.4} parent=11 // pred_region
          %s278 = ssub.s32 16, 16
          %279 = vsyncadd [#allocation9], %s278
          %s281 = sshll.u32 [#allocation8], 4
          %s282 = int_to_ptr.vmem [resolvable:$true] %s281
          %284 = dma.hbm_to_vmem [thread:$0]  %s3, 16, %s282, [#allocation9]
        $region16: #{unet_skip_up_forward.4} parent=11 // pred_fallthru
          _
        // Predicated region
        $region17: #{unet_skip_up_forward.4} parent=11 // pred_check
          %p285 = pneg %p182
        $region18: #{unet_skip_up_forward.4} parent=11 // pred_check_branch
          %287 = sbr.rel (%p285) target = $region20
        $region19: #{unet_skip_up_forward.4} parent=11 // pred_region
          %s289 = ssub.s32 16, 16
          %290 = vsyncadd [#allocation9], %s289
          %s292 = sshll.u32 [#allocation10], 4
          %s293 = int_to_ptr.vmem [resolvable:$true] %s292
          %295 = dma.hbm_to_vmem [thread:$0]  %s4, 16, %s293, [#allocation9]
        $region20: #{unet_skip_up_forward.4} parent=11 // pred_fallthru
          _
        // Predicated region
        $region21: #{unet_skip_up_forward.4} parent=11 // pred_check
          %p296 = pneg %p203
        $region22: #{unet_skip_up_forward.4} parent=11 // pred_check_branch
          %298 = sbr.rel (%p296) target = $region24
        $region23: #{unet_skip_up_forward.4} parent=11 // pred_region
          %s300 = ssub.s32 9216, 9216
          %301 = vsyncadd [#allocation12], %s300
          %s302 = sshll.u32 [#allocation11], 4
          %s303 = int_to_ptr.vmem [resolvable:$true] %s302
          %308 = dma.hbm_to_vmem [thread:$0]  %s5, 9216, %s303, [#allocation12], 64, 64, 4
        $region24: #{unet_skip_up_forward.4} parent=11 // pred_fallthru
          _
      $region12: #{unet_skip_up_forward.4} parent=5 // pred_fallthru
        _
      %p309 = scmp.lt.s32.totalorder %s28, 4
      // Predicated region
      $region25: #{unet_skip_up_forward.4} parent=5 // pred_check
        %p310 = pneg %p309
      $region26: #{unet_skip_up_forward.4} parent=5 // pred_check_branch
        %312 = sbr.rel (%p310) target = $region28
      $region27: #{unet_skip_up_forward.4} parent=5 // pred_region
        // Predicated region
        $region29: #{unet_skip_up_forward.4} parent=27 // pred_check
          %p313 = pneg %p62
        $region30: #{unet_skip_up_forward.4} parent=27 // pred_check_branch
          %315 = sbr.rel (%p313) target = $region32
        $region31: #{unet_skip_up_forward.4} parent=27 // pred_region
          %s316 = sand.u32 %s52, 1
          %s317 = scalar_lea.sflag [#allocation3], %s316
          %s318 = sand.u32 %s52, 1
          %s319 = smul.addr %s318, 64
          %s320 = scalar_lea.vmem [#allocation2], %s319
          %s321 = smul.u32 8, %s36
          %s323 = ssub.s32 1024, 1024
          %324 = vsyncadd %s317, %s323
          %s325 = smul.addr %s321, 2
          %s326 = smul.addr %s35, 32
          %s327 = sadd.s32 %s325, %s326
          %s328 = smul.addr %s327, 64
          %s329 = scalar_lea.hbm %s0, %s328
          %s330 = sshll.u32 %s320, 4
          %s331 = int_to_ptr.vmem [resolvable:$true] %s330
          %336 = dma.hbm_to_vmem [thread:$0]  %s329, 1024, %s331, %s317, 64, 64, 4
        $region32: #{unet_skip_up_forward.4} parent=27 // pred_fallthru
          _
        // Predicated region
        $region33: #{unet_skip_up_forward.4} parent=27 // pred_check
          %p337 = pneg %p98
        $region34: #{unet_skip_up_forward.4} parent=27 // pred_check_branch
          %339 = sbr.rel (%p337) target = $region36
        $region35: #{unet_skip_up_forward.4} parent=27 // pred_region
          %s340 = sand.u32 %s28, 1
          %s341 = scalar_lea.sflag [#allocation6], %s340
          %s342 = sand.u32 %s88, 1
          %s343 = smul.addr %s342, 16
          %s344 = scalar_lea.vmem [#allocation5], %s343
          %s345 = smul.u32 %s36, 4
          %s346 = ssub.s32 %s345, 1
          %p347 = scmp.gt.s32.totalorder %s346, 0
          %s348 = scalar_select %p347, %s346, 0
          %s349 = smul.u32 2, %s348
          %s351 = ssub.s32 256, 256
          %352 = vsyncadd %s341, %s351
          %s353 = smul.addr %s349, 2
          %s354 = smul.addr %s35, 32
          %s355 = sadd.s32 %s353, %s354
          %s356 = smul.addr %s355, 64
          %s357 = scalar_lea.hbm %s1, %s356
          %s358 = sshll.u32 %s344, 4
          %s359 = int_to_ptr.vmem [resolvable:$true] %s358
          %364 = dma.hbm_to_vmem [thread:$0]  %s357, 256, %s359, %s341, 64, 64, 4
        $region36: #{unet_skip_up_forward.4} parent=27 // pred_fallthru
          _
        // Predicated region
        $region37: #{unet_skip_up_forward.4} parent=27 // pred_check
          %p365 = pneg %p134
        $region38: #{unet_skip_up_forward.4} parent=27 // pred_check_branch
          %367 = sbr.rel (%p365) target = $region40
        $region39: #{unet_skip_up_forward.4} parent=27 // pred_region
          %s368 = sand.u32 %s28, 1
          %s369 = scalar_lea.sflag [#allocation6], %s368
          %s370 = sand.u32 %s124, 1
          %s371 = smul.addr %s370, 16
          %s372 = scalar_lea.vmem [#allocation7], %s371
          %s373 = sadd.s32 %s36, 1
          %s374 = smul.u32 %s373, 4
          %p375 = scmp.lt.s32.totalorder %s374, 7
          %s376 = scalar_select %p375, %s374, 7
          %s377 = smul.u32 2, %s376
          %s379 = ssub.s32 256, 256
          %380 = vsyncadd %s369, %s379
          %s381 = smul.addr %s377, 2
          %s382 = smul.addr %s35, 32
          %s383 = sadd.s32 %s381, %s382
          %s384 = smul.addr %s383, 64
          %s385 = scalar_lea.hbm %s2, %s384
          %s386 = sshll.u32 %s372, 4
          %s387 = int_to_ptr.vmem [resolvable:$true] %s386
          %392 = dma.hbm_to_vmem [thread:$0]  %s385, 256, %s387, %s369, 64, 64, 4
        $region40: #{unet_skip_up_forward.4} parent=27 // pred_fallthru
          _
      $region28: #{unet_skip_up_forward.4} parent=5 // pred_fallthru
        _
      %p393 = scmp.le.s32.totalorder 1, %s28
      %p394 = scmp.lt.s32.totalorder %s28, 5
      %p395 = pnand %p393, %p394
      %p396 = pneg %p395
      // Predicated region
      $region41: #{unet_skip_up_forward.4} parent=5 // pred_check
        _
      $region42: #{unet_skip_up_forward.4} parent=5 // pred_check_branch
        %398 = sbr.rel (%p395) target = $region44
      $region43: #{unet_skip_up_forward.4} parent=5 // pred_region
        %s399 = ssub.s32 %s28, 1
        %s400 = sand.u32 %s55, 1
        %s401 = scalar_lea.sflag [#allocation3], %s400
        %s402 = sand.u32 %s55, 1
        %s403 = smul.addr %s402, 64
        %s404 = scalar_lea.vmem [#allocation2], %s403
        // Predicated region
        $region45: #{unet_skip_up_forward.4} parent=43 // pred_check
          %p405 = pneg %p68
        $region46: #{unet_skip_up_forward.4} parent=43 // pred_check_branch
          %407 = sbr.rel (%p405) target = $region48
        $region47: #{unet_skip_up_forward.4} parent=43 // pred_region
          %408 = dma.done %s401, 1024
        $region48: #{unet_skip_up_forward.4} parent=43 // pred_fallthru
          _
        %s409 = sand.u32 %s33, 1
        %s410 = scalar_lea.sflag [#allocation6], %s409
        %s411 = sand.u32 %s91, 1
        %s412 = smul.addr %s411, 16
        %s413 = scalar_lea.vmem [#allocation5], %s412
        // Predicated region
        $region49: #{unet_skip_up_forward.4} parent=43 // pred_check
          %p414 = pneg %p104
        $region50: #{unet_skip_up_forward.4} parent=43 // pred_check_branch
          %416 = sbr.rel (%p414) target = $region52
        $region51: #{unet_skip_up_forward.4} parent=43 // pred_region
          %417 = dma.done %s410, 256
        $region52: #{unet_skip_up_forward.4} parent=43 // pred_fallthru
          _
        %s418 = sand.u32 %s33, 1
        %s419 = scalar_lea.sflag [#allocation6], %s418
        %s420 = sand.u32 %s127, 1
        %s421 = smul.addr %s420, 16
        %s422 = scalar_lea.vmem [#allocation7], %s421
        // Predicated region
        $region53: #{unet_skip_up_forward.4} parent=43 // pred_check
          %p423 = pneg %p140
        $region54: #{unet_skip_up_forward.4} parent=43 // pred_check_branch
          %425 = sbr.rel (%p423) target = $region56
        $region55: #{unet_skip_up_forward.4} parent=43 // pred_region
          %426 = dma.done %s419, 256
        $region56: #{unet_skip_up_forward.4} parent=43 // pred_fallthru
          _
        // Predicated region
        $region57: #{unet_skip_up_forward.4} parent=43 // pred_check
          %p427 = pneg %p161
        $region58: #{unet_skip_up_forward.4} parent=43 // pred_check_branch
          %429 = sbr.rel (%p427) target = $region60
        $region59: #{unet_skip_up_forward.4} parent=43 // pred_region
          %430 = dma.done [#allocation9], 16
        $region60: #{unet_skip_up_forward.4} parent=43 // pred_fallthru
          _
        // Predicated region
        $region61: #{unet_skip_up_forward.4} parent=43 // pred_check
          %p431 = pneg %p182
        $region62: #{unet_skip_up_forward.4} parent=43 // pred_check_branch
          %433 = sbr.rel (%p431) target = $region64
        $region63: #{unet_skip_up_forward.4} parent=43 // pred_region
          %434 = dma.done [#allocation9], 16
        $region64: #{unet_skip_up_forward.4} parent=43 // pred_fallthru
          _
        // Predicated region
        $region65: #{unet_skip_up_forward.4} parent=43 // pred_check
          %p435 = pneg %p203
        $region66: #{unet_skip_up_forward.4} parent=43 // pred_check_branch
          %437 = sbr.rel (%p435) target = $region68
        $region67: #{unet_skip_up_forward.4} parent=43 // pred_region
          %438 = dma.done [#allocation12], 9216
        $region68: #{unet_skip_up_forward.4} parent=43 // pred_fallthru
          _
        %s439 = sand.u32 %s55, 1
        %s440 = scalar_lea.sflag [#allocation3], %s439
        %s441 = sand.u32 %s55, 1
        %s442 = smul.addr %s441, 64
        %s443 = scalar_lea.vmem [#allocation2], %s442
        %p444 = pneg %p68
        %p445 = pneg %p65
        %s446 = sand.u32 %s33, 1
        %s447 = scalar_lea.sflag [#allocation6], %s446
        %s448 = sand.u32 %s91, 1
        %s449 = smul.addr %s448, 16
        %s450 = scalar_lea.vmem [#allocation5], %s449
        %p451 = pneg %p104
        %p452 = pneg %p101
        %s453 = sand.u32 %s33, 1
        %s454 = scalar_lea.sflag [#allocation6], %s453
        %s455 = sand.u32 %s127, 1
        %s456 = smul.addr %s455, 16
        %s457 = scalar_lea.vmem [#allocation7], %s456
        %p458 = pneg %p140
        %p459 = pneg %p137
        %p460 = pneg %p161
        %p461 = pneg %p158
        %p462 = pneg %p182
        %p463 = pneg %p179
        %p464 = pneg %p203
        %p465 = pneg %p200
        %p466 = pneg %p231
        %p467 = pneg %p228
        %s468 = sand.u32 %s218, 1
        %s469 = scalar_lea.sflag [#allocation4], %s468
        %s470 = sand.u32 %s218, 1
        %s471 = smul.addr %s470, 64
        %s472 = scalar_lea.vmem [#allocation13], %s471
        %p473 = pneg %p259
        %p474 = pneg %p256
        %s475 = sand.u32 %s246, 1
        %s476 = scalar_lea.sflag [#allocation15], %s475
        %s477 = sand.u32 %s246, 1
        %s478 = smul.addr %s477, 2
        %s479 = scalar_lea.vmem [#allocation14], %s478
        %s480 = smul.u32 8, %s38
        %s481 = smul.u32 %s38, 4
        %s482 = ssub.s32 %s481, 1
        %p483 = scmp.gt.s32.totalorder %s482, 0
        %s484 = scalar_select %p483, %s482, 0
        %s485 = smul.u32 2, %s484
        %s486 = sadd.s32 %s38, 1
        %s487 = smul.u32 %s486, 4
        %p488 = scmp.lt.s32.totalorder %s487, 7
        %s489 = scalar_select %p488, %s487, 7
        %s490 = smul.u32 2, %s489
        %s491 = smul.u32 8, %s38
        %v493 = vld [vmem:[%s404] sm:$0xf]
        %v494 = vld [vmem:[%s404 + $0x4] sm:$0xf]
        %v495 = vld [vmem:[%s404 + $0x8] sm:$0xf]
        %v496 = vld [vmem:[%s404 + $0xc] sm:$0xf]
        %v497 = vld [vmem:[%s404 + $0x10] sm:$0xf]
        %v498 = vld [vmem:[%s404 + $0x14] sm:$0xf]
        %v499 = vld [vmem:[%s404 + $0x18] sm:$0xf]
        %v500 = vld [vmem:[%s404 + $0x1c] sm:$0xf]
        %v501 = vld [vmem:[%s404 + $0x20] sm:$0xf]
        %v502 = vld [vmem:[%s404 + $0x24] sm:$0xf]
        %v503 = vld [vmem:[%s404 + $0x28] sm:$0xf]
        %v504 = vld [vmem:[%s404 + $0x2c] sm:$0xf]
        %v505 = vld [vmem:[%s404 + $0x30] sm:$0xf]
        %v506 = vld [vmem:[%s404 + $0x34] sm:$0xf]
        %v507 = vld [vmem:[%s404 + $0x38] sm:$0xf]
        %v508 = vld [vmem:[%s404 + $0x3c] sm:$0xf]
        %v509 = vld [vmem:[%s413 + $0x8] sm:$0xf]
        %v510 = vld [vmem:[%s413 + $0xc] sm:$0xf]
        %v511 = vld [vmem:[%s422] sm:$0xf]
        %v512 = vld [vmem:[%s422 + $0x4] sm:$0xf]
        %v513 = vld [vmem:[#allocation8] sm:$0x1]
        %v514 = vld [vmem:[#allocation10] sm:$0x1]
        %v515 = vunpack.c.l.bf16 %v493
        %v516 = vunpack.c.l.bf16 %v494
        %v517 = vunpack.c.l.bf16 %v495
        %v518 = vunpack.c.l.bf16 %v496
        %v519 = vunpack.c.l.bf16 %v497
        %v520 = vunpack.c.l.bf16 %v498
        %v521 = vunpack.c.l.bf16 %v499
        %v522 = vunpack.c.l.bf16 %v500
        %v523 = vunpack.c.l.bf16 %v501
        %v524 = vunpack.c.l.bf16 %v502
        %v525 = vunpack.c.l.bf16 %v503
        %v526 = vunpack.c.l.bf16 %v504
        %v527 = vunpack.c.l.bf16 %v505
        %v528 = vunpack.c.l.bf16 %v506
        %v529 = vunpack.c.l.bf16 %v507
        %v530 = vunpack.c.l.bf16 %v508
        %v532 = vlaneseq
        %v533 = vshrl.u32 %v532, 7
        %v534 = vsub.s32 0, %v533
        %v535 = vrot.slane %v513, %v534
        %v537 = vmul.f32 %v515, %v535
        %v538 = vmul.f32 %v516, %v535
        %v539 = vmul.f32 %v517, %v535
        %v540 = vmul.f32 %v518, %v535
        %v541 = vmul.f32 %v519, %v535
        %v542 = vmul.f32 %v520, %v535
        %v543 = vmul.f32 %v521, %v535
        %v544 = vmul.f32 %v522, %v535
        %v545 = vmul.f32 %v523, %v535
        %v546 = vmul.f32 %v524, %v535
        %v547 = vmul.f32 %v525, %v535
        %v548 = vmul.f32 %v526, %v535
        %v549 = vmul.f32 %v527, %v535
        %v550 = vmul.f32 %v528, %v535
        %v551 = vmul.f32 %v529, %v535
        %v552 = vmul.f32 %v530, %v535
        %v554 = vlaneseq
        %v555 = vshrl.u32 %v554, 7
        %v556 = vsub.s32 0, %v555
        %v557 = vrot.slane %v514, %v556
        %v559 = vadd.f32 %v537, %v557
        %v560 = vadd.f32 %v538, %v557
        %v561 = vadd.f32 %v539, %v557
        %v562 = vadd.f32 %v540, %v557
        %v563 = vadd.f32 %v541, %v557
        %v564 = vadd.f32 %v542, %v557
        %v565 = vadd.f32 %v543, %v557
        %v566 = vadd.f32 %v544, %v557
        %v567 = vadd.f32 %v545, %v557
        %v568 = vadd.f32 %v546, %v557
        %v569 = vadd.f32 %v547, %v557
        %v570 = vadd.f32 %v548, %v557
        %v571 = vadd.f32 %v549, %v557
        %v572 = vadd.f32 %v550, %v557
        %v573 = vadd.f32 %v551, %v557
        %v574 = vadd.f32 %v552, %v557
        %v575 = vmax.f32 %v559, 0.0
        %v576 = vmax.f32 %v560, 0.0
        %v577 = vmax.f32 %v561, 0.0
        %v578 = vmax.f32 %v562, 0.0
        %v579 = vmax.f32 %v563, 0.0
        %v580 = vmax.f32 %v564, 0.0
        %v581 = vmax.f32 %v565, 0.0
        %v582 = vmax.f32 %v566, 0.0
        %v583 = vmax.f32 %v567, 0.0
        %v584 = vmax.f32 %v568, 0.0
        %v585 = vmax.f32 %v569, 0.0
        %v586 = vmax.f32 %v570, 0.0
        %v587 = vmax.f32 %v571, 0.0
        %v588 = vmax.f32 %v572, 0.0
        %v589 = vmax.f32 %v573, 0.0
        %v590 = vmax.f32 %v574, 0.0
        %v591 = vmin.f32 %v575, 6.0
        %v592 = vmin.f32 %v576, 6.0
        %v593 = vmin.f32 %v577, 6.0
        %v594 = vmin.f32 %v578, 6.0
        %v595 = vmin.f32 %v579, 6.0
        %v596 = vmin.f32 %v580, 6.0
        %v597 = vmin.f32 %v581, 6.0
        %v598 = vmin.f32 %v582, 6.0
        %v599 = vmin.f32 %v583, 6.0
        %v600 = vmin.f32 %v584, 6.0
        %v601 = vmin.f32 %v585, 6.0
        %v602 = vmin.f32 %v586, 6.0
        %v603 = vmin.f32 %v587, 6.0
        %v604 = vmin.f32 %v588, 6.0
        %v605 = vmin.f32 %v589, 6.0
        %v606 = vmin.f32 %v590, 6.0
        %v607 = vpack.c.bf16 %v592, %v591
        %v608 = vpack.c.bf16 %v594, %v593
        %v609 = vpack.c.bf16 %v596, %v595
        %v610 = vpack.c.bf16 %v598, %v597
        %v611 = vpack.c.bf16 %v600, %v599
        %v612 = vpack.c.bf16 %v602, %v601
        %v613 = vpack.c.bf16 %v604, %v603
        %v614 = vpack.c.bf16 %v606, %v605
        %v615 = vunpack.c.l.bf16 %v509
        %v616 = vunpack.c.l.bf16 %v510
        %v617 = vmul.f32 %v615, %v535
        %v618 = vmul.f32 %v616, %v535
        %v619 = vadd.f32 %v617, %v557
        %v620 = vadd.f32 %v618, %v557
        %v621 = vmax.f32 %v619, 0.0
        %v622 = vmax.f32 %v620, 0.0
        %v623 = vmin.f32 %v621, 6.0
        %v624 = vmin.f32 %v622, 6.0
        %v625 = vpack.c.bf16 %v624, %v623
        %v626 = vunpack.c.l.bf16 %v511
        %v627 = vunpack.c.l.bf16 %v512
        %v628 = vmul.f32 %v626, %v535
        %v629 = vmul.f32 %v627, %v535
        %v630 = vadd.f32 %v628, %v557
        %v631 = vadd.f32 %v629, %v557
        %v632 = vmax.f32 %v630, 0.0
        %v633 = vmax.f32 %v631, 0.0
        %v634 = vmin.f32 %v632, 6.0
        %v635 = vmin.f32 %v633, 6.0
        %v636 = vpack.c.bf16 %v635, %v634
        %p637 = scmp.gt.s32.totalorder %s38, 0
        %s638 = scalar_select %p637, 1, 0
        %s639 = scvt.s32.f32 %s638
        %p641 = scmp.ne.f32.partialorder %s639, %s639
        %s642 = sshrl.u32 %s639, 16
        %s643 = sand.u32 %s642, 1
        %s644 = sadd.s32 32767, %s643
        %s645 = sadd.s32 %s639, %s644
        %s646 = sand.u32 %s645, 4294901760
        %s647 = scalar_select %p641, 2143289344, %s646
        %s649 = sshrl.u32 %s647, 16
        %s650 = sshll.u32 %s649, 16
        %s651 = sor.u32 %s649, %s650
        %v652 = vstv %s651
        %v654 = vmul.bf16 %v625, %v652
        %p655 = scmp.lt.s32.totalorder %s38, 1
        %s656 = scalar_select %p655, 1, 0
        %s657 = scvt.s32.f32 %s656
        %p659 = scmp.ne.f32.partialorder %s657, %s657
        %s660 = sshrl.u32 %s657, 16
        %s661 = sand.u32 %s660, 1
        %s662 = sadd.s32 32767, %s661
        %s663 = sadd.s32 %s657, %s662
        %s664 = sand.u32 %s663, 4294901760
        %s665 = scalar_select %p659, 2143289344, %s664
        %s667 = sshrl.u32 %s665, 16
        %s668 = sshll.u32 %s667, 16
        %s669 = sor.u32 %s667, %s668
        %v670 = vstv %s669
        %v672 = vmul.bf16 %v636, %v670
        %v674 = vshrl.u32 %v654, 16
        %v676 = vrot.slane %v674, 7
        %v677 = vshll.u32 %v654, 16
        %v679 = vor.u32 %v676, %v677
        %v681 = vshrl.u32 %v607, 16
        %v683 = vrot.slane %v681, 7
        %v684 = vshll.u32 %v607, 16
        %v686 = vor.u32 %v683, %v684
        %v688 = vshrl.u32 %v608, 16
        %v690 = vrot.slane %v688, 7
        %v691 = vshll.u32 %v608, 16
        %v693 = vor.u32 %v690, %v691
        %v695 = vshrl.u32 %v609, 16
        %v697 = vrot.slane %v695, 7
        %v698 = vshll.u32 %v609, 16
        %v700 = vor.u32 %v697, %v698
        %v702 = vshrl.u32 %v610, 16
        %v704 = vrot.slane %v702, 7
        %v705 = vshll.u32 %v610, 16
        %v707 = vor.u32 %v704, %v705
        %v709 = vshrl.u32 %v611, 16
        %v711 = vrot.slane %v709, 7
        %v712 = vshll.u32 %v611, 16
        %v714 = vor.u32 %v711, %v712
        %v716 = vshrl.u32 %v612, 16
        %v718 = vrot.slane %v716, 7
        %v719 = vshll.u32 %v612, 16
        %v721 = vor.u32 %v718, %v719
        %v723 = vshrl.u32 %v613, 16
        %v725 = vrot.slane %v723, 7
        %v726 = vshll.u32 %v613, 16
        %v728 = vor.u32 %v725, %v726
        %v730 = vshrl.u32 %v614, 16
        %v732 = vrot.slane %v730, 7
        %v733 = vshll.u32 %v614, 16
        %v735 = vor.u32 %v732, %v733
        %v737 = vshrl.u32 %v672, 16
        %v739 = vrot.slane %v737, 7
        %v740 = vshll.u32 %v672, 16
        %v742 = vor.u32 %v739, %v740
        %vm763 = vcmask 1040384
        %vm764 = vsmask.f32 256
        %vm765 = vmand %vm763, %vm764
        %v766 = vsel %vm765, 0, %v679
        %v767 = vsel %vm765, 0, %v686
        %v768 = vsel %vm765, 0, %v693
        %v769 = vsel %vm765, 0, %v700
        %v770 = vsel %vm765, 0, %v707
        %v771 = vsel %vm765, 0, %v714
        %v772 = vsel %vm765, 0, %v721
        %v773 = vsel %vm765, 0, %v728
        %v774 = vsel %vm765, 0, %v735
        %v775 = vsel %vm765, 0, %v742
        %v776 = vsel %vm765, %v676, 0
        %v777 = vsel %vm765, %v683, 0
        %v778 = vsel %vm765, %v690, 0
        %v779 = vsel %vm765, %v697, 0
        %v780 = vsel %vm765, %v704, 0
        %v781 = vsel %vm765, %v711, 0
        %v782 = vsel %vm765, %v718, 0
        %v783 = vsel %vm765, %v725, 0
        %v784 = vsel %vm765, %v732, 0
        %v785 = vsel %vm765, %v739, 0
        %vm786 = vsmask.f32 7424
        %v788 = vshrl.u32 %v766, 16
        %v790 = vshll.u32 %v766, 16
        %v792 = vrot.slane %v790, 1
        %v793 = vor.u32 %v788, %v792
        %v795 = vshll.u32 %v776, 16
        %v797 = vrot.slane %v795, 1
        %v798 = vsel %vm786, %v793, %v797
        %v800 = vshrl.u32 %v767, 16
        %v802 = vshll.u32 %v767, 16
        %v804 = vrot.slane %v802, 1
        %v805 = vor.u32 %v800, %v804
        %v807 = vshll.u32 %v777, 16
        %v809 = vrot.slane %v807, 1
        %v810 = vsel %vm786, %v805, %v809
        %v812 = vshrl.u32 %v768, 16
        %v814 = vshll.u32 %v768, 16
        %v816 = vrot.slane %v814, 1
        %v817 = vor.u32 %v812, %v816
        %v819 = vshll.u32 %v778, 16
        %v821 = vrot.slane %v819, 1
        %v822 = vsel %vm786, %v817, %v821
        %v824 = vshrl.u32 %v769, 16
        %v826 = vshll.u32 %v769, 16
        %v828 = vrot.slane %v826, 1
        %v829 = vor.u32 %v824, %v828
        %v831 = vshll.u32 %v779, 16
        %v833 = vrot.slane %v831, 1
        %v834 = vsel %vm786, %v829, %v833
        %v836 = vshrl.u32 %v770, 16
        %v838 = vshll.u32 %v770, 16
        %v840 = vrot.slane %v838, 1
        %v841 = vor.u32 %v836, %v840
        %v843 = vshll.u32 %v780, 16
        %v845 = vrot.slane %v843, 1
        %v846 = vsel %vm786, %v841, %v845
        %v848 = vshrl.u32 %v771, 16
        %v850 = vshll.u32 %v771, 16
        %v852 = vrot.slane %v850, 1
        %v853 = vor.u32 %v848, %v852
        %v855 = vshll.u32 %v781, 16
        %v857 = vrot.slane %v855, 1
        %v858 = vsel %vm786, %v853, %v857
        %v860 = vshrl.u32 %v772, 16
        %v862 = vshll.u32 %v772, 16
        %v864 = vrot.slane %v862, 1
        %v865 = vor.u32 %v860, %v864
        %v867 = vshll.u32 %v782, 16
        %v869 = vrot.slane %v867, 1
        %v870 = vsel %vm786, %v865, %v869
        %v872 = vshrl.u32 %v773, 16
        %v874 = vshll.u32 %v773, 16
        %v876 = vrot.slane %v874, 1
        %v877 = vor.u32 %v872, %v876
        %v879 = vshll.u32 %v783, 16
        %v881 = vrot.slane %v879, 1
        %v882 = vsel %vm786, %v877, %v881
        %v884 = vshrl.u32 %v774, 16
        %v886 = vshll.u32 %v774, 16
        %v888 = vrot.slane %v886, 1
        %v889 = vor.u32 %v884, %v888
        %v891 = vshll.u32 %v784, 16
        %v893 = vrot.slane %v891, 1
        %v894 = vsel %vm786, %v889, %v893
        %v896 = vshrl.u32 %v775, 16
        %v898 = vshll.u32 %v775, 16
        %v900 = vrot.slane %v898, 1
        %v901 = vor.u32 %v896, %v900
        %v903 = vshll.u32 %v785, 16
        %v905 = vrot.slane %v903, 1
        %v906 = vsel %vm786, %v901, %v905
        %vm937 = vcmask 1046528
        %v938 = vrot.slane %v766, 1
        %v939 = vrot.slane %v776, 1
        %v940 = vsel %vm937, %v938, %v939
        %v941 = vrot.slane %v767, 1
        %v942 = vrot.slane %v777, 1
        %v943 = vsel %vm937, %v941, %v942
        %v944 = vrot.slane %v768, 1
        %v945 = vrot.slane %v778, 1
        %v946 = vsel %vm937, %v944, %v945
        %v947 = vrot.slane %v769, 1
        %v948 = vrot.slane %v779, 1
        %v949 = vsel %vm937, %v947, %v948
        %v950 = vrot.slane %v770, 1
        %v951 = vrot.slane %v780, 1
        %v952 = vsel %vm937, %v950, %v951
        %v953 = vrot.slane %v771, 1
        %v954 = vrot.slane %v781, 1
        %v955 = vsel %vm937, %v953, %v954
        %v956 = vrot.slane %v772, 1
        %v957 = vrot.slane %v782, 1
        %v958 = vsel %vm937, %v956, %v957
        %v959 = vrot.slane %v773, 1
        %v960 = vrot.slane %v783, 1
        %v961 = vsel %vm937, %v959, %v960
        %v962 = vrot.slane %v774, 1
        %v963 = vrot.slane %v784, 1
        %v964 = vsel %vm937, %v962, %v963
        %v965 = vrot.slane %v775, 1
        %v966 = vrot.slane %v785, 1
        %v967 = vsel %vm937, %v965, %v966
        %v978 = vld [vmem:[#allocation11] sm:$0xf]
        %v979 = vld [vmem:[#allocation11 + $0x4] sm:$0xf]
        %v980 = vld [vmem:[#allocation11 + $0x8] sm:$0xf]
        %v981 = vld [vmem:[#allocation11 + $0xc] sm:$0xf]
        %v982 = vld [vmem:[#allocation11 + $0x10] sm:$0xf]
        %v983 = vld [vmem:[#allocation11 + $0x14] sm:$0xf]
        %v984 = vld [vmem:[#allocation11 + $0x18] sm:$0xf]
        %v985 = vld [vmem:[#allocation11 + $0x1c] sm:$0xf]
        %v986 = vld [vmem:[#allocation11 + $0x20] sm:$0xf]
        %v987 = vld [vmem:[#allocation11 + $0x24] sm:$0xf]
        %v988 = vld [vmem:[#allocation11 + $0x28] sm:$0xf]
        %v989 = vld [vmem:[#allocation11 + $0x2c] sm:$0xf]
        %v990 = vld [vmem:[#allocation11 + $0x30] sm:$0xf]
        %v991 = vld [vmem:[#allocation11 + $0x34] sm:$0xf]
        %v992 = vld [vmem:[#allocation11 + $0x38] sm:$0xf]
        %v993 = vld [vmem:[#allocation11 + $0x3c] sm:$0xf]
        %v994 = vld [vmem:[#allocation11 + $0x40] sm:$0xf]
        %v995 = vld [vmem:[#allocation11 + $0x44] sm:$0xf]
        %v996 = vld [vmem:[#allocation11 + $0x48] sm:$0xf]
        %v997 = vld [vmem:[#allocation11 + $0x4c] sm:$0xf]
        %v998 = vld [vmem:[#allocation11 + $0x50] sm:$0xf]
        %v999 = vld [vmem:[#allocation11 + $0x54] sm:$0xf]
        %v1000 = vld [vmem:[#allocation11 + $0x58] sm:$0xf]
        %v1001 = vld [vmem:[#allocation11 + $0x5c] sm:$0xf]
        %v1002 = vld [vmem:[#allocation11 + $0x60] sm:$0xf]
        %v1003 = vld [vmem:[#allocation11 + $0x64] sm:$0xf]
        %v1004 = vld [vmem:[#allocation11 + $0x68] sm:$0xf]
        %v1005 = vld [vmem:[#allocation11 + $0x6c] sm:$0xf]
        %v1006 = vld [vmem:[#allocation11 + $0x70] sm:$0xf]
        %v1007 = vld [vmem:[#allocation11 + $0x74] sm:$0xf]
        %v1008 = vld [vmem:[#allocation11 + $0x78] sm:$0xf]
        %v1009 = vld [vmem:[#allocation11 + $0x7c] sm:$0xf]
        %v1010 = vld [vmem:[#allocation11 + $0x80] sm:$0xf]
        %v1011 = vld [vmem:[#allocation11 + $0x84] sm:$0xf]
        %v1012 = vld [vmem:[#allocation11 + $0x88] sm:$0xf]
        %v1013 = vld [vmem:[#allocation11 + $0x8c] sm:$0xf]
        %v1014 = vld [vmem:[#allocation11 + $0x90] sm:$0xf]
        %v1015 = vld [vmem:[#allocation11 + $0x94] sm:$0xf]
        %v1016 = vld [vmem:[#allocation11 + $0x98] sm:$0xf]
        %v1017 = vld [vmem:[#allocation11 + $0x9c] sm:$0xf]
        %v1018 = vld [vmem:[#allocation11 + $0xa0] sm:$0xf]
        %v1019 = vld [vmem:[#allocation11 + $0xa4] sm:$0xf]
        %v1020 = vld [vmem:[#allocation11 + $0xa8] sm:$0xf]
        %v1021 = vld [vmem:[#allocation11 + $0xac] sm:$0xf]
        %v1022 = vld [vmem:[#allocation11 + $0xb0] sm:$0xf]
        %v1023 = vld [vmem:[#allocation11 + $0xb4] sm:$0xf]
        %v1024 = vld [vmem:[#allocation11 + $0xb8] sm:$0xf]
        %v1025 = vld [vmem:[#allocation11 + $0xbc] sm:$0xf]
        %s1026 = scalar_lea.vmem [#allocation11], 192
        %v1027 = vld [vmem:[%s1026] sm:$0xf]
        %v1028 = vld [vmem:[%s1026 + $0x4] sm:$0xf]
        %v1029 = vld [vmem:[%s1026 + $0x8] sm:$0xf]
        %v1030 = vld [vmem:[%s1026 + $0xc] sm:$0xf]
        %v1031 = vld [vmem:[%s1026 + $0x10] sm:$0xf]
        %v1032 = vld [vmem:[%s1026 + $0x14] sm:$0xf]
        %v1033 = vld [vmem:[%s1026 + $0x18] sm:$0xf]
        %v1034 = vld [vmem:[%s1026 + $0x1c] sm:$0xf]
        %v1035 = vld [vmem:[%s1026 + $0x20] sm:$0xf]
        %v1036 = vld [vmem:[%s1026 + $0x24] sm:$0xf]
        %v1037 = vld [vmem:[%s1026 + $0x28] sm:$0xf]
        %v1038 = vld [vmem:[%s1026 + $0x2c] sm:$0xf]
        %v1039 = vld [vmem:[%s1026 + $0x30] sm:$0xf]
        %v1040 = vld [vmem:[%s1026 + $0x34] sm:$0xf]
        %v1041 = vld [vmem:[%s1026 + $0x38] sm:$0xf]
        %v1042 = vld [vmem:[%s1026 + $0x3c] sm:$0xf]
        %v1043 = vld [vmem:[%s1026 + $0x40] sm:$0xf]
        %v1044 = vld [vmem:[%s1026 + $0x44] sm:$0xf]
        %v1045 = vld [vmem:[%s1026 + $0x48] sm:$0xf]
        %v1046 = vld [vmem:[%s1026 + $0x4c] sm:$0xf]
        %v1047 = vld [vmem:[%s1026 + $0x50] sm:$0xf]
        %v1048 = vld [vmem:[%s1026 + $0x54] sm:$0xf]
        %v1049 = vld [vmem:[%s1026 + $0x58] sm:$0xf]
        %v1050 = vld [vmem:[%s1026 + $0x5c] sm:$0xf]
        %v1051 = vld [vmem:[%s1026 + $0x60] sm:$0xf]
        %v1052 = vld [vmem:[%s1026 + $0x64] sm:$0xf]
        %v1053 = vld [vmem:[%s1026 + $0x68] sm:$0xf]
        %v1054 = vld [vmem:[%s1026 + $0x6c] sm:$0xf]
        %v1055 = vld [vmem:[%s1026 + $0x70] sm:$0xf]
        %v1056 = vld [vmem:[%s1026 + $0x74] sm:$0xf]
        %v1057 = vld [vmem:[%s1026 + $0x78] sm:$0xf]
        %v1058 = vld [vmem:[%s1026 + $0x7c] sm:$0xf]
        %v1059 = vld [vmem:[%s1026 + $0x80] sm:$0xf]
        %v1060 = vld [vmem:[%s1026 + $0x84] sm:$0xf]
        %v1061 = vld [vmem:[%s1026 + $0x88] sm:$0xf]
        %v1062 = vld [vmem:[%s1026 + $0x8c] sm:$0xf]
        %v1063 = vld [vmem:[%s1026 + $0x90] sm:$0xf]
        %v1064 = vld [vmem:[%s1026 + $0x94] sm:$0xf]
        %v1065 = vld [vmem:[%s1026 + $0x98] sm:$0xf]
        %v1066 = vld [vmem:[%s1026 + $0x9c] sm:$0xf]
        %v1067 = vld [vmem:[%s1026 + $0xa0] sm:$0xf]
        %v1068 = vld [vmem:[%s1026 + $0xa4] sm:$0xf]
        %v1069 = vld [vmem:[%s1026 + $0xa8] sm:$0xf]
        %v1070 = vld [vmem:[%s1026 + $0xac] sm:$0xf]
        %v1071 = vld [vmem:[%s1026 + $0xb0] sm:$0xf]
        %v1072 = vld [vmem:[%s1026 + $0xb4] sm:$0xf]
        %v1073 = vld [vmem:[%s1026 + $0xb8] sm:$0xf]
        %v1074 = vld [vmem:[%s1026 + $0xbc] sm:$0xf]
        %v1123 = vunpack.c.l.b16 %v1027
        %v1124 = vunpack.c.l.b16 %v1028
        %v1125 = vunpack.c.l.b16 %v1029
        %v1126 = vunpack.c.l.b16 %v1030
        %v1127 = vunpack.c.l.b16 %v1031
        %v1128 = vunpack.c.l.b16 %v1032
        %v1129 = vunpack.c.l.b16 %v1033
        %v1130 = vunpack.c.l.b16 %v1034
        %v1131 = vunpack.c.l.b16 %v1035
        %v1132 = vunpack.c.l.b16 %v1036
        %v1133 = vunpack.c.l.b16 %v1037
        %v1134 = vunpack.c.l.b16 %v1038
        %v1135 = vunpack.c.l.b16 %v1039
        %v1136 = vunpack.c.l.b16 %v1040
        %v1137 = vunpack.c.l.b16 %v1041
        %v1138 = vunpack.c.l.b16 %v1042
        %v1139 = vunpack.c.l.b16 %v1043
        %v1140 = vunpack.c.l.b16 %v1044
        %v1141 = vunpack.c.l.b16 %v1045
        %v1142 = vunpack.c.l.b16 %v1046
        %v1143 = vunpack.c.l.b16 %v1047
        %v1144 = vunpack.c.l.b16 %v1048
        %v1145 = vunpack.c.l.b16 %v1049
        %v1146 = vunpack.c.l.b16 %v1050
        %v1147 = vunpack.c.l.b16 %v1051
        %v1148 = vunpack.c.l.b16 %v1052
        %v1149 = vunpack.c.l.b16 %v1053
        %v1150 = vunpack.c.l.b16 %v1054
        %v1151 = vunpack.c.l.b16 %v1055
        %v1152 = vunpack.c.l.b16 %v1056
        %v1153 = vunpack.c.l.b16 %v1057
        %v1154 = vunpack.c.l.b16 %v1058
        %v1155 = vunpack.c.l.b16 %v1059
        %v1156 = vunpack.c.l.b16 %v1060
        %v1157 = vunpack.c.l.b16 %v1061
        %v1158 = vunpack.c.l.b16 %v1062
        %v1159 = vunpack.c.l.b16 %v1063
        %v1160 = vunpack.c.l.b16 %v1064
        %v1161 = vunpack.c.l.b16 %v1065
        %v1162 = vunpack.c.l.b16 %v1066
        %v1163 = vunpack.c.l.b16 %v1067
        %v1164 = vunpack.c.l.b16 %v1068
        %v1165 = vunpack.c.l.b16 %v1069
        %v1166 = vunpack.c.l.b16 %v1070
        %v1167 = vunpack.c.l.b16 %v1071
        %v1168 = vunpack.c.l.b16 %v1072
        %v1169 = vunpack.c.l.b16 %v1073
        %v1170 = vunpack.c.l.b16 %v1074
        %v1171 = vpack.c.b16 %v1124, %v1123
        %v1172 = vpack.c.b16 %v1126, %v1125
        %v1173 = vpack.c.b16 %v1128, %v1127
        %v1174 = vpack.c.b16 %v1130, %v1129
        %v1175 = vpack.c.b16 %v1132, %v1131
        %v1176 = vpack.c.b16 %v1134, %v1133
        %v1177 = vpack.c.b16 %v1136, %v1135
        %v1178 = vpack.c.b16 %v1138, %v1137
        %v1179 = vpack.c.b16 %v1140, %v1139
        %v1180 = vpack.c.b16 %v1142, %v1141
        %v1181 = vpack.c.b16 %v1144, %v1143
        %v1182 = vpack.c.b16 %v1146, %v1145
        %v1183 = vpack.c.b16 %v1148, %v1147
        %v1184 = vpack.c.b16 %v1150, %v1149
        %v1185 = vpack.c.b16 %v1152, %v1151
        %v1186 = vpack.c.b16 %v1154, %v1153
        %v1187 = vpack.c.b16 %v1156, %v1155
        %v1188 = vpack.c.b16 %v1158, %v1157
        %v1189 = vpack.c.b16 %v1160, %v1159
        %v1190 = vpack.c.b16 %v1162, %v1161
        %v1191 = vpack.c.b16 %v1164, %v1163
        %v1192 = vpack.c.b16 %v1166, %v1165
        %v1193 = vpack.c.b16 %v1168, %v1167
        %v1194 = vpack.c.b16 %v1170, %v1169
        %1219 = vmatprep.subr.bf16.mxu0 0
        %1220 = vmatpush1.bf16.msra.mxu0 %v1171
        %1221 = vmatprep.subr.bf16.mxu0 0
        %1222 = vmatpush1.bf16.msra.mxu0 %v1172
        %1223 = vmatprep.subr.bf16.mxu0 0
        %1224 = vmatpush1.bf16.msra.mxu0 %v1173
        %1225 = vmatprep.subr.bf16.mxu0 0
        %1226 = vmatpush1.bf16.msra.mxu0 %v1174
        %1227 = vmatprep.subr.bf16.mxu0 0
        %1228 = vmatpush1.bf16.msra.mxu0 %v1175
        %1229 = vmatprep.subr.bf16.mxu0 0
        %1230 = vmatpush1.bf16.msra.mxu0 %v1176
        %1231 = vmatprep.subr.bf16.mxu0 0
        %1232 = vmatpush1.bf16.msra.mxu0 %v1177
        %1233 = vmatprep.subr.bf16.mxu0 0
        %1234 = vmatpush1.bf16.msra.mxu0 %v1178
        %1235 = vmatprep.subr.bf16.mxu0 0
        %1236 = vmatpush1.bf16.msra.mxu0 %v1179
        %1237 = vmatprep.subr.bf16.mxu0 0
        %1238 = vmatpush1.bf16.msra.mxu0 %v1180
        %1239 = vmatprep.subr.bf16.mxu0 0
        %1240 = vmatpush1.bf16.msra.mxu0 %v1181
        %1241 = vmatprep.subr.bf16.mxu0 0
        %1242 = vmatpush1.bf16.msra.mxu0 %v1182
        %1243 = vmatprep.subr.bf16.mxu0 0
        %1244 = vmatpush1.bf16.msra.mxu0 %v1183
        %1245 = vmatprep.subr.bf16.mxu0 0
        %1246 = vmatpush1.bf16.msra.mxu0 %v1184
        %1247 = vmatprep.subr.bf16.mxu0 0
        %1248 = vmatpush1.bf16.msra.mxu0 %v1185
        %1249 = vmatprep.subr.bf16.mxu0 0
        %1250 = vmatpush1.bf16.msra.mxu0 %v1186
        %1251 = vmatprep.mubr.bf16.mxu0 %v810
        %1252 = vmatmul.mubr.bf16.gmra.mrb[0].mxu0 %v767
        %v1253 = vpop.f32.mrb[0].mxu0
        %v1254 = vadd.f32 0.0, %v1253
        %v1255 = vpop.f32.mrb[0].mxu0
        %v1256 = vpop.f32.mrb[0].mxu0
        %v1257 = vadd.f32 0.0, %v1256
        %v1258 = vpop.f32.mrb[0].mxu0
        %1259 = vmatprep.mubr.bf16.mxu0 %v822
        %1260 = vmatmul.mubr.bf16.gmra.mrb[0].mxu0 %v768
        %v1261 = vpop.f32.mrb[0].mxu0
        %v1262 = vadd.f32 0.0, %v1261
        %v1263 = vpop.f32.mrb[0].mxu0
        %v1264 = vpop.f32.mrb[0].mxu0
        %v1265 = vadd.f32 0.0, %v1264
        %v1266 = vpop.f32.mrb[0].mxu0
        %1267 = vmatprep.mubr.bf16.mxu0 %v834
        %1268 = vmatmul.mubr.bf16.gmra.mrb[0].mxu0 %v769
        %v1269 = vpop.f32.mrb[0].mxu0
        %v1270 = vadd.f32 0.0, %v1269
        %v1271 = vpop.f32.mrb[0].mxu0
        %v1272 = vpop.f32.mrb[0].mxu0
        %v1273 = vadd.f32 0.0, %v1272
        %v1274 = vpop.f32.mrb[0].mxu0
        %1275 = vmatprep.mubr.bf16.mxu0 %v846
        %1276 = vmatmul.mubr.bf16.gmra.mrb[0].mxu0 %v770
        %v1277 = vpop.f32.mrb[0].mxu0
        %v1278 = vadd.f32 0.0, %v1277
        %v1279 = vpop.f32.mrb[0].mxu0
        %v1280 = vpop.f32.mrb[0].mxu0
        %v1281 = vadd.f32 0.0, %v1280
        %v1282 = vpop.f32.mrb[0].mxu0
        %1283 = vmatprep.mubr.bf16.mxu0 %v858
        %1284 = vmatmul.mubr.bf16.gmra.mrb[0].mxu0 %v771
        %v1285 = vpop.f32.mrb[0].mxu0
        %v1286 = vadd.f32 0.0, %v1285
        %v1287 = vpop.f32.mrb[0].mxu0
        %v1288 = vpop.f32.mrb[0].mxu0
        %v1289 = vadd.f32 0.0, %v1288
        %v1290 = vpop.f32.mrb[0].mxu0
        %1291 = vmatprep.mubr.bf16.mxu0 %v870
        %1292 = vmatmul.mubr.bf16.gmra.mrb[0].mxu0 %v772
        %v1293 = vpop.f32.mrb[0].mxu0
        %v1294 = vadd.f32 0.0, %v1293
        %v1295 = vpop.f32.mrb[0].mxu0
        %v1296 = vpop.f32.mrb[0].mxu0
        %v1297 = vadd.f32 0.0, %v1296
        %v1298 = vpop.f32.mrb[0].mxu0
        %1299 = vmatprep.mubr.bf16.mxu0 %v882
        %1300 = vmatmul.mubr.bf16.gmra.mrb[0].mxu0 %v773
        %v1301 = vpop.f32.mrb[0].mxu0
        %v1302 = vadd.f32 0.0, %v1301
        %v1303 = vpop.f32.mrb[0].mxu0
        %v1304 = vpop.f32.mrb[0].mxu0
        %v1305 = vadd.f32 0.0, %v1304
        %v1306 = vpop.f32.mrb[0].mxu0
        %1307 = vmatprep.mubr.bf16.mxu0 %v894
        %1308 = vmatmul.mubr.bf16.gmra.mrb[0].mxu0 %v774
        %v1309 = vpop.f32.mrb[0].mxu0
        %v1310 = vadd.f32 0.0, %v1309
        %v1311 = vpop.f32.mrb[0].mxu0
        %v1312 = vpop.f32.mrb[0].mxu0
        %v1313 = vadd.f32 0.0, %v1312
        %v1314 = vpop.f32.mrb[0].mxu0
        %1315 = vdwg.mxu0
        %1316 = vmatprep.subr.bf16.mxu0 0
        %1317 = vmatpush1.bf16.msra.mxu0 %v1187
        %1318 = vmatprep.subr.bf16.mxu0 0
        %1319 = vmatpush1.bf16.msra.mxu0 %v1188
        %1320 = vmatprep.subr.bf16.mxu0 0
        %1321 = vmatpush1.bf16.msra.mxu0 %v1189
        %1322 = vmatprep.subr.bf16.mxu0 0
        %1323 = vmatpush1.bf16.msra.mxu0 %v1190
        %1324 = vmatprep.subr.bf16.mxu0 0
        %1325 = vmatpush1.bf16.msra.mxu0 %v1191
        %1326 = vmatprep.subr.bf16.mxu0 0
        %1327 = vmatpush1.bf16.msra.mxu0 %v1192
        %1328 = vmatprep.subr.bf16.mxu0 0
        %1329 = vmatpush1.bf16.msra.mxu0 %v1193
        %1330 = vmatprep.subr.bf16.mxu0 0
        %1331 = vmatpush1.bf16.msra.mxu0 %v1194
        %1332 = vmatprep.subr.bf16.mxu0 0
        %1333 = vmatpush1.bf16.msra.mxu0 0
        %1334 = vmatprep.subr.bf16.mxu0 0
        %1335 = vmatpush1.bf16.msra.mxu0 0
        %1336 = vmatprep.subr.bf16.mxu0 0
        %1337 = vmatpush1.bf16.msra.mxu0 0
        %1338 = vmatprep.subr.bf16.mxu0 0
        %1339 = vmatpush1.bf16.msra.mxu0 0
        %1340 = vmatprep.subr.bf16.mxu0 0
        %1341 = vmatpush1.bf16.msra.mxu0 0
        %1342 = vmatprep.subr.bf16.mxu0 0
        %1343 = vmatpush1.bf16.msra.mxu0 0
        %1344 = vmatprep.subr.bf16.mxu0 0
        %1345 = vmatpush1.bf16.msra.mxu0 0
        %1346 = vmatprep.subr.bf16.mxu0 0
        %1347 = vmatpush1.bf16.msra.mxu0 0
        %1348 = vmatprep.mubr.bf16.mxu0 0
        %1349 = vmatmul.mubr.bf16.gmra.mrb[0].mxu0 %v943
        %v1350 = vpop.f32.mrb[0].mxu0
        %v1351 = vadd.f32 %v1254, %v1350
        %v1352 = vpop.f32.mrb[0].mxu0
        %v1353 = vpop.f32.mrb[0].mxu0
        %v1354 = vadd.f32 %v1257, %v1353
        %v1355 = vpop.f32.mrb[0].mxu0
        %1356 = vmatprep.mubr.bf16.mxu0 0
        %1357 = vmatmul.mubr.bf16.gmra.mrb[0].mxu0 %v946
        %v1358 = vpop.f32.mrb[0].mxu0
        %v1359 = vadd.f32 %v1262, %v1358
        %v1360 = vpop.f32.mrb[0].mxu0
        %v1361 = vpop.f32.mrb[0].mxu0
        %v1362 = vadd.f32 %v1265, %v1361
        %v1363 = vpop.f32.mrb[0].mxu0
        %1364 = vmatprep.mubr.bf16.mxu0 0
        %1365 = vmatmul.mubr.bf16.gmra.mrb[0].mxu0 %v949
        %v1366 = vpop.f32.mrb[0].mxu0
        %v1367 = vadd.f32 %v1270, %v1366
        %v1368 = vpop.f32.mrb[0].mxu0
        %v1369 = vpop.f32.mrb[0].mxu0
        %v1370 = vadd.f32 %v1273, %v1369
        %v1371 = vpop.f32.mrb[0].mxu0
        %1372 = vmatprep.mubr.bf16.mxu0 0
        %1373 = vmatmul.mubr.bf16.gmra.mrb[0].mxu0 %v952
        %v1374 = vpop.f32.mrb[0].mxu0
        %v1375 = vadd.f32 %v1278, %v1374
        %v1376 = vpop.f32.mrb[0].mxu0
        %v1377 = vpop.f32.mrb[0].mxu0
        %v1378 = vadd.f32 %v1281, %v1377
        %v1379 = vpop.f32.mrb[0].mxu0
        %1380 = vmatprep.mubr.bf16.mxu0 0
        %1381 = vmatmul.mubr.bf16.gmra.mrb[0].mxu0 %v955
        %v1382 = vpop.f32.mrb[0].mxu0
        %v1383 = vadd.f32 %v1286, %v1382
        %v1384 = vpop.f32.mrb[0].mxu0
        %v1385 = vpop.f32.mrb[0].mxu0
        %v1386 = vadd.f32 %v1289, %v1385
        %v1387 = vpop.f32.mrb[0].mxu0
        %1388 = vmatprep.mubr.bf16.mxu0 0
        %1389 = vmatmul.mubr.bf16.gmra.mrb[0].mxu0 %v958
        %v1390 = vpop.f32.mrb[0].mxu0
        %v1391 = vadd.f32 %v1294, %v1390
        %v1392 = vpop.f32.mrb[0].mxu0
        %v1393 = vpop.f32.mrb[0].mxu0
        %v1394 = vadd.f32 %v1297, %v1393
        %v1395 = vpop.f32.mrb[0].mxu0
        %1396 = vmatprep.mubr.bf16.mxu0 0
        %1397 = vmatmul.mubr.bf16.gmra.mrb[0].mxu0 %v961
        %v1398 = vpop.f32.mrb[0].mxu0
        %v1399 = vadd.f32 %v1302, %v1398
        %v1400 = vpop.f32.mrb[0].mxu0
        %v1401 = vpop.f32.mrb[0].mxu0
        %v1402 = vadd.f32 %v1305, %v1401
        %v1403 = vpop.f32.mrb[0].mxu0
        %1404 = vmatprep.mubr.bf16.mxu0 0
        %1405 = vmatmul.mubr.bf16.gmra.mrb[0].mxu0 %v964
        %v1406 = vpop.f32.mrb[0].mxu0
        %v1407 = vadd.f32 %v1310, %v1406
        %v1408 = vpop.f32.mrb[0].mxu0
        %v1409 = vpop.f32.mrb[0].mxu0
        %v1410 = vadd.f32 %v1313, %v1409
        %v1411 = vpop.f32.mrb[0].mxu0
        %1412 = vdwg.mxu0
        %v1461 = vunpack.c.l.b16 %v978
        %v1462 = vunpack.c.l.b16 %v979
        %v1463 = vunpack.c.l.b16 %v980
        %v1464 = vunpack.c.l.b16 %v981
        %v1465 = vunpack.c.l.b16 %v982
        %v1466 = vunpack.c.l.b16 %v983
        %v1467 = vunpack.c.l.b16 %v984
        %v1468 = vunpack.c.l.b16 %v985
        %v1469 = vunpack.c.l.b16 %v986
        %v1470 = vunpack.c.l.b16 %v987
        %v1471 = vunpack.c.l.b16 %v988
        %v1472 = vunpack.c.l.b16 %v989
        %v1473 = vunpack.c.l.b16 %v990
        %v1474 = vunpack.c.l.b16 %v991
        %v1475 = vunpack.c.l.b16 %v992
        %v1476 = vunpack.c.l.b16 %v993
        %v1477 = vunpack.c.l.b16 %v994
        %v1478 = vunpack.c.l.b16 %v995
        %v1479 = vunpack.c.l.b16 %v996
        %v1480 = vunpack.c.l.b16 %v997
        %v1481 = vunpack.c.l.b16 %v998
        %v1482 = vunpack.c.l.b16 %v999
        %v1483 = vunpack.c.l.b16 %v1000
        %v1484 = vunpack.c.l.b16 %v1001
        %v1485 = vunpack.c.l.b16 %v1002
        %v1486 = vunpack.c.l.b16 %v1003
        %v1487 = vunpack.c.l.b16 %v1004
        %v1488 = vunpack.c.l.b16 %v1005
        %v1489 = vunpack.c.l.b16 %v1006
        %v1490 = vunpack.c.l.b16 %v1007
        %v1491 = vunpack.c.l.b16 %v1008
        %v1492 = vunpack.c.l.b16 %v1009
        %v1493 = vunpack.c.l.b16 %v1010
        %v1494 = vunpack.c.l.b16 %v1011
        %v1495 = vunpack.c.l.b16 %v1012
        %v1496 = vunpack.c.l.b16 %v1013
        %v1497 = vunpack.c.l.b16 %v1014
        %v1498 = vunpack.c.l.b16 %v1015
        %v1499 = vunpack.c.l.b16 %v1016
        %v1500 = vunpack.c.l.b16 %v1017
        %v1501 = vunpack.c.l.b16 %v1018
        %v1502 = vunpack.c.l.b16 %v1019
        %v1503 = vunpack.c.l.b16 %v1020
        %v1504 = vunpack.c.l.b16 %v1021
        %v1505 = vunpack.c.l.b16 %v1022
        %v1506 = vunpack.c.l.b16 %v1023
        %v1507 = vunpack.c.l.b16 %v1024
        %v1508 = vunpack.c.l.b16 %v1025
        %v1509 = vpack.c.b16 %v1462, %v1461
        %v1510 = vpack.c.b16 %v1464, %v1463
        %v1511 = vpack.c.b16 %v1466, %v1465
        %v1512 = vpack.c.b16 %v1468, %v1467
        %v1513 = vpack.c.b16 %v1470, %v1469
        %v1514 = vpack.c.b16 %v1472, %v1471
        %v1515 = vpack.c.b16 %v1474, %v1473
        %v1516 = vpack.c.b16 %v1476, %v1475
        %v1517 = vpack.c.b16 %v1478, %v1477
        %v1518 = vpack.c.b16 %v1480, %v1479
        %v1519 = vpack.c.b16 %v1482, %v1481
        %v1520 = vpack.c.b16 %v1484, %v1483
        %v1521 = vpack.c.b16 %v1486, %v1485
        %v1522 = vpack.c.b16 %v1488, %v1487
        %v1523 = vpack.c.b16 %v1490, %v1489
        %v1524 = vpack.c.b16 %v1492, %v1491
        %v1525 = vpack.c.b16 %v1494, %v1493
        %v1526 = vpack.c.b16 %v1496, %v1495
        %v1527 = vpack.c.b16 %v1498, %v1497
        %v1528 = vpack.c.b16 %v1500, %v1499
        %v1529 = vpack.c.b16 %v1502, %v1501
        %v1530 = vpack.c.b16 %v1504, %v1503
        %v1531 = vpack.c.b16 %v1506, %v1505
        %v1532 = vpack.c.b16 %v1508, %v1507
        %1557 = vmatprep.subr.bf16.mxu0 0
        %1558 = vmatpush1.bf16.msra.mxu0 %v1509
        %1559 = vmatprep.subr.bf16.mxu0 0
        %1560 = vmatpush1.bf16.msra.mxu0 %v1510
        %1561 = vmatprep.subr.bf16.mxu0 0
        %1562 = vmatpush1.bf16.msra.mxu0 %v1511
        %1563 = vmatprep.subr.bf16.mxu0 0
        %1564 = vmatpush1.bf16.msra.mxu0 %v1512
        %1565 = vmatprep.subr.bf16.mxu0 0
        %1566 = vmatpush1.bf16.msra.mxu0 %v1513
        %1567 = vmatprep.subr.bf16.mxu0 0
        %1568 = vmatpush1.bf16.msra.mxu0 %v1514
        %1569 = vmatprep.subr.bf16.mxu0 0
        %1570 = vmatpush1.bf16.msra.mxu0 %v1515
        %1571 = vmatprep.subr.bf16.mxu0 0
        %1572 = vmatpush1.bf16.msra.mxu0 %v1516
        %1573 = vmatprep.subr.bf16.mxu0 0
        %1574 = vmatpush1.bf16.msra.mxu0 %v1517
        %1575 = vmatprep.subr.bf16.mxu0 0
        %1576 = vmatpush1.bf16.msra.mxu0 %v1518
        %1577 = vmatprep.subr.bf16.mxu0 0
        %1578 = vmatpush1.bf16.msra.mxu0 %v1519
        %1579 = vmatprep.subr.bf16.mxu0 0
        %1580 = vmatpush1.bf16.msra.mxu0 %v1520
        %1581 = vmatprep.subr.bf16.mxu0 0
        %1582 = vmatpush1.bf16.msra.mxu0 %v1521
        %1583 = vmatprep.subr.bf16.mxu0 0
        %1584 = vmatpush1.bf16.msra.mxu0 %v1522
        %1585 = vmatprep.subr.bf16.mxu0 0
        %1586 = vmatpush1.bf16.msra.mxu0 %v1523
        %1587 = vmatprep.subr.bf16.mxu0 0
        %1588 = vmatpush1.bf16.msra.mxu0 %v1524
        %1589 = vmatprep.mubr.bf16.mxu0 %v798
        %1590 = vmatmul.mubr.bf16.gmra.mrb[0].mxu0 %v766
        %v1591 = vpop.f32.mrb[0].mxu0
        %v1592 = vadd.f32 %v1351, %v1591
        %v1593 = vpop.f32.mrb[0].mxu0
        %v1594 = vpop.f32.mrb[0].mxu0
        %v1595 = vadd.f32 %v1354, %v1594
        %v1596 = vpop.f32.mrb[0].mxu0
        %1597 = vmatprep.mubr.bf16.mxu0 %v810
        %1598 = vmatmul.mubr.bf16.gmra.mrb[0].mxu0 %v767
        %v1599 = vpop.f32.mrb[0].mxu0
        %v1600 = vadd.f32 %v1359, %v1599
        %v1601 = vpop.f32.mrb[0].mxu0
        %v1602 = vpop.f32.mrb[0].mxu0
        %v1603 = vadd.f32 %v1362, %v1602
        %v1604 = vpop.f32.mrb[0].mxu0
        %1605 = vmatprep.mubr.bf16.mxu0 %v822
        %1606 = vmatmul.mubr.bf16.gmra.mrb[0].mxu0 %v768
        %v1607 = vpop.f32.mrb[0].mxu0
        %v1608 = vadd.f32 %v1367, %v1607
        %v1609 = vpop.f32.mrb[0].mxu0
        %v1610 = vpop.f32.mrb[0].mxu0
        %v1611 = vadd.f32 %v1370, %v1610
        %v1612 = vpop.f32.mrb[0].mxu0
        %1613 = vmatprep.mubr.bf16.mxu0 %v834
        %1614 = vmatmul.mubr.bf16.gmra.mrb[0].mxu0 %v769
        %v1615 = vpop.f32.mrb[0].mxu0
        %v1616 = vadd.f32 %v1375, %v1615
        %v1617 = vpop.f32.mrb[0].mxu0
        %v1618 = vpop.f32.mrb[0].mxu0
        %v1619 = vadd.f32 %v1378, %v1618
        %v1620 = vpop.f32.mrb[0].mxu0
        %1621 = vmatprep.mubr.bf16.mxu0 %v846
        %1622 = vmatmul.mubr.bf16.gmra.mrb[0].mxu0 %v770
        %v1623 = vpop.f32.mrb[0].mxu0
        %v1624 = vadd.f32 %v1383, %v1623
        %v1625 = vpop.f32.mrb[0].mxu0
        %v1626 = vpop.f32.mrb[0].mxu0
        %v1627 = vadd.f32 %v1386, %v1626
        %v1628 = vpop.f32.mrb[0].mxu0
        %1629 = vmatprep.mubr.bf16.mxu0 %v858
        %1630 = vmatmul.mubr.bf16.gmra.mrb[0].mxu0 %v771
        %v1631 = vpop.f32.mrb[0].mxu0
        %v1632 = vadd.f32 %v1391, %v1631
        %v1633 = vpop.f32.mrb[0].mxu0
        %v1634 = vpop.f32.mrb[0].mxu0
        %v1635 = vadd.f32 %v1394, %v1634
        %v1636 = vpop.f32.mrb[0].mxu0
        %1637 = vmatprep.mubr.bf16.mxu0 %v870
        %1638 = vmatmul.mubr.bf16.gmra.mrb[0].mxu0 %v772
        %v1639 = vpop.f32.mrb[0].mxu0
        %v1640 = vadd.f32 %v1399, %v1639
        %v1641 = vpop.f32.mrb[0].mxu0
        %v1642 = vpop.f32.mrb[0].mxu0
        %v1643 = vadd.f32 %v1402, %v1642
        %v1644 = vpop.f32.mrb[0].mxu0
        %1645 = vmatprep.mubr.bf16.mxu0 %v882
        %1646 = vmatmul.mubr.bf16.gmra.mrb[0].mxu0 %v773
        %v1647 = vpop.f32.mrb[0].mxu0
        %v1648 = vadd.f32 %v1407, %v1647
        %v1649 = vpop.f32.mrb[0].mxu0
        %v1650 = vpop.f32.mrb[0].mxu0
        %v1651 = vadd.f32 %v1410, %v1650
        %v1652 = vpop.f32.mrb[0].mxu0
        %1653 = vdwg.mxu0
        %1654 = vmatprep.subr.bf16.mxu0 0
        %1655 = vmatpush1.bf16.msra.mxu0 %v1525
        %1656 = vmatprep.subr.bf16.mxu0 0
        %1657 = vmatpush1.bf16.msra.mxu0 %v1526
        %1658 = vmatprep.subr.bf16.mxu0 0
        %1659 = vmatpush1.bf16.msra.mxu0 %v1527
        %1660 = vmatprep.subr.bf16.mxu0 0
        %1661 = vmatpush1.bf16.msra.mxu0 %v1528
        %1662 = vmatprep.subr.bf16.mxu0 0
        %1663 = vmatpush1.bf16.msra.mxu0 %v1529
        %1664 = vmatprep.subr.bf16.mxu0 0
        %1665 = vmatpush1.bf16.msra.mxu0 %v1530
        %1666 = vmatprep.subr.bf16.mxu0 0
        %1667 = vmatpush1.bf16.msra.mxu0 %v1531
        %1668 = vmatprep.subr.bf16.mxu0 0
        %1669 = vmatpush1.bf16.msra.mxu0 %v1532
        %1670 = vmatprep.subr.bf16.mxu0 0
        %1671 = vmatpush1.bf16.msra.mxu0 0
        %1672 = vmatprep.subr.bf16.mxu0 0
        %1673 = vmatpush1.bf16.msra.mxu0 0
        %1674 = vmatprep.subr.bf16.mxu0 0
        %1675 = vmatpush1.bf16.msra.mxu0 0
        %1676 = vmatprep.subr.bf16.mxu0 0
        %1677 = vmatpush1.bf16.msra.mxu0 0
        %1678 = vmatprep.subr.bf16.mxu0 0
        %1679 = vmatpush1.bf16.msra.mxu0 0
        %1680 = vmatprep.subr.bf16.mxu0 0
        %1681 = vmatpush1.bf16.msra.mxu0 0
        %1682 = vmatprep.subr.bf16.mxu0 0
        %1683 = vmatpush1.bf16.msra.mxu0 0
        %1684 = vmatprep.subr.bf16.mxu0 0
        %1685 = vmatpush1.bf16.msra.mxu0 0
        %1686 = vmatprep.mubr.bf16.mxu0 0
        %1687 = vmatmul.mubr.bf16.gmra.mrb[0].mxu0 %v940
        %v1688 = vpop.f32.mrb[0].mxu0
        %v1689 = vadd.f32 %v1592, %v1688
        %v1690 = vpop.f32.mrb[0].mxu0
        %v1691 = vpop.f32.mrb[0].mxu0
        %v1692 = vadd.f32 %v1595, %v1691
        %v1693 = vpop.f32.mrb[0].mxu0
        %1694 = vmatprep.mubr.bf16.mxu0 0
        %1695 = vmatmul.mubr.bf16.gmra.mrb[0].mxu0 %v943
        %v1696 = vpop.f32.mrb[0].mxu0
        %v1697 = vadd.f32 %v1600, %v1696
        %v1698 = vpop.f32.mrb[0].mxu0
        %v1699 = vpop.f32.mrb[0].mxu0
        %v1700 = vadd.f32 %v1603, %v1699
        %v1701 = vpop.f32.mrb[0].mxu0
        %1702 = vmatprep.mubr.bf16.mxu0 0
        %1703 = vmatmul.mubr.bf16.gmra.mrb[0].mxu0 %v946
        %v1704 = vpop.f32.mrb[0].mxu0
        %v1705 = vadd.f32 %v1608, %v1704
        %v1706 = vpop.f32.mrb[0].mxu0
        %v1707 = vpop.f32.mrb[0].mxu0
        %v1708 = vadd.f32 %v1611, %v1707
        %v1709 = vpop.f32.mrb[0].mxu0
        %1710 = vmatprep.mubr.bf16.mxu0 0
        %1711 = vmatmul.mubr.bf16.gmra.mrb[0].mxu0 %v949
        %v1712 = vpop.f32.mrb[0].mxu0
        %v1713 = vadd.f32 %v1616, %v1712
        %v1714 = vpop.f32.mrb[0].mxu0
        %v1715 = vpop.f32.mrb[0].mxu0
        %v1716 = vadd.f32 %v1619, %v1715
        %v1717 = vpop.f32.mrb[0].mxu0
        %1718 = vmatprep.mubr.bf16.mxu0 0
        %1719 = vmatmul.mubr.bf16.gmra.mrb[0].mxu0 %v952
        %v1720 = vpop.f32.mrb[0].mxu0
        %v1721 = vadd.f32 %v1624, %v1720
        %v1722 = vpop.f32.mrb[0].mxu0
        %v1723 = vpop.f32.mrb[0].mxu0
        %v1724 = vadd.f32 %v1627, %v1723
        %v1725 = vpop.f32.mrb[0].mxu0
        %1726 = vmatprep.mubr.bf16.mxu0 0
        %1727 = vmatmul.mubr.bf16.gmra.mrb[0].mxu0 %v955
        %v1728 = vpop.f32.mrb[0].mxu0
        %v1729 = vadd.f32 %v1632, %v1728
        %v1730 = vpop.f32.mrb[0].mxu0
        %v1731 = vpop.f32.mrb[0].mxu0
        %v1732 = vadd.f32 %v1635, %v1731
        %v1733 = vpop.f32.mrb[0].mxu0
        %1734 = vmatprep.mubr.bf16.mxu0 0
        %1735 = vmatmul.mubr.bf16.gmra.mrb[0].mxu0 %v958
        %v1736 = vpop.f32.mrb[0].mxu0
        %v1737 = vadd.f32 %v1640, %v1736
        %v1738 = vpop.f32.mrb[0].mxu0
        %v1739 = vpop.f32.mrb[0].mxu0
        %v1740 = vadd.f32 %v1643, %v1739
        %v1741 = vpop.f32.mrb[0].mxu0
        %1742 = vmatprep.mubr.bf16.mxu0 0
        %1743 = vmatmul.mubr.bf16.gmra.mrb[0].mxu0 %v961
        %v1744 = vpop.f32.mrb[0].mxu0
        %v1745 = vadd.f32 %v1648, %v1744
        %v1746 = vpop.f32.mrb[0].mxu0
        %v1747 = vpop.f32.mrb[0].mxu0
        %v1748 = vadd.f32 %v1651, %v1747
        %v1749 = vpop.f32.mrb[0].mxu0
        %1750 = vdwg.mxu0
        %s1751 = scalar_lea.vmem [#allocation11], 384
        %v1752 = vld [vmem:[%s1751] sm:$0xf]
        %v1753 = vld [vmem:[%s1751 + $0x4] sm:$0xf]
        %v1754 = vld [vmem:[%s1751 + $0x8] sm:$0xf]
        %v1755 = vld [vmem:[%s1751 + $0xc] sm:$0xf]
        %v1756 = vld [vmem:[%s1751 + $0x10] sm:$0xf]
        %v1757 = vld [vmem:[%s1751 + $0x14] sm:$0xf]
        %v1758 = vld [vmem:[%s1751 + $0x18] sm:$0xf]
        %v1759 = vld [vmem:[%s1751 + $0x1c] sm:$0xf]
        %v1760 = vld [vmem:[%s1751 + $0x20] sm:$0xf]
        %v1761 = vld [vmem:[%s1751 + $0x24] sm:$0xf]
        %v1762 = vld [vmem:[%s1751 + $0x28] sm:$0xf]
        %v1763 = vld [vmem:[%s1751 + $0x2c] sm:$0xf]
        %v1764 = vld [vmem:[%s1751 + $0x30] sm:$0xf]
        %v1765 = vld [vmem:[%s1751 + $0x34] sm:$0xf]
        %v1766 = vld [vmem:[%s1751 + $0x38] sm:$0xf]
        %v1767 = vld [vmem:[%s1751 + $0x3c] sm:$0xf]
        %v1768 = vld [vmem:[%s1751 + $0x40] sm:$0xf]
        %v1769 = vld [vmem:[%s1751 + $0x44] sm:$0xf]
        %v1770 = vld [vmem:[%s1751 + $0x48] sm:$0xf]
        %v1771 = vld [vmem:[%s1751 + $0x4c] sm:$0xf]
        %v1772 = vld [vmem:[%s1751 + $0x50] sm:$0xf]
        %v1773 = vld [vmem:[%s1751 + $0x54] sm:$0xf]
        %v1774 = vld [vmem:[%s1751 + $0x58] sm:$0xf]
        %v1775 = vld [vmem:[%s1751 + $0x5c] sm:$0xf]
        %v1776 = vld [vmem:[%s1751 + $0x60] sm:$0xf]
        %v1777 = vld [vmem:[%s1751 + $0x64] sm:$0xf]
        %v1778 = vld [vmem:[%s1751 + $0x68] sm:$0xf]
        %v1779 = vld [vmem:[%s1751 + $0x6c] sm:$0xf]
        %v1780 = vld [vmem:[%s1751 + $0x70] sm:$0xf]
        %v1781 = vld [vmem:[%s1751 + $0x74] sm:$0xf]
        %v1782 = vld [vmem:[%s1751 + $0x78] sm:$0xf]
        %v1783 = vld [vmem:[%s1751 + $0x7c] sm:$0xf]
        %v1784 = vld [vmem:[%s1751 + $0x80] sm:$0xf]
        %v1785 = vld [vmem:[%s1751 + $0x84] sm:$0xf]
        %v1786 = vld [vmem:[%s1751 + $0x88] sm:$0xf]
        %v1787 = vld [vmem:[%s1751 + $0x8c] sm:$0xf]
        %v1788 = vld [vmem:[%s1751 + $0x90] sm:$0xf]
        %v1789 = vld [vmem:[%s1751 + $0x94] sm:$0xf]
        %v1790 = vld [vmem:[%s1751 + $0x98] sm:$0xf]
        %v1791 = vld [vmem:[%s1751 + $0x9c] sm:$0xf]
        %v1792 = vld [vmem:[%s1751 + $0xa0] sm:$0xf]
        %v1793 = vld [vmem:[%s1751 + $0xa4] sm:$0xf]
        %v1794 = vld [vmem:[%s1751 + $0xa8] sm:$0xf]
        %v1795 = vld [vmem:[%s1751 + $0xac] sm:$0xf]
        %v1796 = vld [vmem:[%s1751 + $0xb0] sm:$0xf]
        %v1797 = vld [vmem:[%s1751 + $0xb4] sm:$0xf]
        %v1798 = vld [vmem:[%s1751 + $0xb8] sm:$0xf]
        %v1799 = vld [vmem:[%s1751 + $0xbc] sm:$0xf]
        %v1848 = vunpack.c.l.b16 %v1752
        %v1849 = vunpack.c.l.b16 %v1753
        %v1850 = vunpack.c.l.b16 %v1754
        %v1851 = vunpack.c.l.b16 %v1755
        %v1852 = vunpack.c.l.b16 %v1756
        %v1853 = vunpack.c.l.b16 %v1757
        %v1854 = vunpack.c.l.b16 %v1758
        %v1855 = vunpack.c.l.b16 %v1759
        %v1856 = vunpack.c.l.b16 %v1760
        %v1857 = vunpack.c.l.b16 %v1761
        %v1858 = vunpack.c.l.b16 %v1762
        %v1859 = vunpack.c.l.b16 %v1763
        %v1860 = vunpack.c.l.b16 %v1764
        %v1861 = vunpack.c.l.b16 %v1765
        %v1862 = vunpack.c.l.b16 %v1766
        %v1863 = vunpack.c.l.b16 %v1767
        %v1864 = vunpack.c.l.b16 %v1768
        %v1865 = vunpack.c.l.b16 %v1769
        %v1866 = vunpack.c.l.b16 %v1770
        %v1867 = vunpack.c.l.b16 %v1771
        %v1868 = vunpack.c.l.b16 %v1772
        %v1869 = vunpack.c.l.b16 %v1773
        %v1870 = vunpack.c.l.b16 %v1774
        %v1871 = vunpack.c.l.b16 %v1775
        %v1872 = vunpack.c.l.b16 %v1776
        %v1873 = vunpack.c.l.b16 %v1777
        %v1874 = vunpack.c.l.b16 %v1778
        %v1875 = vunpack.c.l.b16 %v1779
        %v1876 = vunpack.c.l.b16 %v1780
        %v1877 = vunpack.c.l.b16 %v1781
        %v1878 = vunpack.c.l.b16 %v1782
        %v1879 = vunpack.c.l.b16 %v1783
        %v1880 = vunpack.c.l.b16 %v1784
        %v1881 = vunpack.c.l.b16 %v1785
        %v1882 = vunpack.c.l.b16 %v1786
        %v1883 = vunpack.c.l.b16 %v1787
        %v1884 = vunpack.c.l.b16 %v1788
        %v1885 = vunpack.c.l.b16 %v1789
        %v1886 = vunpack.c.l.b16 %v1790
        %v1887 = vunpack.c.l.b16 %v1791
        %v1888 = vunpack.c.l.b16 %v1792
        %v1889 = vunpack.c.l.b16 %v1793
        %v1890 = vunpack.c.l.b16 %v1794
        %v1891 = vunpack.c.l.b16 %v1795
        %v1892 = vunpack.c.l.b16 %v1796
        %v1893 = vunpack.c.l.b16 %v1797
        %v1894 = vunpack.c.l.b16 %v1798
        %v1895 = vunpack.c.l.b16 %v1799
        %v1896 = vpack.c.b16 %v1849, %v1848
        %v1897 = vpack.c.b16 %v1851, %v1850
        %v1898 = vpack.c.b16 %v1853, %v1852
        %v1899 = vpack.c.b16 %v1855, %v1854
        %v1900 = vpack.c.b16 %v1857, %v1856
        %v1901 = vpack.c.b16 %v1859, %v1858
        %v1902 = vpack.c.b16 %v1861, %v1860
        %v1903 = vpack.c.b16 %v1863, %v1862
        %v1904 = vpack.c.b16 %v1865, %v1864
        %v1905 = vpack.c.b16 %v1867, %v1866
        %v1906 = vpack.c.b16 %v1869, %v1868
        %v1907 = vpack.c.b16 %v1871, %v1870
        %v1908 = vpack.c.b16 %v1873, %v1872
        %v1909 = vpack.c.b16 %v1875, %v1874
        %v1910 = vpack.c.b16 %v1877, %v1876
        %v1911 = vpack.c.b16 %v1879, %v1878
        %v1912 = vpack.c.b16 %v1881, %v1880
        %v1913 = vpack.c.b16 %v1883, %v1882
        %v1914 = vpack.c.b16 %v1885, %v1884
        %v1915 = vpack.c.b16 %v1887, %v1886
        %v1916 = vpack.c.b16 %v1889, %v1888
        %v1917 = vpack.c.b16 %v1891, %v1890
        %v1918 = vpack.c.b16 %v1893, %v1892
        %v1919 = vpack.c.b16 %v1895, %v1894
        %1944 = vmatprep.subr.bf16.mxu0 0
        %1945 = vmatpush1.bf16.msra.mxu0 %v1896
        %1946 = vmatprep.subr.bf16.mxu0 0
        %1947 = vmatpush1.bf16.msra.mxu0 %v1897
        %1948 = vmatprep.subr.bf16.mxu0 0
        %1949 = vmatpush1.bf16.msra.mxu0 %v1898
        %1950 = vmatprep.subr.bf16.mxu0 0
        %1951 = vmatpush1.bf16.msra.mxu0 %v1899
        %1952 = vmatprep.subr.bf16.mxu0 0
        %1953 = vmatpush1.bf16.msra.mxu0 %v1900
        %1954 = vmatprep.subr.bf16.mxu0 0
        %1955 = vmatpush1.bf16.msra.mxu0 %v1901
        %1956 = vmatprep.subr.bf16.mxu0 0
        %1957 = vmatpush1.bf16.msra.mxu0 %v1902
        %1958 = vmatprep.subr.bf16.mxu0 0
        %1959 = vmatpush1.bf16.msra.mxu0 %v1903
        %1960 = vmatprep.subr.bf16.mxu0 0
        %1961 = vmatpush1.bf16.msra.mxu0 %v1904
        %1962 = vmatprep.subr.bf16.mxu0 0
        %1963 = vmatpush1.bf16.msra.mxu0 %v1905
        %1964 = vmatprep.subr.bf16.mxu0 0
        %1965 = vmatpush1.bf16.msra.mxu0 %v1906
        %1966 = vmatprep.subr.bf16.mxu0 0
        %1967 = vmatpush1.bf16.msra.mxu0 %v1907
        %1968 = vmatprep.subr.bf16.mxu0 0
        %1969 = vmatpush1.bf16.msra.mxu0 %v1908
        %1970 = vmatprep.subr.bf16.mxu0 0
        %1971 = vmatpush1.bf16.msra.mxu0 %v1909
        %1972 = vmatprep.subr.bf16.mxu0 0
        %1973 = vmatpush1.bf16.msra.mxu0 %v1910
        %1974 = vmatprep.subr.bf16.mxu0 0
        %1975 = vmatpush1.bf16.msra.mxu0 %v1911
        %1976 = vmatprep.mubr.bf16.mxu0 %v822
        %1977 = vmatmul.mubr.bf16.gmra.mrb[0].mxu0 %v768
        %v1978 = vpop.f32.mrb[0].mxu0
        %v1979 = vadd.f32 0.0, %v1978
        %v1980 = vpop.f32.mrb[0].mxu0
        %v1981 = vpop.f32.mrb[0].mxu0
        %v1982 = vadd.f32 0.0, %v1981
        %v1983 = vpop.f32.mrb[0].mxu0
        %1984 = vmatprep.mubr.bf16.mxu0 %v834
        %1985 = vmatmul.mubr.bf16.gmra.mrb[0].mxu0 %v769
        %v1986 = vpop.f32.mrb[0].mxu0
        %v1987 = vadd.f32 0.0, %v1986
        %v1988 = vpop.f32.mrb[0].mxu0
        %v1989 = vpop.f32.mrb[0].mxu0
        %v1990 = vadd.f32 0.0, %v1989
        %v1991 = vpop.f32.mrb[0].mxu0
        %1992 = vmatprep.mubr.bf16.mxu0 %v846
        %1993 = vmatmul.mubr.bf16.gmra.mrb[0].mxu0 %v770
        %v1994 = vpop.f32.mrb[0].mxu0
        %v1995 = vadd.f32 0.0, %v1994
        %v1996 = vpop.f32.mrb[0].mxu0
        %v1997 = vpop.f32.mrb[0].mxu0
        %v1998 = vadd.f32 0.0, %v1997
        %v1999 = vpop.f32.mrb[0].mxu0
        %2000 = vmatprep.mubr.bf16.mxu0 %v858
        %2001 = vmatmul.mubr.bf16.gmra.mrb[0].mxu0 %v771
        %v2002 = vpop.f32.mrb[0].mxu0
        %v2003 = vadd.f32 0.0, %v2002
        %v2004 = vpop.f32.mrb[0].mxu0
        %v2005 = vpop.f32.mrb[0].mxu0
        %v2006 = vadd.f32 0.0, %v2005
        %v2007 = vpop.f32.mrb[0].mxu0
        %2008 = vmatprep.mubr.bf16.mxu0 %v870
        %2009 = vmatmul.mubr.bf16.gmra.mrb[0].mxu0 %v772
        %v2010 = vpop.f32.mrb[0].mxu0
        %v2011 = vadd.f32 0.0, %v2010
        %v2012 = vpop.f32.mrb[0].mxu0
        %v2013 = vpop.f32.mrb[0].mxu0
        %v2014 = vadd.f32 0.0, %v2013
        %v2015 = vpop.f32.mrb[0].mxu0
        %2016 = vmatprep.mubr.bf16.mxu0 %v882
        %2017 = vmatmul.mubr.bf16.gmra.mrb[0].mxu0 %v773
        %v2018 = vpop.f32.mrb[0].mxu0
        %v2019 = vadd.f32 0.0, %v2018
        %v2020 = vpop.f32.mrb[0].mxu0
        %v2021 = vpop.f32.mrb[0].mxu0
        %v2022 = vadd.f32 0.0, %v2021
        %v2023 = vpop.f32.mrb[0].mxu0
        %2024 = vmatprep.mubr.bf16.mxu0 %v894
        %2025 = vmatmul.mubr.bf16.gmra.mrb[0].mxu0 %v774
        %v2026 = vpop.f32.mrb[0].mxu0
        %v2027 = vadd.f32 0.0, %v2026
        %v2028 = vpop.f32.mrb[0].mxu0
        %v2029 = vpop.f32.mrb[0].mxu0
        %v2030 = vadd.f32 0.0, %v2029
        %v2031 = vpop.f32.mrb[0].mxu0
        %2032 = vmatprep.mubr.bf16.mxu0 %v906
        %2033 = vmatmul.mubr.bf16.gmra.mrb[0].mxu0 %v775
        %v2034 = vpop.f32.mrb[0].mxu0
        %v2035 = vadd.f32 0.0, %v2034
        %v2036 = vpop.f32.mrb[0].mxu0
        %v2037 = vpop.f32.mrb[0].mxu0
        %v2038 = vadd.f32 0.0, %v2037
        %v2039 = vpop.f32.mrb[0].mxu0
        %2040 = vdwg.mxu0
        %2041 = vmatprep.subr.bf16.mxu0 0
        %2042 = vmatpush1.bf16.msra.mxu0 %v1912
        %2043 = vmatprep.subr.bf16.mxu0 0
        %2044 = vmatpush1.bf16.msra.mxu0 %v1913
        %2045 = vmatprep.subr.bf16.mxu0 0
        %2046 = vmatpush1.bf16.msra.mxu0 %v1914
        %2047 = vmatprep.subr.bf16.mxu0 0
        %2048 = vmatpush1.bf16.msra.mxu0 %v1915
        %2049 = vmatprep.subr.bf16.mxu0 0
        %2050 = vmatpush1.bf16.msra.mxu0 %v1916
        %2051 = vmatprep.subr.bf16.mxu0 0
        %2052 = vmatpush1.bf16.msra.mxu0 %v1917
        %2053 = vmatprep.subr.bf16.mxu0 0
        %2054 = vmatpush1.bf16.msra.mxu0 %v1918
        %2055 = vmatprep.subr.bf16.mxu0 0
        %2056 = vmatpush1.bf16.msra.mxu0 %v1919
        %2057 = vmatprep.subr.bf16.mxu0 0
        %2058 = vmatpush1.bf16.msra.mxu0 0
        %2059 = vmatprep.subr.bf16.mxu0 0
        %2060 = vmatpush1.bf16.msra.mxu0 0
        %2061 = vmatprep.subr.bf16.mxu0 0
        %2062 = vmatpush1.bf16.msra.mxu0 0
        %2063 = vmatprep.subr.bf16.mxu0 0
        %2064 = vmatpush1.bf16.msra.mxu0 0
        %2065 = vmatprep.subr.bf16.mxu0 0
        %2066 = vmatpush1.bf16.msra.mxu0 0
        %2067 = vmatprep.subr.bf16.mxu0 0
        %2068 = vmatpush1.bf16.msra.mxu0 0
        %2069 = vmatprep.subr.bf16.mxu0 0
        %2070 = vmatpush1.bf16.msra.mxu0 0
        %2071 = vmatprep.subr.bf16.mxu0 0
        %2072 = vmatpush1.bf16.msra.mxu0 0
        %2073 = vmatprep.mubr.bf16.mxu0 0
        %2074 = vmatmul.mubr.bf16.gmra.mrb[0].mxu0 %v946
        %v2075 = vpop.f32.mrb[0].mxu0
        %v2076 = vadd.f32 %v1979, %v2075
        %v2077 = vpop.f32.mrb[0].mxu0
        %v2078 = vpop.f32.mrb[0].mxu0
        %v2079 = vadd.f32 %v1982, %v2078
        %v2080 = vpop.f32.mrb[0].mxu0
        %2081 = vmatprep.mubr.bf16.mxu0 0
        %2082 = vmatmul.mubr.bf16.gmra.mrb[0].mxu0 %v949
        %v2083 = vpop.f32.mrb[0].mxu0
        %v2084 = vadd.f32 %v1987, %v2083
        %v2085 = vpop.f32.mrb[0].mxu0
        %v2086 = vpop.f32.mrb[0].mxu0
        %v2087 = vadd.f32 %v1990, %v2086
        %v2088 = vpop.f32.mrb[0].mxu0
        %2089 = vmatprep.mubr.bf16.mxu0 0
        %2090 = vmatmul.mubr.bf16.gmra.mrb[0].mxu0 %v952
        %v2091 = vpop.f32.mrb[0].mxu0
        %v2092 = vadd.f32 %v1995, %v2091
        %v2093 = vpop.f32.mrb[0].mxu0
        %v2094 = vpop.f32.mrb[0].mxu0
        %v2095 = vadd.f32 %v1998, %v2094
        %v2096 = vpop.f32.mrb[0].mxu0
        %2097 = vmatprep.mubr.bf16.mxu0 0
        %2098 = vmatmul.mubr.bf16.gmra.mrb[0].mxu0 %v955
        %v2099 = vpop.f32.mrb[0].mxu0
        %v2100 = vadd.f32 %v2003, %v2099
        %v2101 = vpop.f32.mrb[0].mxu0
        %v2102 = vpop.f32.mrb[0].mxu0
        %v2103 = vadd.f32 %v2006, %v2102
        %v2104 = vpop.f32.mrb[0].mxu0
        %2105 = vmatprep.mubr.bf16.mxu0 0
        %2106 = vmatmul.mubr.bf16.gmra.mrb[0].mxu0 %v958
        %v2107 = vpop.f32.mrb[0].mxu0
        %v2108 = vadd.f32 %v2011, %v2107
        %v2109 = vpop.f32.mrb[0].mxu0
        %v2110 = vpop.f32.mrb[0].mxu0
        %v2111 = vadd.f32 %v2014, %v2110
        %v2112 = vpop.f32.mrb[0].mxu0
        %2113 = vmatprep.mubr.bf16.mxu0 0
        %2114 = vmatmul.mubr.bf16.gmra.mrb[0].mxu0 %v961
        %v2115 = vpop.f32.mrb[0].mxu0
        %v2116 = vadd.f32 %v2019, %v2115
        %v2117 = vpop.f32.mrb[0].mxu0
        %v2118 = vpop.f32.mrb[0].mxu0
        %v2119 = vadd.f32 %v2022, %v2118
        %v2120 = vpop.f32.mrb[0].mxu0
        %2121 = vmatprep.mubr.bf16.mxu0 0
        %2122 = vmatmul.mubr.bf16.gmra.mrb[0].mxu0 %v964
        %v2123 = vpop.f32.mrb[0].mxu0
        %v2124 = vadd.f32 %v2027, %v2123
        %v2125 = vpop.f32.mrb[0].mxu0
        %v2126 = vpop.f32.mrb[0].mxu0
        %v2127 = vadd.f32 %v2030, %v2126
        %v2128 = vpop.f32.mrb[0].mxu0
        %2129 = vmatprep.mubr.bf16.mxu0 0
        %2130 = vmatmul.mubr.bf16.gmra.mrb[0].mxu0 %v967
        %v2131 = vpop.f32.mrb[0].mxu0
        %v2132 = vadd.f32 %v2035, %v2131
        %v2133 = vpop.f32.mrb[0].mxu0
        %v2134 = vpop.f32.mrb[0].mxu0
        %v2135 = vadd.f32 %v2038, %v2134
        %v2136 = vpop.f32.mrb[0].mxu0
        %2137 = vdwg.mxu0
        %v2138 = vadd.f32 %v1689, %v2076
        %v2139 = vadd.f32 %v1692, %v2079
        %v2140 = vadd.f32 %v1697, %v2084
        %v2141 = vadd.f32 %v1700, %v2087
        %v2142 = vadd.f32 %v1705, %v2092
        %v2143 = vadd.f32 %v1708, %v2095
        %v2144 = vadd.f32 %v1713, %v2100
        %v2145 = vadd.f32 %v1716, %v2103
        %v2146 = vadd.f32 %v1721, %v2108
        %v2147 = vadd.f32 %v1724, %v2111
        %v2148 = vadd.f32 %v1729, %v2116
        %v2149 = vadd.f32 %v1732, %v2119
        %v2150 = vadd.f32 %v1737, %v2124
        %v2151 = vadd.f32 %v1740, %v2127
        %v2152 = vadd.f32 %v1745, %v2132
        %v2153 = vadd.f32 %v1748, %v2135
        %v2154 = vpack.c.bf16 %v2139, %v2138
        %v2155 = vpack.c.bf16 %v2141, %v2140
        %v2156 = vpack.c.bf16 %v2143, %v2142
        %v2157 = vpack.c.bf16 %v2145, %v2144
        %v2158 = vpack.c.bf16 %v2147, %v2146
        %v2159 = vpack.c.bf16 %v2149, %v2148
        %v2160 = vpack.c.bf16 %v2151, %v2150
        %v2161 = vpack.c.bf16 %v2153, %v2152
        %v2170 = vunpack.c.l.b16 %v2154
        %v2171 = vunpack.c.h.b16 %v2154
        %v2172 = vunpack.c.l.b16 %v2155
        %v2173 = vunpack.c.h.b16 %v2155
        %v2174 = vunpack.c.l.b16 %v2156
        %v2175 = vunpack.c.h.b16 %v2156
        %v2176 = vunpack.c.l.b16 %v2157
        %v2177 = vunpack.c.h.b16 %v2157
        %v2178 = vunpack.c.l.b16 %v2158
        %v2179 = vunpack.c.h.b16 %v2158
        %v2180 = vunpack.c.l.b16 %v2159
        %v2181 = vunpack.c.h.b16 %v2159
        %v2182 = vunpack.c.l.b16 %v2160
        %v2183 = vunpack.c.h.b16 %v2160
        %v2184 = vunpack.c.l.b16 %v2161
        %v2185 = vunpack.c.h.b16 %v2161
        %v2186 = vpack.c.b16 %v2170, %v2170
        %v2187 = vpack.c.b16 %v2171, %v2171
        %v2188 = vpack.c.b16 %v2172, %v2172
        %v2189 = vpack.c.b16 %v2173, %v2173
        %v2190 = vpack.c.b16 %v2174, %v2174
        %v2191 = vpack.c.b16 %v2175, %v2175
        %v2192 = vpack.c.b16 %v2176, %v2176
        %v2193 = vpack.c.b16 %v2177, %v2177
        %v2194 = vpack.c.b16 %v2178, %v2178
        %v2195 = vpack.c.b16 %v2179, %v2179
        %v2196 = vpack.c.b16 %v2180, %v2180
        %v2197 = vpack.c.b16 %v2181, %v2181
        %v2198 = vpack.c.b16 %v2182, %v2182
        %v2199 = vpack.c.b16 %v2183, %v2183
        %v2200 = vpack.c.b16 %v2184, %v2184
        %v2201 = vpack.c.b16 %v2185, %v2185
        %2218 = vst [vmem:[%s472] sm:$0xf] %v2186
        %2219 = vst [vmem:[%s472 + $0x4] sm:$0xf] %v2187
        %2220 = vst [vmem:[%s472 + $0x8] sm:$0xf] %v2188
        %2221 = vst [vmem:[%s472 + $0xc] sm:$0xf] %v2189
        %2222 = vst [vmem:[%s472 + $0x10] sm:$0xf] %v2190
        %2223 = vst [vmem:[%s472 + $0x14] sm:$0xf] %v2191
        %2224 = vst [vmem:[%s472 + $0x18] sm:$0xf] %v2192
        %2225 = vst [vmem:[%s472 + $0x1c] sm:$0xf] %v2193
        %2226 = vst [vmem:[%s472 + $0x20] sm:$0xf] %v2194
        %2227 = vst [vmem:[%s472 + $0x24] sm:$0xf] %v2195
        %2228 = vst [vmem:[%s472 + $0x28] sm:$0xf] %v2196
        %2229 = vst [vmem:[%s472 + $0x2c] sm:$0xf] %v2197
        %2230 = vst [vmem:[%s472 + $0x30] sm:$0xf] %v2198
        %2231 = vst [vmem:[%s472 + $0x34] sm:$0xf] %v2199
        %2232 = vst [vmem:[%s472 + $0x38] sm:$0xf] %v2200
        %2233 = vst [vmem:[%s472 + $0x3c] sm:$0xf] %v2201
        %v2234 = vadd.f32 %v2138, %v2139
        %v2235 = vadd.f32 %v2234, %v2140
        %v2236 = vadd.f32 %v2235, %v2141
        %v2237 = vadd.f32 %v2236, %v2142
        %v2238 = vadd.f32 %v2237, %v2143
        %v2239 = vadd.f32 %v2238, %v2144
        %v2240 = vadd.f32 %v2239, %v2145
        %v2241 = vadd.f32 %v2240, %v2146
        %v2242 = vadd.f32 %v2241, %v2147
        %v2243 = vadd.f32 %v2242, %v2148
        %v2244 = vadd.f32 %v2243, %v2149
        %v2245 = vadd.f32 %v2244, %v2150
        %v2246 = vadd.f32 %v2245, %v2151
        %v2247 = vadd.f32 %v2246, %v2152
        %v2248 = vadd.f32 %v2247, %v2153
        %v2249 = vrot.slane %v2248, 4
        %v2250 = vadd.f32 %v2248, %v2249
        %v2251 = vrot.slane %v2250, 2
        %v2252 = vadd.f32 %v2250, %v2251
        %v2253 = vrot.slane %v2252, 1
        %v2254 = vadd.f32 %v2252, %v2253
        %v2255 = vmul.f32 %v2254, 0.0078125
        %v2256 = vsub.f32 %v2138, %v2255
        %v2257 = vsub.f32 %v2139, %v2255
        %v2258 = vsub.f32 %v2140, %v2255
        %v2259 = vsub.f32 %v2141, %v2255
        %v2260 = vsub.f32 %v2142, %v2255
        %v2261 = vsub.f32 %v2143, %v2255
        %v2262 = vsub.f32 %v2144, %v2255
        %v2263 = vsub.f32 %v2145, %v2255
        %v2264 = vsub.f32 %v2146, %v2255
        %v2265 = vsub.f32 %v2147, %v2255
        %v2266 = vsub.f32 %v2148, %v2255
        %v2267 = vsub.f32 %v2149, %v2255
        %v2268 = vsub.f32 %v2150, %v2255
        %v2269 = vsub.f32 %v2151, %v2255
        %v2270 = vsub.f32 %v2152, %v2255
        %v2271 = vsub.f32 %v2153, %v2255
        %v2272 = vmul.f32 %v2256, %v2256
        %v2273 = vmul.f32 %v2257, %v2257
        %v2274 = vmul.f32 %v2258, %v2258
        %v2275 = vmul.f32 %v2259, %v2259
        %v2276 = vmul.f32 %v2260, %v2260
        %v2277 = vmul.f32 %v2261, %v2261
        %v2278 = vmul.f32 %v2262, %v2262
        %v2279 = vmul.f32 %v2263, %v2263
        %v2280 = vmul.f32 %v2264, %v2264
        %v2281 = vmul.f32 %v2265, %v2265
        %v2282 = vmul.f32 %v2266, %v2266
        %v2283 = vmul.f32 %v2267, %v2267
        %v2284 = vmul.f32 %v2268, %v2268
        %v2285 = vmul.f32 %v2269, %v2269
        %v2286 = vmul.f32 %v2270, %v2270
        %v2287 = vmul.f32 %v2271, %v2271
        %v2288 = vadd.f32 %v2272, %v2273
        %v2289 = vadd.f32 %v2288, %v2274
        %v2290 = vadd.f32 %v2289, %v2275
        %v2291 = vadd.f32 %v2290, %v2276
        %v2292 = vadd.f32 %v2291, %v2277
        %v2293 = vadd.f32 %v2292, %v2278
        %v2294 = vadd.f32 %v2293, %v2279
        %v2295 = vadd.f32 %v2294, %v2280
        %v2296 = vadd.f32 %v2295, %v2281
        %v2297 = vadd.f32 %v2296, %v2282
        %v2298 = vadd.f32 %v2297, %v2283
        %v2299 = vadd.f32 %v2298, %v2284
        %v2300 = vadd.f32 %v2299, %v2285
        %v2301 = vadd.f32 %v2300, %v2286
        %v2302 = vadd.f32 %v2301, %v2287
        %v2303 = vrot.slane %v2302, 4
        %v2304 = vadd.f32 %v2302, %v2303
        %v2305 = vrot.slane %v2304, 2
        %v2306 = vadd.f32 %v2304, %v2305
        %v2307 = vrot.slane %v2306, 1
        %v2308 = vadd.f32 %v2306, %v2307
        %vm2309 = vcmask 1040384
        %v2310 = vsel %vm2309, %v2254, %v2308
        %2311 = vst [vmem:[%s479] sm:$0x3] %v2310
        %s2312 = sand.u32 %s218, 1
        %s2313 = scalar_lea.sflag [#allocation4], %s2312
        %s2314 = sand.u32 %s218, 1
        %s2315 = smul.addr %s2314, 64
        %s2316 = scalar_lea.vmem [#allocation13], %s2315
        %s2317 = sand.u32 %s246, 1
        %s2318 = scalar_lea.sflag [#allocation15], %s2317
        %s2319 = sand.u32 %s246, 1
        %s2320 = smul.addr %s2319, 2
        %s2321 = scalar_lea.vmem [#allocation14], %s2320
        // Predicated region
        $region69: #{unet_skip_up_forward.4} parent=43 // pred_check
          %p2322 = pneg %p228
        $region70: #{unet_skip_up_forward.4} parent=43 // pred_check_branch
          %2324 = sbr.rel (%p2322) target = $region72
        $region71: #{unet_skip_up_forward.4} parent=43 // pred_region
          %s2325 = smul.u32 8, %s38
          %s2327 = ssub.s32 1024, 1024
          %2328 = vsyncadd %s2313, %s2327
          %s2329 = smul.addr %s2325, 2
          %s2330 = smul.addr %s37, 32
          %s2331 = sadd.s32 %s2329, %s2330
          %s2332 = smul.addr %s2331, 64
          %s2333 = scalar_lea.hbm %s6, %s2332
          %s2334 = sshll.u32 %s2316, 4
          %s2335 = int_to_ptr.vmem [resolvable:$true] %s2334
          %2340 = dma.vmem_to_hbm [thread:$0]  %s2335, 1024, %s2333, %s2313, 64, 64, 4
        $region72: #{unet_skip_up_forward.4} parent=43 // pred_fallthru
          _
        // Predicated region
        $region73: #{unet_skip_up_forward.4} parent=43 // pred_check
          %p2341 = pneg %p256
        $region74: #{unet_skip_up_forward.4} parent=43 // pred_check_branch
          %2343 = sbr.rel (%p2341) target = $region76
        $region75: #{unet_skip_up_forward.4} parent=43 // pred_region
          %s2345 = ssub.s32 32, 32
          %2346 = vsyncadd %s2318, %s2345
          %s2347 = smul.addr %s37, 2
          %s2348 = sadd.s32 %s38, %s2347
          %s2349 = smul.addr %s2348, 32
          %s2350 = scalar_lea.hbm %s7, %s2349
          %s2352 = sshll.u32 %s2321, 4
          %s2353 = int_to_ptr.vmem [resolvable:$true] %s2352
          %2355 = dma.vmem_to_hbm [thread:$0]  %s2353, 32, %s2350, %s2318
        $region76: #{unet_skip_up_forward.4} parent=43 // pred_fallthru
          _
      $region44: #{unet_skip_up_forward.4} parent=5 // pred_fallthru
        _
      %p2356 = scmp.le.s32.totalorder 2, %s28
      // Predicated region
      $region77: #{unet_skip_up_forward.4} parent=5 // pred_check
        %p2357 = pneg %p2356
      $region78: #{unet_skip_up_forward.4} parent=5 // pred_check_branch
        %2359 = sbr.rel (%p2357) target = $region80
      $region79: #{unet_skip_up_forward.4} parent=5 // pred_region
        %s2360 = ssub.s32 %s28, 2
        // Predicated region
        $region81: #{unet_skip_up_forward.4} parent=79 // pred_check
          %p2361 = pneg %p234
        $region82: #{unet_skip_up_forward.4} parent=79 // pred_check_branch
          %2363 = sbr.rel (%p2361) target = $region84
        $region83: #{unet_skip_up_forward.4} parent=79 // pred_region
          %s2364 = sand.u32 %s219, 1
          %s2365 = scalar_lea.sflag [#allocation4], %s2364
          %s2366 = sand.u32 %s219, 1
          %s2367 = smul.addr %s2366, 64
          %s2368 = scalar_lea.vmem [#allocation13], %s2367
          %2369 = dma.done %s2365, 1024
        $region84: #{unet_skip_up_forward.4} parent=79 // pred_fallthru
          _
        // Predicated region
        $region85: #{unet_skip_up_forward.4} parent=79 // pred_check
          %p2370 = pneg %p262
        $region86: #{unet_skip_up_forward.4} parent=79 // pred_check_branch
          %2372 = sbr.rel (%p2370) target = $region88
        $region87: #{unet_skip_up_forward.4} parent=79 // pred_region
          %s2373 = sand.u32 %s247, 1
          %s2374 = scalar_lea.sflag [#allocation15], %s2373
          %s2375 = sand.u32 %s247, 1
          %s2376 = smul.addr %s2375, 2
          %s2377 = scalar_lea.vmem [#allocation14], %s2376
          %2378 = dma.done %s2374, 32
        $region88: #{unet_skip_up_forward.4} parent=79 // pred_fallthru
          _
      $region80: #{unet_skip_up_forward.4} parent=5 // pred_fallthru
        _
    $region6: #{unet_skip_up_forward.4} parent=1 // loop_footer
      %s32 = sadd.s32 1, %s28
    $region7: #{unet_skip_up_forward.4} parent=1 // loop_footer_branch
      %27 = sbr.rel target = $region3
    $region8: #{unet_skip_up_forward.4} parent=1 // loop_exit
      _
    %2379 = vsyncpa [#allocation3], 1
    %s2380 = scalar_lea.sflag [#allocation3], 1
    %2381 = vsyncpa %s2380, 1
    %2382 = vsyncpa [#allocation6], 1
    %s2383 = scalar_lea.sflag [#allocation6], 1
    %2384 = vsyncpa %s2383, 1
    %2385 = vsyncpa [#allocation9], 1
    %2386 = vsyncpa [#allocation12], 1
    %2387 = vsyncpa [#allocation4], 1
    %s2388 = scalar_lea.sflag [#allocation4], 1
    %2389 = vsyncpa %s2388, 1
    %2390 = vsyncpa [#allocation15], 1
    %s2391 = scalar_lea.sflag [#allocation15], 1
    %2392 = vsyncpa %s2391, 1

</llo_original>
